<compile_context>
chip_gen: v7x
topology: tpu7x:2x2x1
jax: 0.10.0
libtpu: 0.0.40
codegen_flags: <defaults>
</compile_context>

<pallas_src>
import functools
import math

import jax
import jax.numpy as jnp
from jax.experimental import pallas as pl
from jax.experimental.pallas import tpu as pltpu


# --------------------------------------------------------------------------- #
# Kernel
# --------------------------------------------------------------------------- #
def _make_encoder_kernel(n_layers: int, heads: int, d_qk: int, d_v: int,
                         block_b: int, seq: int, model_dim: int):
    """Build the fused encoder-stack kernel with static sizes closed over."""
    inv_sqrt_dk = 1.0 / math.sqrt(float(d_qk))
    n_q = heads * d_qk
    n_v = heads * d_v
    rows = block_b * seq

    def kernel(x_ref,
               wqkv_ref, bqkv_ref, wo_ref, bo_ref, g1_ref, be1_ref,
               w1_ref, b1_ref, w2_ref, b2_ref, g2_ref, be2_ref,
               o_ref, act_ref):
        layer = pl.program_id(1)

        # Load the input activation into the resident scratch on the first layer.
        @pl.when(layer == 0)
        def _():
            act_ref[...] = x_ref[...].reshape(rows, model_dim)

        x = act_ref[...]                                   # (Bb*S, D) f32 residual stream
        x_b = x.astype(jnp.bfloat16)

        # ---- fused QKV projection: single lane-wide MXU matmul ---------------
        qkv = jnp.dot(x_b, wqkv_ref[...],
                      preferred_element_type=jnp.float32) + bqkv_ref[...]   # (Bb*S, 2*n_q+n_v)
        q = qkv[:, :n_q] * inv_sqrt_dk                      # fold 1/sqrt(d_qk) into q once
        k = qkv[:, n_q:2 * n_q]
        v = qkv[:, 2 * n_q:]

        def to_heads(t, d):
            # (Bb*S, H*d) -> (Bb*H, S, d) bf16 for batched attention matmuls
            t = t.reshape(block_b, seq, heads, d)
            t = jnp.transpose(t, (0, 2, 1, 3))
            return t.reshape(block_b * heads, seq, d).astype(jnp.bfloat16)

        qh = to_heads(q, d_qk)
        kh = to_heads(k, d_qk)
        vh = to_heads(v, d_v)

        # ---- (Bb*H)-batched attention, f32 softmax ----------------------------
        s = jnp.einsum('bqd,bkd->bqk', qh, kh,
                       preferred_element_type=jnp.float32)  # (Bb*H, S, S)
        s = s - jnp.max(s, axis=-1, keepdims=True)
        e = jnp.exp(s)
        p = e * pl.reciprocal(jnp.sum(e, axis=-1, keepdims=True), approx=True)

        ctx = jnp.einsum('bqk,bkd->bqd', p.astype(jnp.bfloat16), vh,
                         preferred_element_type=jnp.float32)  # (Bb*H, S, d_v)
        ctx = ctx.reshape(block_b, heads, seq, d_v)
        ctx = jnp.transpose(ctx, (0, 2, 1, 3)).reshape(rows, n_v)

        # ---- fused output projection + head reduction (contraction = H*d_v) ---
        attn = jnp.dot(ctx.astype(jnp.bfloat16), wo_ref[...],
                       preferred_element_type=jnp.float32) + bo_ref[...]    # (Bb*S, D)

        # ---- residual + LayerNorm 1 (f32) -------------------------------------
        h1 = x + attn
        mu1 = jnp.mean(h1, axis=-1, keepdims=True)
        var1 = jnp.mean(jnp.square(h1 - mu1), axis=-1, keepdims=True)
        h1n = (h1 - mu1) * jax.lax.rsqrt(var1 + 1e-5) * g1_ref[...] + be1_ref[...]

        # ---- feed-forward (bf16 MXU / f32 acc) ---------------------------------
        f = jnp.dot(h1n.astype(jnp.bfloat16), w1_ref[...],
                    preferred_element_type=jnp.float32) + b1_ref[...]
        f = jnp.maximum(f, 0.0)
        f = jnp.dot(f.astype(jnp.bfloat16), w2_ref[...],
                    preferred_element_type=jnp.float32) + b2_ref[...]

        # ---- residual + LayerNorm 2 (f32) --------------------------------------
        h2 = h1n + f
        mu2 = jnp.mean(h2, axis=-1, keepdims=True)
        var2 = jnp.mean(jnp.square(h2 - mu2), axis=-1, keepdims=True)
        y = (h2 - mu2) * jax.lax.rsqrt(var2 + 1e-5) * g2_ref[...] + be2_ref[...]

        act_ref[...] = y                                    # carry to next layer

        @pl.when(layer == n_layers - 1)
        def _():
            o_ref[...] = y.reshape(block_b, seq, model_dim).astype(o_ref.dtype)

    return kernel


# --------------------------------------------------------------------------- #
# Wrapper
# --------------------------------------------------------------------------- #
_WEIGHT_NAMES = ("wqkv", "bqkv", "wo", "bo", "g1", "be1",
                 "w1", "b1", "w2", "b2", "g2", "be2")


def _vmem_limit_bytes() -> int:
    """Generation-aware VMEM budget (leave ~25% headroom)."""
    try:
        cap = int(pltpu.get_tpu_info().vmem_capacity_bytes)
    except Exception:
        cap = 64 * 1024 * 1024
    return max(32 * 1024 * 1024, (cap * 3) // 4)


def _pick_block_b(batch: int, cap: int = 8) -> int:
    """Largest divisor of `batch` not exceeding `cap` (batch blocking factor)."""
    bb = 1
    for c in range(1, min(batch, cap) + 1):
        if batch % c == 0:
            bb = c
    return bb


def encoder_forward(x, params, *, heads, d_qk, d_v, block_b=None,
                    out_dtype=jnp.float32):
    """Run the full encoder stack. x: (B, S, D) f32. params: prepared (stacked)."""
    B, S, D = x.shape
    L = params["wqkv"].shape[0]
    if block_b is None:
        block_b = _pick_block_b(B)
    assert B % block_b == 0, "batch must be divisible by the batch block"

    kernel = _make_encoder_kernel(L, heads, d_qk, d_v, block_b, S, D)
    weights = tuple(params[n] for n in _WEIGHT_NAMES)

    def stacked_spec(arr):
        # leading L axis selected by the layer grid index; rest is the full tensor
        nd = arr.ndim
        return pl.BlockSpec((None,) + arr.shape[1:],
                            lambda b, l, _n=nd: (l,) + (0,) * (_n - 1))

    return pl.pallas_call(
        kernel,
        out_shape=jax.ShapeDtypeStruct((B, S, D), out_dtype),
        grid_spec=pltpu.PrefetchScalarGridSpec(
            num_scalar_prefetch=0,
            grid=(B // block_b, L),              # batch blocks (parallel), layers (arbitrary)
            in_specs=[pl.BlockSpec((block_b, S, D), lambda b, l: (b, 0, 0))]
                     + [stacked_spec(w) for w in weights],
            out_specs=pl.BlockSpec((block_b, S, D), lambda b, l: (b, 0, 0)),
            scratch_shapes=[pltpu.VMEM((block_b * S, D), jnp.float32)],  # resident activation
        ),
        compiler_params=pltpu.CompilerParams(
            dimension_semantics=("parallel", "arbitrary"),
            vmem_limit_bytes=_vmem_limit_bytes(),
        ),
    )(x, *weights)


# --------------------------------------------------------------------------- #
# Parameter construction / preparation
# --------------------------------------------------------------------------- #
def init_layer_params(key, model_dim, hidden_dim, d_qk, d_v, heads):
    """Per-layer params in the 'natural' fused layout (all f32)."""
    ks = jax.random.split(key, 6)
    sd = 0.02

    def w(k, shape):
        return (sd * jax.random.normal(k, shape)).astype(jnp.float32)

    return {
        "wq": w(ks[0], (model_dim, heads * d_qk)),
        "bq": jnp.zeros((1, heads * d_qk), jnp.float32),
        "wk": w(ks[1], (model_dim, heads * d_qk)),
        "bk": jnp.zeros((1, heads * d_qk), jnp.float32),
        "wv": w(ks[2], (model_dim, heads * d_v)),
        "bv": jnp.zeros((1, heads * d_v), jnp.float32),
        "wo": w(ks[3], (heads * d_v, model_dim)),
        "bo": jnp.zeros((1, model_dim), jnp.float32),
        "g1": jnp.ones((1, model_dim), jnp.float32),
        "be1": jnp.zeros((1, model_dim), jnp.float32),
        "w1": w(ks[4], (model_dim, hidden_dim)),
        "b1": jnp.zeros((1, hidden_dim), jnp.float32),
        "w2": w(ks[5], (hidden_dim, model_dim)),
        "b2": jnp.zeros((1, model_dim), jnp.float32),
        "g2": jnp.ones((1, model_dim), jnp.float32),
        "be2": jnp.zeros((1, model_dim), jnp.float32),
    }


def prepare_params(layers, *, heads, d_qk, d_v):
    """Stack per-layer params on a leading L axis, concat q/k/v into one fused
    projection matrix, cast matmul weights to bf16 (layout plumbing host-side)."""
    del heads, d_qk, d_v  # layouts already head-contiguous (h*d + d column order)
    bf16 = jnp.bfloat16

    def stack(name):
        return jnp.stack([p[name] for p in layers], axis=0)

    wqkv = jnp.concatenate([stack("wq"), stack("wk"), stack("wv")], axis=-1)  # (L, D, 2*Nq+Nv)
    bqkv = jnp.concatenate([stack("bq"), stack("bk"), stack("bv")], axis=-1)  # (L, 1, 2*Nq+Nv)

    return {
        "wqkv": wqkv.astype(bf16), "bqkv": bqkv,
        "wo": stack("wo").astype(bf16), "bo": stack("bo"),      # (L, H*dv, D)
        "g1": stack("g1"), "be1": stack("be1"),
        "w1": stack("w1").astype(bf16), "b1": stack("b1"),
        "w2": stack("w2").astype(bf16), "b2": stack("b2"),
        "g2": stack("g2"), "be2": stack("be2"),
    }


# --------------------------------------------------------------------------- #
# Pure-JAX f32 reference (original per-head semantics) for validation
# --------------------------------------------------------------------------- #
def encoder_reference(x, layers, *, heads, d_qk, d_v):
    for p in layers:
        q = x @ p["wq"] + p["bq"]
        k = x @ p["wk"] + p["bk"]
        v = x @ p["wv"] + p["bv"]
        parts = []
        for h in range(heads):
            qh = q[..., h * d_qk:(h + 1) * d_qk]
            kh = k[..., h * d_qk:(h + 1) * d_qk]
            vh = v[..., h * d_v:(h + 1) * d_v]
            s = jnp.einsum('bqd,bkd->bqk', qh, kh) / math.sqrt(float(d_qk))
            a = jax.nn.softmax(s, axis=-1)
            parts.append(jnp.einsum('bqk,bkd->bqd', a, vh))
        ctx = jnp.concatenate(parts, axis=-1)
        attn = ctx @ p["wo"] + p["bo"]

        h1 = x + attn
        mu1 = h1.mean(-1, keepdims=True)
        var1 = ((h1 - mu1) ** 2).mean(-1, keepdims=True)
        h1 = (h1 - mu1) / jnp.sqrt(var1 + 1e-5) * p["g1"] + p["be1"]

        f = jnp.maximum(h1 @ p["w1"] + p["b1"], 0.0)
        f = f @ p["w2"] + p["b2"]

        h2 = h1 + f
        mu2 = h2.mean(-1, keepdims=True)
        var2 = ((h2 - mu2) ** 2).mean(-1, keepdims=True)
        x = (h2 - mu2) / jnp.sqrt(var2 + 1e-5) * p["g2"] + p["be2"]
    return x


# --------------------------------------------------------------------------- #
# Main
# --------------------------------------------------------------------------- #
if __name__ == "__main__":
    # small shapes consistent with Encoder(n, model_dim, hidden_dim, w_q_k, w_v, heads, ...)
    n_layers, model_dim, hidden_dim, w_q_k, w_v, heads = 2, 32, 64, 8, 8, 4
    batch, seq = 2, 8

    root = jax.random.PRNGKey(0)
    x_key, *layer_keys = jax.random.split(root, n_layers + 1)

    x = jax.random.normal(x_key, (batch, seq, model_dim), dtype=jnp.float32)
    layers = [init_layer_params(k, model_dim, hidden_dim, w_q_k, w_v, heads)
              for k in layer_keys]
    params = prepare_params(layers, heads=heads, d_qk=w_q_k, d_v=w_v)

    run = jax.jit(functools.partial(encoder_forward,
                                    heads=heads, d_qk=w_q_k, d_v=w_v))
    out = run(x, params)
    jax.block_until_ready(out)

    assert out.shape == (batch, seq, model_dim)
    assert bool(jnp.all(jnp.isfinite(out)))

    # validate bf16-MXU kernel against the f32 reference (relaxed tolerance)
    ref = encoder_reference(x, layers, heads=heads, d_qk=w_q_k, d_v=w_v)
    max_err = float(jnp.max(jnp.abs(out - ref)))
    assert max_err < 5e-2, f"max abs error {max_err} too large"

    print("KERNEL_OK")
</pallas_src>

<mosaic_0001>
module attributes {stable_mosaic.version = 11 : i64} {
  func.func @kernel(%arg0: i32, %arg1: i32, %arg2: memref<2x8x32xf32, #tpu.memory_space<vmem>>, %arg3: memref<1x32x96xbf16, #tpu.memory_space<vmem>>, %arg4: memref<1x1x96xf32, #tpu.memory_space<vmem>>, %arg5: memref<1x32x32xbf16, #tpu.memory_space<vmem>>, %arg6: memref<1x1x32xf32, #tpu.memory_space<vmem>>, %arg7: memref<1x1x32xf32, #tpu.memory_space<vmem>>, %arg8: memref<1x1x32xf32, #tpu.memory_space<vmem>>, %arg9: memref<1x32x64xbf16, #tpu.memory_space<vmem>>, %arg10: memref<1x1x64xf32, #tpu.memory_space<vmem>>, %arg11: memref<1x64x32xbf16, #tpu.memory_space<vmem>>, %arg12: memref<1x1x32xf32, #tpu.memory_space<vmem>>, %arg13: memref<1x1x32xf32, #tpu.memory_space<vmem>>, %arg14: memref<1x1x32xf32, #tpu.memory_space<vmem>>, %arg15: memref<2x8x32xf32, #tpu.memory_space<vmem>>, %arg16: memref<16x32xf32, #tpu.memory_space<vmem>>) attributes {dimension_semantics = [#tpu.dimension_semantics<parallel>, #tpu.dimension_semantics<arbitrary>], iteration_bounds = array<i64: 1, 2>, scalar_prefetch = 0 : i64, scratch_operands = 1 : i64, tpu.core_type = #tpu.core_type<tc>, window_params = [{transform_indices = @transform_0, window_bounds = array<i64: 2, 8, 32>}, {transform_indices = @transform_1, window_bounds = array<i64: 1, 32, 96>}, {transform_indices = @transform_2, window_bounds = array<i64: 1, 1, 96>}, {transform_indices = @transform_3, window_bounds = array<i64: 1, 32, 32>}, {transform_indices = @transform_4, window_bounds = array<i64: 1, 1, 32>}, {transform_indices = @transform_5, window_bounds = array<i64: 1, 1, 32>}, {transform_indices = @transform_6, window_bounds = array<i64: 1, 1, 32>}, {transform_indices = @transform_7, window_bounds = array<i64: 1, 32, 64>}, {transform_indices = @transform_8, window_bounds = array<i64: 1, 1, 64>}, {transform_indices = @transform_9, window_bounds = array<i64: 1, 64, 32>}, {transform_indices = @transform_10, window_bounds = array<i64: 1, 1, 32>}, {transform_indices = @transform_11, window_bounds = array<i64: 1, 1, 32>}, {transform_indices = @transform_12, window_bounds = array<i64: 1, 1, 32>}, {transform_indices = @transform_13, window_bounds = array<i64: 2, 8, 32>}]} {
    %c0_i32 = arith.constant 0 : i32
    %0 = arith.cmpi eq, %arg1, %c0_i32 : i32
    %1 = arith.extui %0 : i1 to i32
    %c0_i32_0 = arith.constant 0 : i32
    %2 = arith.cmpi ne, %1, %c0_i32_0 : i32
    scf.if %2 {
      %c0_60 = arith.constant 0 : index
      %c0_61 = arith.constant 0 : index
      %c0_62 = arith.constant 0 : index
      %129 = vector.load %arg2[%c0_60, %c0_61, %c0_62] : memref<2x8x32xf32, #tpu.memory_space<vmem>>, vector<2x8x32xf32>
      %130 = vector.shape_cast %129 : vector<2x8x32xf32> to vector<16x32xf32>
      %c0_63 = arith.constant 0 : index
      %c0_64 = arith.constant 0 : index
      %131 = vector.load %arg16[%c0_63, %c0_64] : memref<16x32xf32, #tpu.memory_space<vmem>>, vector<16x32xf32>
      tpu.vector_store %arg16[%c0_63, %c0_64], %130 {strides = array<i32>} : memref<16x32xf32, #tpu.memory_space<vmem>>, vector<16x32xf32>,
    } else {
    }
    %c0 = arith.constant 0 : index
    %c0_1 = arith.constant 0 : index
    %3 = vector.load %arg16[%c0, %c0_1] : memref<16x32xf32, #tpu.memory_space<vmem>>, vector<16x32xf32>
    %4 = arith.truncf %3 : vector<16x32xf32> to vector<16x32xbf16>
    %c0_2 = arith.constant 0 : index
    %c0_3 = arith.constant 0 : index
    %c0_4 = arith.constant 0 : index
    %5 = vector.load %arg3[%c0_2, %c0_3, %c0_4] : memref<1x32x96xbf16, #tpu.memory_space<vmem>>, vector<1x32x96xbf16>
    %6 = vector.shape_cast %5 : vector<1x32x96xbf16> to vector<32x96xbf16>
    %cst = arith.constant dense<0.000000e+00> : vector<16x96xf32>
    %7 = tpu.matmul %4, %6, %cst {dimension_numbers = #tpu.dot_dimension_numbers<[1], [0], [0], [1], [0, 0, 1, 1], [], []>} : vector<16x32xbf16>, vector<32x96xbf16>, vector<16x96xf32> -> vector<16x96xf32>
    %c0_5 = arith.constant 0 : index
    %c0_6 = arith.constant 0 : index
    %c0_7 = arith.constant 0 : index
    %8 = vector.load %arg4[%c0_5, %c0_6, %c0_7] : memref<1x1x96xf32, #tpu.memory_space<vmem>>, vector<1x1x96xf32>
    %9 = vector.shape_cast %8 : vector<1x1x96xf32> to vector<1x96xf32>
    %10 = vector.broadcast %9 : vector<1x96xf32> to vector<16x96xf32>
    %11 = arith.addf %7, %10 : vector<16x96xf32>
    %12 = vector.extract_strided_slice %11 {offsets = [0, 0], sizes = [16, 32], strides = [1, 1]} : vector<16x96xf32> to vector<16x32xf32>
    %cst_8 = arith.constant 0.353553385 : f32
    %13 = vector.broadcast %cst_8 : f32 to vector<16x32xf32>
    %14 = arith.mulf %12, %13 : vector<16x32xf32>
    %15 = vector.extract_strided_slice %11 {offsets = [0, 32], sizes = [16, 32], strides = [1, 1]} : vector<16x96xf32> to vector<16x32xf32>
    %16 = vector.extract_strided_slice %11 {offsets = [0, 64], sizes = [16, 32], strides = [1, 1]} : vector<16x96xf32> to vector<16x32xf32>
    %17 = vector.shape_cast %14 : vector<16x32xf32> to vector<2x8x4x8xf32>
    %18 = tpu.transpose %17, [0, 2, 1, 3] : vector<2x8x4x8xf32> -> vector<2x4x8x8xf32>
    %19 = vector.shape_cast %18 : vector<2x4x8x8xf32> to vector<8x8x8xf32>
    %20 = arith.truncf %19 : vector<8x8x8xf32> to vector<8x8x8xbf16>
    %21 = vector.shape_cast %15 : vector<16x32xf32> to vector<2x8x4x8xf32>
    %22 = tpu.transpose %21, [0, 2, 1, 3] : vector<2x8x4x8xf32> -> vector<2x4x8x8xf32>
    %23 = vector.shape_cast %22 : vector<2x4x8x8xf32> to vector<8x8x8xf32>
    %24 = arith.truncf %23 : vector<8x8x8xf32> to vector<8x8x8xbf16>
    %25 = vector.shape_cast %16 : vector<16x32xf32> to vector<2x8x4x8xf32>
    %26 = tpu.transpose %25, [0, 2, 1, 3] : vector<2x8x4x8xf32> -> vector<2x4x8x8xf32>
    %27 = vector.shape_cast %26 : vector<2x4x8x8xf32> to vector<8x8x8xf32>
    %28 = arith.truncf %27 : vector<8x8x8xf32> to vector<8x8x8xbf16>
    "tpu.trace_start"() <{level = 10 : i32, message = "bqd,bkd->bqk"}> : () -> ()
    %cst_9 = arith.constant dense<0.000000e+00> : vector<8x8x8xf32>
    %29 = tpu.matmul %20, %24, %cst_9 {dimension_numbers = #tpu.dot_dimension_numbers<[2], [2], [1], [1], [0, 0, 0, 1, 1, 1], [0], [0]>} : vector<8x8x8xbf16>, vector<8x8x8xbf16>, vector<8x8x8xf32> -> vector<8x8x8xf32>
    "tpu.trace_stop"() : () -> ()
    %cst_10 = arith.constant dense<0xFF800000> : vector<8x8xf32>
    %30 = vector.multi_reduction <maximumf>, %29, %cst_10 [2] : vector<8x8x8xf32> to vector<8x8xf32>
    %31 = vector.shape_cast %30 : vector<8x8xf32> to vector<8x8x1xf32>
    %32 = vector.broadcast %31 : vector<8x8x1xf32> to vector<8x8x8xf32>
    %33 = arith.subf %29, %32 : vector<8x8x8xf32>
    %34 = math.exp %33 : vector<8x8x8xf32>
    %cst_11 = arith.constant dense<0.000000e+00> : vector<8x8xf32>
    %35 = vector.multi_reduction <add>, %34, %cst_11 [2] : vector<8x8x8xf32> to vector<8x8xf32>
    %36 = vector.shape_cast %35 : vector<8x8xf32> to vector<8x8x1xf32>
    %37 = tpu.reciprocal %36 {approx = true} : vector<8x8x1xf32> -> vector<8x8x1xf32>
    %38 = vector.broadcast %37 : vector<8x8x1xf32> to vector<8x8x8xf32>
    %39 = arith.mulf %34, %38 : vector<8x8x8xf32>
    %40 = arith.truncf %39 : vector<8x8x8xf32> to vector<8x8x8xbf16>
    "tpu.trace_start"() <{level = 10 : i32, message = "bqk,bkd->bqd"}> : () -> ()
    %cst_12 = arith.constant dense<0.000000e+00> : vector<8x8x8xf32>
    %41 = tpu.matmul %40, %28, %cst_12 {dimension_numbers = #tpu.dot_dimension_numbers<[2], [1], [1], [2], [0, 0, 0, 1, 1, 2], [0], [0]>} : vector<8x8x8xbf16>, vector<8x8x8xbf16>, vector<8x8x8xf32> -> vector<8x8x8xf32>
    "tpu.trace_stop"() : () -> ()
    %42 = vector.shape_cast %41 : vector<8x8x8xf32> to vector<2x4x8x8xf32>
    %43 = tpu.transpose %42, [0, 2, 1, 3] : vector<2x4x8x8xf32> -> vector<2x8x4x8xf32>
    %44 = vector.shape_cast %43 : vector<2x8x4x8xf32> to vector<16x32xf32>
    %45 = arith.truncf %44 : vector<16x32xf32> to vector<16x32xbf16>
    %c0_13 = arith.constant 0 : index
    %c0_14 = arith.constant 0 : index
    %c0_15 = arith.constant 0 : index
    %46 = vector.load %arg5[%c0_13, %c0_14, %c0_15] : memref<1x32x32xbf16, #tpu.memory_space<vmem>>, vector<1x32x32xbf16>
    %47 = vector.shape_cast %46 : vector<1x32x32xbf16> to vector<32x32xbf16>
    %cst_16 = arith.constant dense<0.000000e+00> : vector<16x32xf32>
    %48 = tpu.matmul %45, %47, %cst_16 {dimension_numbers = #tpu.dot_dimension_numbers<[1], [0], [0], [1], [0, 0, 1, 1], [], []>} : vector<16x32xbf16>, vector<32x32xbf16>, vector<16x32xf32> -> vector<16x32xf32>
    %c0_17 = arith.constant 0 : index
    %c0_18 = arith.constant 0 : index
    %c0_19 = arith.constant 0 : index
    %49 = vector.load %arg6[%c0_17, %c0_18, %c0_19] : memref<1x1x32xf32, #tpu.memory_space<vmem>>, vector<1x1x32xf32>
    %50 = vector.shape_cast %49 : vector<1x1x32xf32> to vector<1x32xf32>
    %51 = vector.broadcast %50 : vector<1x32xf32> to vector<16x32xf32>
    %52 = arith.addf %48, %51 : vector<16x32xf32>
    %53 = arith.addf %3, %52 : vector<16x32xf32>
    %cst_20 = arith.constant dense<0.000000e+00> : vector<16xf32>
    %54 = vector.multi_reduction <add>, %53, %cst_20 [1] : vector<16x32xf32> to vector<16xf32>
    %55 = vector.shape_cast %54 : vector<16xf32> to vector<16x1xf32>
    %cst_21 = arith.constant 3.200000e+01 : f32
    %56 = vector.broadcast %cst_21 : f32 to vector<16x1xf32>
    %57 = arith.divf %55, %56 : vector<16x1xf32>
    %58 = vector.broadcast %57 : vector<16x1xf32> to vector<16x32xf32>
    %59 = arith.subf %53, %58 : vector<16x32xf32>
    %60 = arith.mulf %59, %59 : vector<16x32xf32>
    %cst_22 = arith.constant dense<0.000000e+00> : vector<16xf32>
    %61 = vector.multi_reduction <add>, %60, %cst_22 [1] : vector<16x32xf32> to vector<16xf32>
    %62 = vector.shape_cast %61 : vector<16xf32> to vector<16x1xf32>
    %cst_23 = arith.constant 3.200000e+01 : f32
    %63 = vector.broadcast %cst_23 : f32 to vector<16x1xf32>
    %64 = arith.divf %62, %63 : vector<16x1xf32>
    %65 = vector.broadcast %57 : vector<16x1xf32> to vector<16x32xf32>
    %66 = arith.subf %53, %65 : vector<16x32xf32>
    %cst_24 = arith.constant 9.99999974E-6 : f32
    %67 = vector.broadcast %cst_24 : f32 to vector<16x1xf32>
    %68 = arith.addf %64, %67 : vector<16x1xf32>
    %69 = math.rsqrt %68 : vector<16x1xf32>
    %70 = vector.broadcast %69 : vector<16x1xf32> to vector<16x32xf32>
    %71 = arith.mulf %66, %70 : vector<16x32xf32>
    %c0_25 = arith.constant 0 : index
    %c0_26 = arith.constant 0 : index
    %c0_27 = arith.constant 0 : index
    %72 = vector.load %arg7[%c0_25, %c0_26, %c0_27] : memref<1x1x32xf32, #tpu.memory_space<vmem>>, vector<1x1x32xf32>
    %73 = vector.shape_cast %72 : vector<1x1x32xf32> to vector<1x32xf32>
    %74 = vector.broadcast %73 : vector<1x32xf32> to vector<16x32xf32>
    %75 = arith.mulf %71, %74 : vector<16x32xf32>
    %c0_28 = arith.constant 0 : index
    %c0_29 = arith.constant 0 : index
    %c0_30 = arith.constant 0 : index
    %76 = vector.load %arg8[%c0_28, %c0_29, %c0_30] : memref<1x1x32xf32, #tpu.memory_space<vmem>>, vector<1x1x32xf32>
    %77 = vector.shape_cast %76 : vector<1x1x32xf32> to vector<1x32xf32>
    %78 = vector.broadcast %77 : vector<1x32xf32> to vector<16x32xf32>
    %79 = arith.addf %75, %78 : vector<16x32xf32>
    %80 = arith.truncf %79 : vector<16x32xf32> to vector<16x32xbf16>
    %c0_31 = arith.constant 0 : index
    %c0_32 = arith.constant 0 : index
    %c0_33 = arith.constant 0 : index
    %81 = vector.load %arg9[%c0_31, %c0_32, %c0_33] : memref<1x32x64xbf16, #tpu.memory_space<vmem>>, vector<1x32x64xbf16>
    %82 = vector.shape_cast %81 : vector<1x32x64xbf16> to vector<32x64xbf16>
    %cst_34 = arith.constant dense<0.000000e+00> : vector<16x64xf32>
    %83 = tpu.matmul %80, %82, %cst_34 {dimension_numbers = #tpu.dot_dimension_numbers<[1], [0], [0], [1], [0, 0, 1, 1], [], []>} : vector<16x32xbf16>, vector<32x64xbf16>, vector<16x64xf32> -> vector<16x64xf32>
    %c0_35 = arith.constant 0 : index
    %c0_36 = arith.constant 0 : index
    %c0_37 = arith.constant 0 : index
    %84 = vector.load %arg10[%c0_35, %c0_36, %c0_37] : memref<1x1x64xf32, #tpu.memory_space<vmem>>, vector<1x1x64xf32>
    %85 = vector.shape_cast %84 : vector<1x1x64xf32> to vector<1x64xf32>
    %86 = vector.broadcast %85 : vector<1x64xf32> to vector<16x64xf32>
    %87 = arith.addf %83, %86 : vector<16x64xf32>
    %cst_38 = arith.constant 0.000000e+00 : f32
    %88 = vector.broadcast %cst_38 : f32 to vector<16x64xf32>
    %89 = arith.maximumf %87, %88 : vector<16x64xf32>
    %90 = arith.truncf %89 : vector<16x64xf32> to vector<16x64xbf16>
    %c0_39 = arith.constant 0 : index
    %c0_40 = arith.constant 0 : index
    %c0_41 = arith.constant 0 : index
    %91 = vector.load %arg11[%c0_39, %c0_40, %c0_41] : memref<1x64x32xbf16, #tpu.memory_space<vmem>>, vector<1x64x32xbf16>
    %92 = vector.shape_cast %91 : vector<1x64x32xbf16> to vector<64x32xbf16>
    %cst_42 = arith.constant dense<0.000000e+00> : vector<16x32xf32>
    %93 = tpu.matmul %90, %92, %cst_42 {dimension_numbers = #tpu.dot_dimension_numbers<[1], [0], [0], [1], [0, 0, 1, 1], [], []>} : vector<16x64xbf16>, vector<64x32xbf16>, vector<16x32xf32> -> vector<16x32xf32>
    %c0_43 = arith.constant 0 : index
    %c0_44 = arith.constant 0 : index
    %c0_45 = arith.constant 0 : index
    %94 = vector.load %arg12[%c0_43, %c0_44, %c0_45] : memref<1x1x32xf32, #tpu.memory_space<vmem>>, vector<1x1x32xf32>
    %95 = vector.shape_cast %94 : vector<1x1x32xf32> to vector<1x32xf32>
    %96 = vector.broadcast %95 : vector<1x32xf32> to vector<16x32xf32>
    %97 = arith.addf %93, %96 : vector<16x32xf32>
    %98 = arith.addf %79, %97 : vector<16x32xf32>
    %cst_46 = arith.constant dense<0.000000e+00> : vector<16xf32>
    %99 = vector.multi_reduction <add>, %98, %cst_46 [1] : vector<16x32xf32> to vector<16xf32>
    %100 = vector.shape_cast %99 : vector<16xf32> to vector<16x1xf32>
    %cst_47 = arith.constant 3.200000e+01 : f32
    %101 = vector.broadcast %cst_47 : f32 to vector<16x1xf32>
    %102 = arith.divf %100, %101 : vector<16x1xf32>
    %103 = vector.broadcast %102 : vector<16x1xf32> to vector<16x32xf32>
    %104 = arith.subf %98, %103 : vector<16x32xf32>
    %105 = arith.mulf %104, %104 : vector<16x32xf32>
    %cst_48 = arith.constant dense<0.000000e+00> : vector<16xf32>
    %106 = vector.multi_reduction <add>, %105, %cst_48 [1] : vector<16x32xf32> to vector<16xf32>
    %107 = vector.shape_cast %106 : vector<16xf32> to vector<16x1xf32>
    %cst_49 = arith.constant 3.200000e+01 : f32
    %108 = vector.broadcast %cst_49 : f32 to vector<16x1xf32>
    %109 = arith.divf %107, %108 : vector<16x1xf32>
    %110 = vector.broadcast %102 : vector<16x1xf32> to vector<16x32xf32>
    %111 = arith.subf %98, %110 : vector<16x32xf32>
    %cst_50 = arith.constant 9.99999974E-6 : f32
    %112 = vector.broadcast %cst_50 : f32 to vector<16x1xf32>
    %113 = arith.addf %109, %112 : vector<16x1xf32>
    %114 = math.rsqrt %113 : vector<16x1xf32>
    %115 = vector.broadcast %114 : vector<16x1xf32> to vector<16x32xf32>
    %116 = arith.mulf %111, %115 : vector<16x32xf32>
    %c0_51 = arith.constant 0 : index
    %c0_52 = arith.constant 0 : index
    %c0_53 = arith.constant 0 : index
    %117 = vector.load %arg13[%c0_51, %c0_52, %c0_53] : memref<1x1x32xf32, #tpu.memory_space<vmem>>, vector<1x1x32xf32>
    %118 = vector.shape_cast %117 : vector<1x1x32xf32> to vector<1x32xf32>
    %119 = vector.broadcast %118 : vector<1x32xf32> to vector<16x32xf32>
    %120 = arith.mulf %116, %119 : vector<16x32xf32>
    %c0_54 = arith.constant 0 : index
    %c0_55 = arith.constant 0 : index
    %c0_56 = arith.constant 0 : index
    %121 = vector.load %arg14[%c0_54, %c0_55, %c0_56] : memref<1x1x32xf32, #tpu.memory_space<vmem>>, vector<1x1x32xf32>
    %122 = vector.shape_cast %121 : vector<1x1x32xf32> to vector<1x32xf32>
    %123 = vector.broadcast %122 : vector<1x32xf32> to vector<16x32xf32>
    %124 = arith.addf %120, %123 : vector<16x32xf32>
    %c0_57 = arith.constant 0 : index
    %c0_58 = arith.constant 0 : index
    %125 = vector.load %arg16[%c0_57, %c0_58] : memref<16x32xf32, #tpu.memory_space<vmem>>, vector<16x32xf32>
    tpu.vector_store %arg16[%c0_57, %c0_58], %124 {strides = array<i32>} : memref<16x32xf32, #tpu.memory_space<vmem>>, vector<16x32xf32>,
    %c1_i32 = arith.constant 1 : i32
    %126 = arith.cmpi eq, %arg1, %c1_i32 : i32
    %127 = arith.extui %126 : i1 to i32
    %c0_i32_59 = arith.constant 0 : i32
    %128 = arith.cmpi ne, %127, %c0_i32_59 : i32
    scf.if %128 {
      %129 = vector.shape_cast %124 : vector<16x32xf32> to vector<2x8x32xf32>
      %c0_60 = arith.constant 0 : index
      %c0_61 = arith.constant 0 : index
      %c0_62 = arith.constant 0 : index
      %130 = vector.load %arg15[%c0_60, %c0_61, %c0_62] : memref<2x8x32xf32, #tpu.memory_space<vmem>>, vector<2x8x32xf32>
      tpu.vector_store %arg15[%c0_60, %c0_61, %c0_62], %129 {strides = array<i32>} : memref<2x8x32xf32, #tpu.memory_space<vmem>>, vector<2x8x32xf32>,
    } else {
    }
    return
  }
  func.func @transform_0(%arg0: i32, %arg1: i32) -> (i32, i32, i32) {
    %c0_i32 = arith.constant 0 : i32
    %c0_i32_0 = arith.constant 0 : i32
    %c0_i32_1 = arith.constant 0 : i32
    return %arg0, %c0_i32, %c0_i32_0 : i32, i32, i32
  }
  func.func @transform_1(%arg0: i32, %arg1: i32) -> (i32, i32, i32) {
    %c0_i32 = arith.constant 0 : i32
    %c0_i32_0 = arith.constant 0 : i32
    %c0_i32_1 = arith.constant 0 : i32
    return %arg1, %c0_i32, %c0_i32_0 : i32, i32, i32
  }
  func.func @transform_2(%arg0: i32, %arg1: i32) -> (i32, i32, i32) {
    %c0_i32 = arith.constant 0 : i32
    %c0_i32_0 = arith.constant 0 : i32
    %c0_i32_1 = arith.constant 0 : i32
    return %arg1, %c0_i32, %c0_i32_0 : i32, i32, i32
  }
  func.func @transform_3(%arg0: i32, %arg1: i32) -> (i32, i32, i32) {
    %c0_i32 = arith.constant 0 : i32
    %c0_i32_0 = arith.constant 0 : i32
    %c0_i32_1 = arith.constant 0 : i32
    return %arg1, %c0_i32, %c0_i32_0 : i32, i32, i32
  }
  func.func @transform_4(%arg0: i32, %arg1: i32) -> (i32, i32, i32) {
    %c0_i32 = arith.constant 0 : i32
    %c0_i32_0 = arith.constant 0 : i32
    %c0_i32_1 = arith.constant 0 : i32
    return %arg1, %c0_i32, %c0_i32_0 : i32, i32, i32
  }
  func.func @transform_5(%arg0: i32, %arg1: i32) -> (i32, i32, i32) {
    %c0_i32 = arith.constant 0 : i32
    %c0_i32_0 = arith.constant 0 : i32
    %c0_i32_1 = arith.constant 0 : i32
    return %arg1, %c0_i32, %c0_i32_0 : i32, i32, i32
  }
  func.func @transform_6(%arg0: i32, %arg1: i32) -> (i32, i32, i32) {
    %c0_i32 = arith.constant 0 : i32
    %c0_i32_0 = arith.constant 0 : i32
    %c0_i32_1 = arith.constant 0 : i32
    return %arg1, %c0_i32, %c0_i32_0 : i32, i32, i32
  }
  func.func @transform_7(%arg0: i32, %arg1: i32) -> (i32, i32, i32) {
    %c0_i32 = arith.constant 0 : i32
    %c0_i32_0 = arith.constant 0 : i32
    %c0_i32_1 = arith.constant 0 : i32
    return %arg1, %c0_i32, %c0_i32_0 : i32, i32, i32
  }
  func.func @transform_8(%arg0: i32, %arg1: i32) -> (i32, i32, i32) {
    %c0_i32 = arith.constant 0 : i32
    %c0_i32_0 = arith.constant 0 : i32
    %c0_i32_1 = arith.constant 0 : i32
    return %arg1, %c0_i32, %c0_i32_0 : i32, i32, i32
  }
  func.func @transform_9(%arg0: i32, %arg1: i32) -> (i32, i32, i32) {
    %c0_i32 = arith.constant 0 : i32
    %c0_i32_0 = arith.constant 0 : i32
    %c0_i32_1 = arith.constant 0 : i32
    return %arg1, %c0_i32, %c0_i32_0 : i32, i32, i32
  }
  func.func @transform_10(%arg0: i32, %arg1: i32) -> (i32, i32, i32) {
    %c0_i32 = arith.constant 0 : i32
    %c0_i32_0 = arith.constant 0 : i32
    %c0_i32_1 = arith.constant 0 : i32
    return %arg1, %c0_i32, %c0_i32_0 : i32, i32, i32
  }
  func.func @transform_11(%arg0: i32, %arg1: i32) -> (i32, i32, i32) {
    %c0_i32 = arith.constant 0 : i32
    %c0_i32_0 = arith.constant 0 : i32
    %c0_i32_1 = arith.constant 0 : i32
    return %arg1, %c0_i32, %c0_i32_0 : i32, i32, i32
  }
  func.func @transform_12(%arg0: i32, %arg1: i32) -> (i32, i32, i32) {
    %c0_i32 = arith.constant 0 : i32
    %c0_i32_0 = arith.constant 0 : i32
    %c0_i32_1 = arith.constant 0 : i32
    return %arg1, %c0_i32, %c0_i32_0 : i32, i32, i32
  }
  func.func @transform_13(%arg0: i32, %arg1: i32) -> (i32, i32, i32) {
    %c0_i32 = arith.constant 0 : i32
    %c0_i32_0 = arith.constant 0 : i32
    %c0_i32_1 = arith.constant 0 : i32
    return %arg0, %c0_i32, %c0_i32_0 : i32, i32, i32
  }
}

</mosaic_0001>

<llo_original>
// kernel: encoder_forward.1
$region0: #{encoder_forward.1}
  #allocation0 [shape = 'u32[]', space=smem, size = 0x4, offset = 0x4, fixed_abs, tag = 'smem constant byte address 0x4 - core index']
  #allocation1 [shape = 'u32[144,128]{1,0:T(1,128)}', space=vmem, size = 0x12000, scoped, tag = 'internal scratch']
  #allocation2 [shape = 'f32[16,32]{1,0:T(8,128)}', space=vmem, size = 0x2000, scoped, tag = 'scratch operand']
  %s0 = inlined_call_operand.hbm [shape: f32[2,8,32], index: 0, kind: input, shape index: {}]
  %s1 = inlined_call_operand.vmem [shape: bf16[2,32,96], index: 1, kind: input, shape index: {}]
  %s2 = inlined_call_operand.vmem [shape: f32[2,1,96], index: 2, kind: input, shape index: {}]
  %s3 = inlined_call_operand.vmem [shape: bf16[2,32,32], index: 3, kind: input, shape index: {}]
  %s4 = inlined_call_operand.vmem [shape: f32[2,1,32], index: 4, kind: input, shape index: {}]
  %s5 = inlined_call_operand.hbm [shape: f32[2,1,32], index: 5, kind: input, shape index: {}]
  %s6 = inlined_call_operand.hbm [shape: f32[2,1,32], index: 6, kind: input, shape index: {}]
  %s7 = inlined_call_operand.vmem [shape: bf16[2,32,64], index: 7, kind: input, shape index: {}]
  %s8 = inlined_call_operand.hbm [shape: f32[2,1,64], index: 8, kind: input, shape index: {}]
  %s9 = inlined_call_operand.vmem [shape: bf16[2,64,32], index: 9, kind: input, shape index: {}]
  %s10 = inlined_call_operand.hbm [shape: f32[2,1,32], index: 10, kind: input, shape index: {}]
  %s11 = inlined_call_operand.hbm [shape: f32[2,1,32], index: 11, kind: input, shape index: {}]
  %s12 = inlined_call_operand.hbm [shape: f32[2,1,32], index: 12, kind: input, shape index: {}]
  %s13 = inlined_call_operand.hbm [shape: f32[2,8,32], index: 13, kind: output, shape index: {}]
  %s14 = sld [smem:[#allocation0]]
  $region121: #{encoder_forward.1} parent=0
    _
  %s16 = ssub.s32 1, %s14
  %s17 = scalar_select 0, %s16, %s14
  $region1: #{encoder_forward.1} parent=0
    #allocation3 [shape = 'u8[8192]{0}', space=vmem, size = 0x2000, scoped, tag = 'input window, operand 0, single buffered']
    #allocation4 [shape = 's32[2]{0}', space=sflag, size = 0x8, scoped, tag = 'scoped memory for encoder_forward.1']
    #allocation5 [shape = 's32[2]{0}', space=sflag, size = 0x8, scoped, tag = 'scoped memory for encoder_forward.1']
    #allocation6 [shape = 'u8[1024]{0}', space=vmem, size = 0x400, scoped, tag = 'input window, operand 5']
    #allocation7 [shape = 's32[2]{0}', space=sflag, size = 0x8, scoped, tag = 'scoped memory for encoder_forward.1']
    #allocation8 [shape = 'u8[1024]{0}', space=vmem, size = 0x400, scoped, tag = 'input window, operand 6']
    #allocation9 [shape = 'u8[1024]{0}', space=vmem, size = 0x400, scoped, tag = 'input window, operand 8']
    #allocation10 [shape = 's32[2]{0}', space=sflag, size = 0x8, scoped, tag = 'scoped memory for encoder_forward.1']
    #allocation11 [shape = 'u8[1024]{0}', space=vmem, size = 0x400, scoped, tag = 'input window, operand 10']
    #allocation12 [shape = 'u8[1024]{0}', space=vmem, size = 0x400, scoped, tag = 'input window, operand 11']
    #allocation13 [shape = 's32[2]{0}', space=sflag, size = 0x8, scoped, tag = 'scoped memory for encoder_forward.1']
    #allocation14 [shape = 'u8[1024]{0}', space=vmem, size = 0x400, scoped, tag = 'input window, operand 12']
    #allocation15 [shape = 'u8[8192]{0}', space=vmem, size = 0x2000, scoped, tag = 'output window, operand 0, single buffered']
    %18 = vsyncpa [#allocation4], 0
    %19 = vsyncpa [#allocation7], 0
    %s20 = scalar_lea.sflag [#allocation7], 1
    %21 = vsyncpa %s20, 0
    %22 = vsyncpa [#allocation10], 0
    %s23 = scalar_lea.sflag [#allocation10], 1
    %24 = vsyncpa %s23, 0
    %25 = vsyncpa [#allocation13], 0
    %s26 = scalar_lea.sflag [#allocation13], 1
    %27 = vsyncpa %s26, 0
    %28 = vsyncpa [#allocation5], 0
    loop: start=0, step=1, limit=4
    $region2: #{encoder_forward.1} parent=1 // loop_pre_header
      _
    $region3: #{encoder_forward.1} parent=1 // loop_header
      %s30 = sphi 0, %s34
      %p31 = scmp.ge.s32.totalorder %s30, 4
      %s37 = sphi 0, %s49
      %s38 = sphi 0, %s45
      %s39 = sphi 0, %s37
      %s40 = sphi 0, %s38
      %s41 = sphi 0, %s39
      %s42 = sphi 0, %s40
      %s52 = sphi 0, %s54
      %s55 = sphi 0, %s52
      %s56 = sphi 0, %s55
      %s72 = sphi 0, %s56
      %s78 = sphi 0, %s80
      %s81 = sphi 0, %s78
      %s82 = sphi 0, %s81
      %s98 = sphi 0, %s82
      %s104 = sphi 0, %s106
      %s107 = sphi 0, %s104
      %s108 = sphi 0, %s107
      %s124 = sphi 0, %s108
      %s130 = sphi 0, %s132
      %s133 = sphi 0, %s130
      %s134 = sphi 0, %s133
      %s150 = sphi 0, %s134
      %s156 = sphi 0, %s158
      %s159 = sphi 0, %s156
      %s160 = sphi 0, %s159
      %s176 = sphi 0, %s160
      %s182 = sphi 0, %s184
      %s185 = sphi 0, %s182
      %s186 = sphi 0, %s185
      %s202 = sphi 0, %s186
      %s208 = sphi 0, %s210
      %s211 = sphi 0, %s208
      %s212 = sphi 0, %s211
      %s228 = sphi 0, %s212
      %s234 = sphi 0, %s236
      %s237 = sphi 0, %s234
      %s238 = sphi 0, %s237
      %s254 = sphi 0, %s238
      %s260 = sphi 0, %s262
      %s263 = sphi 0, %s260
      %s264 = sphi 0, %s263
      %s280 = sphi 0, %s264
      %s286 = sphi 0, %s288
      %s289 = sphi 0, %s286
      %s290 = sphi 0, %s289
      %s306 = sphi 0, %s290
      %s312 = sphi 0, %s314
      %s315 = sphi 0, %s312
      %s316 = sphi 0, %s315
      %s332 = sphi 0, %s316
      %s338 = sphi 0, %s340
      %s341 = sphi 0, %s338
      %s342 = sphi 0, %s341
      %s358 = sphi 0, %s342
      %s364 = sphi 0, %s366
      %s367 = sphi 0, %s364
      %s368 = sphi 0, %s367
      %s384 = sphi 0, %s368
      %s390 = sphi 0, %s392
      %s393 = sphi 0, %s390
      %s394 = sphi 0, %s393
      %s410 = sphi 0, %s394
    $region4: #{encoder_forward.1} parent=1 // loop_header_branch
      %33 = sbr.rel (%p31) target = $region8
    $region5: #{encoder_forward.1} parent=1 // loop_body
      %s35 = ssub.s32 %s30, 1
      %s36 = ssub.s32 %s30, 2
      %s43 = sadd.s32 1, %s38
      %p44 = scmp.ge.s32.totalorder %s43, 2
      %s45 = scalar_select %p44, 0, %s43
      %s46 = sadd.s32 1, %s37
      %s47 = scalar_select %p44, %s46, %s37
      %p48 = scmp.ge.s32.totalorder %s47, 1
      %s49 = scalar_select %p48, 0, %s47
      %s50 = ssub.s32 %s37, %s49
      %p51 = scmp.eq.s32.totalorder %s50, 0
      %s53 = sadd.s32 %s52, 1
      %s54 = scalar_select %p51, %s52, %s53
      %p57 = pneg %p51
      %p58 = scmp.eq.s32.totalorder %s30, 1
      %p59 = por %p57, %p58
      %p60 = scmp.ne.s32.totalorder %s52, %s55
      %p61 = scmp.eq.s32.totalorder %s30, 0
      %p62 = por %p60, %p61
      %p63 = scmp.ne.s32.totalorder %s52, %s55
      %p64 = scmp.eq.s32.totalorder %s35, 1
      %p65 = por %p63, %p64
      %p66 = scmp.ne.s32.totalorder %s55, %s56
      %p67 = scmp.eq.s32.totalorder %s35, 0
      %p68 = por %p66, %p67
      %p69 = scmp.ne.s32.totalorder %s55, %s56
      %p70 = scmp.eq.s32.totalorder %s36, 1
      %p71 = por %p69, %p70
      %p73 = scmp.ne.s32.totalorder %s56, %s72
      %p74 = scmp.eq.s32.totalorder %s36, 0
      %p75 = por %p73, %p74
      %s76 = ssub.s32 %s38, %s45
      %p77 = scmp.eq.s32.totalorder %s76, 0
      %s79 = sadd.s32 %s78, 1
      %s80 = scalar_select %p77, %s78, %s79
      %p83 = pneg %p77
      %p84 = scmp.eq.s32.totalorder %s30, 1
      %p85 = por %p83, %p84
      %p86 = scmp.ne.s32.totalorder %s78, %s81
      %p87 = scmp.eq.s32.totalorder %s30, 0
      %p88 = por %p86, %p87
      %p89 = scmp.ne.s32.totalorder %s78, %s81
      %p90 = scmp.eq.s32.totalorder %s35, 1
      %p91 = por %p89, %p90
      %p92 = scmp.ne.s32.totalorder %s81, %s82
      %p93 = scmp.eq.s32.totalorder %s35, 0
      %p94 = por %p92, %p93
      %p95 = scmp.ne.s32.totalorder %s81, %s82
      %p96 = scmp.eq.s32.totalorder %s36, 1
      %p97 = por %p95, %p96
      %p99 = scmp.ne.s32.totalorder %s82, %s98
      %p100 = scmp.eq.s32.totalorder %s36, 0
      %p101 = por %p99, %p100
      %s102 = ssub.s32 %s38, %s45
      %p103 = scmp.eq.s32.totalorder %s102, 0
      %s105 = sadd.s32 %s104, 1
      %s106 = scalar_select %p103, %s104, %s105
      %p109 = pneg %p103
      %p110 = scmp.eq.s32.totalorder %s30, 1
      %p111 = por %p109, %p110
      %p112 = scmp.ne.s32.totalorder %s104, %s107
      %p113 = scmp.eq.s32.totalorder %s30, 0
      %p114 = por %p112, %p113
      %p115 = scmp.ne.s32.totalorder %s104, %s107
      %p116 = scmp.eq.s32.totalorder %s35, 1
      %p117 = por %p115, %p116
      %p118 = scmp.ne.s32.totalorder %s107, %s108
      %p119 = scmp.eq.s32.totalorder %s35, 0
      %p120 = por %p118, %p119
      %p121 = scmp.ne.s32.totalorder %s107, %s108
      %p122 = scmp.eq.s32.totalorder %s36, 1
      %p123 = por %p121, %p122
      %p125 = scmp.ne.s32.totalorder %s108, %s124
      %p126 = scmp.eq.s32.totalorder %s36, 0
      %p127 = por %p125, %p126
      %s128 = ssub.s32 %s38, %s45
      %p129 = scmp.eq.s32.totalorder %s128, 0
      %s131 = sadd.s32 %s130, 1
      %s132 = scalar_select %p129, %s130, %s131
      %p135 = pneg %p129
      %p136 = scmp.eq.s32.totalorder %s30, 1
      %p137 = por %p135, %p136
      %p138 = scmp.ne.s32.totalorder %s130, %s133
      %p139 = scmp.eq.s32.totalorder %s30, 0
      %p140 = por %p138, %p139
      %p141 = scmp.ne.s32.totalorder %s130, %s133
      %p142 = scmp.eq.s32.totalorder %s35, 1
      %p143 = por %p141, %p142
      %p144 = scmp.ne.s32.totalorder %s133, %s134
      %p145 = scmp.eq.s32.totalorder %s35, 0
      %p146 = por %p144, %p145
      %p147 = scmp.ne.s32.totalorder %s133, %s134
      %p148 = scmp.eq.s32.totalorder %s36, 1
      %p149 = por %p147, %p148
      %p151 = scmp.ne.s32.totalorder %s134, %s150
      %p152 = scmp.eq.s32.totalorder %s36, 0
      %p153 = por %p151, %p152
      %s154 = ssub.s32 %s38, %s45
      %p155 = scmp.eq.s32.totalorder %s154, 0
      %s157 = sadd.s32 %s156, 1
      %s158 = scalar_select %p155, %s156, %s157
      %p161 = pneg %p155
      %p162 = scmp.eq.s32.totalorder %s30, 1
      %p163 = por %p161, %p162
      %p164 = scmp.ne.s32.totalorder %s156, %s159
      %p165 = scmp.eq.s32.totalorder %s30, 0
      %p166 = por %p164, %p165
      %p167 = scmp.ne.s32.totalorder %s156, %s159
      %p168 = scmp.eq.s32.totalorder %s35, 1
      %p169 = por %p167, %p168
      %p170 = scmp.ne.s32.totalorder %s159, %s160
      %p171 = scmp.eq.s32.totalorder %s35, 0
      %p172 = por %p170, %p171
      %p173 = scmp.ne.s32.totalorder %s159, %s160
      %p174 = scmp.eq.s32.totalorder %s36, 1
      %p175 = por %p173, %p174
      %p177 = scmp.ne.s32.totalorder %s160, %s176
      %p178 = scmp.eq.s32.totalorder %s36, 0
      %p179 = por %p177, %p178
      %s180 = ssub.s32 %s38, %s45
      %p181 = scmp.eq.s32.totalorder %s180, 0
      %s183 = sadd.s32 %s182, 1
      %s184 = scalar_select %p181, %s182, %s183
      %p187 = pneg %p181
      %p188 = scmp.eq.s32.totalorder %s30, 1
      %p189 = por %p187, %p188
      %p190 = scmp.ne.s32.totalorder %s182, %s185
      %p191 = scmp.eq.s32.totalorder %s30, 0
      %p192 = por %p190, %p191
      %p193 = scmp.ne.s32.totalorder %s182, %s185
      %p194 = scmp.eq.s32.totalorder %s35, 1
      %p195 = por %p193, %p194
      %p196 = scmp.ne.s32.totalorder %s185, %s186
      %p197 = scmp.eq.s32.totalorder %s35, 0
      %p198 = por %p196, %p197
      %p199 = scmp.ne.s32.totalorder %s185, %s186
      %p200 = scmp.eq.s32.totalorder %s36, 1
      %p201 = por %p199, %p200
      %p203 = scmp.ne.s32.totalorder %s186, %s202
      %p204 = scmp.eq.s32.totalorder %s36, 0
      %p205 = por %p203, %p204
      %s206 = ssub.s32 %s38, %s45
      %p207 = scmp.eq.s32.totalorder %s206, 0
      %s209 = sadd.s32 %s208, 1
      %s210 = scalar_select %p207, %s208, %s209
      %p213 = pneg %p207
      %p214 = scmp.eq.s32.totalorder %s30, 1
      %p215 = por %p213, %p214
      %p216 = scmp.ne.s32.totalorder %s208, %s211
      %p217 = scmp.eq.s32.totalorder %s30, 0
      %p218 = por %p216, %p217
      %p219 = scmp.ne.s32.totalorder %s208, %s211
      %p220 = scmp.eq.s32.totalorder %s35, 1
      %p221 = por %p219, %p220
      %p222 = scmp.ne.s32.totalorder %s211, %s212
      %p223 = scmp.eq.s32.totalorder %s35, 0
      %p224 = por %p222, %p223
      %p225 = scmp.ne.s32.totalorder %s211, %s212
      %p226 = scmp.eq.s32.totalorder %s36, 1
      %p227 = por %p225, %p226
      %p229 = scmp.ne.s32.totalorder %s212, %s228
      %p230 = scmp.eq.s32.totalorder %s36, 0
      %p231 = por %p229, %p230
      %s232 = ssub.s32 %s38, %s45
      %p233 = scmp.eq.s32.totalorder %s232, 0
      %s235 = sadd.s32 %s234, 1
      %s236 = scalar_select %p233, %s234, %s235
      %p239 = pneg %p233
      %p240 = scmp.eq.s32.totalorder %s30, 1
      %p241 = por %p239, %p240
      %p242 = scmp.ne.s32.totalorder %s234, %s237
      %p243 = scmp.eq.s32.totalorder %s30, 0
      %p244 = por %p242, %p243
      %p245 = scmp.ne.s32.totalorder %s234, %s237
      %p246 = scmp.eq.s32.totalorder %s35, 1
      %p247 = por %p245, %p246
      %p248 = scmp.ne.s32.totalorder %s237, %s238
      %p249 = scmp.eq.s32.totalorder %s35, 0
      %p250 = por %p248, %p249
      %p251 = scmp.ne.s32.totalorder %s237, %s238
      %p252 = scmp.eq.s32.totalorder %s36, 1
      %p253 = por %p251, %p252
      %p255 = scmp.ne.s32.totalorder %s238, %s254
      %p256 = scmp.eq.s32.totalorder %s36, 0
      %p257 = por %p255, %p256
      %s258 = ssub.s32 %s38, %s45
      %p259 = scmp.eq.s32.totalorder %s258, 0
      %s261 = sadd.s32 %s260, 1
      %s262 = scalar_select %p259, %s260, %s261
      %p265 = pneg %p259
      %p266 = scmp.eq.s32.totalorder %s30, 1
      %p267 = por %p265, %p266
      %p268 = scmp.ne.s32.totalorder %s260, %s263
      %p269 = scmp.eq.s32.totalorder %s30, 0
      %p270 = por %p268, %p269
      %p271 = scmp.ne.s32.totalorder %s260, %s263
      %p272 = scmp.eq.s32.totalorder %s35, 1
      %p273 = por %p271, %p272
      %p274 = scmp.ne.s32.totalorder %s263, %s264
      %p275 = scmp.eq.s32.totalorder %s35, 0
      %p276 = por %p274, %p275
      %p277 = scmp.ne.s32.totalorder %s263, %s264
      %p278 = scmp.eq.s32.totalorder %s36, 1
      %p279 = por %p277, %p278
      %p281 = scmp.ne.s32.totalorder %s264, %s280
      %p282 = scmp.eq.s32.totalorder %s36, 0
      %p283 = por %p281, %p282
      %s284 = ssub.s32 %s38, %s45
      %p285 = scmp.eq.s32.totalorder %s284, 0
      %s287 = sadd.s32 %s286, 1
      %s288 = scalar_select %p285, %s286, %s287
      %p291 = pneg %p285
      %p292 = scmp.eq.s32.totalorder %s30, 1
      %p293 = por %p291, %p292
      %p294 = scmp.ne.s32.totalorder %s286, %s289
      %p295 = scmp.eq.s32.totalorder %s30, 0
      %p296 = por %p294, %p295
      %p297 = scmp.ne.s32.totalorder %s286, %s289
      %p298 = scmp.eq.s32.totalorder %s35, 1
      %p299 = por %p297, %p298
      %p300 = scmp.ne.s32.totalorder %s289, %s290
      %p301 = scmp.eq.s32.totalorder %s35, 0
      %p302 = por %p300, %p301
      %p303 = scmp.ne.s32.totalorder %s289, %s290
      %p304 = scmp.eq.s32.totalorder %s36, 1
      %p305 = por %p303, %p304
      %p307 = scmp.ne.s32.totalorder %s290, %s306
      %p308 = scmp.eq.s32.totalorder %s36, 0
      %p309 = por %p307, %p308
      %s310 = ssub.s32 %s38, %s45
      %p311 = scmp.eq.s32.totalorder %s310, 0
      %s313 = sadd.s32 %s312, 1
      %s314 = scalar_select %p311, %s312, %s313
      %p317 = pneg %p311
      %p318 = scmp.eq.s32.totalorder %s30, 1
      %p319 = por %p317, %p318
      %p320 = scmp.ne.s32.totalorder %s312, %s315
      %p321 = scmp.eq.s32.totalorder %s30, 0
      %p322 = por %p320, %p321
      %p323 = scmp.ne.s32.totalorder %s312, %s315
      %p324 = scmp.eq.s32.totalorder %s35, 1
      %p325 = por %p323, %p324
      %p326 = scmp.ne.s32.totalorder %s315, %s316
      %p327 = scmp.eq.s32.totalorder %s35, 0
      %p328 = por %p326, %p327
      %p329 = scmp.ne.s32.totalorder %s315, %s316
      %p330 = scmp.eq.s32.totalorder %s36, 1
      %p331 = por %p329, %p330
      %p333 = scmp.ne.s32.totalorder %s316, %s332
      %p334 = scmp.eq.s32.totalorder %s36, 0
      %p335 = por %p333, %p334
      %s336 = ssub.s32 %s38, %s45
      %p337 = scmp.eq.s32.totalorder %s336, 0
      %s339 = sadd.s32 %s338, 1
      %s340 = scalar_select %p337, %s338, %s339
      %p343 = pneg %p337
      %p344 = scmp.eq.s32.totalorder %s30, 1
      %p345 = por %p343, %p344
      %p346 = scmp.ne.s32.totalorder %s338, %s341
      %p347 = scmp.eq.s32.totalorder %s30, 0
      %p348 = por %p346, %p347
      %p349 = scmp.ne.s32.totalorder %s338, %s341
      %p350 = scmp.eq.s32.totalorder %s35, 1
      %p351 = por %p349, %p350
      %p352 = scmp.ne.s32.totalorder %s341, %s342
      %p353 = scmp.eq.s32.totalorder %s35, 0
      %p354 = por %p352, %p353
      %p355 = scmp.ne.s32.totalorder %s341, %s342
      %p356 = scmp.eq.s32.totalorder %s36, 1
      %p357 = por %p355, %p356
      %p359 = scmp.ne.s32.totalorder %s342, %s358
      %p360 = scmp.eq.s32.totalorder %s36, 0
      %p361 = por %p359, %p360
      %s362 = ssub.s32 %s38, %s45
      %p363 = scmp.eq.s32.totalorder %s362, 0
      %s365 = sadd.s32 %s364, 1
      %s366 = scalar_select %p363, %s364, %s365
      %p369 = pneg %p363
      %p370 = scmp.eq.s32.totalorder %s30, 1
      %p371 = por %p369, %p370
      %p372 = scmp.ne.s32.totalorder %s364, %s367
      %p373 = scmp.eq.s32.totalorder %s30, 0
      %p374 = por %p372, %p373
      %p375 = scmp.ne.s32.totalorder %s364, %s367
      %p376 = scmp.eq.s32.totalorder %s35, 1
      %p377 = por %p375, %p376
      %p378 = scmp.ne.s32.totalorder %s367, %s368
      %p379 = scmp.eq.s32.totalorder %s35, 0
      %p380 = por %p378, %p379
      %p381 = scmp.ne.s32.totalorder %s367, %s368
      %p382 = scmp.eq.s32.totalorder %s36, 1
      %p383 = por %p381, %p382
      %p385 = scmp.ne.s32.totalorder %s368, %s384
      %p386 = scmp.eq.s32.totalorder %s36, 0
      %p387 = por %p385, %p386
      %s388 = ssub.s32 %s37, %s49
      %p389 = scmp.eq.s32.totalorder %s388, 0
      %s391 = sadd.s32 %s390, 1
      %s392 = scalar_select %p389, %s390, %s391
      %p395 = pneg %p389
      %p396 = scmp.eq.s32.totalorder %s30, 1
      %p397 = por %p395, %p396
      %p398 = scmp.ne.s32.totalorder %s390, %s393
      %p399 = scmp.eq.s32.totalorder %s30, 0
      %p400 = por %p398, %p399
      %p401 = scmp.ne.s32.totalorder %s390, %s393
      %p402 = scmp.eq.s32.totalorder %s35, 1
      %p403 = por %p401, %p402
      %p404 = scmp.ne.s32.totalorder %s393, %s394
      %p405 = scmp.eq.s32.totalorder %s35, 0
      %p406 = por %p404, %p405
      %p407 = scmp.ne.s32.totalorder %s393, %s394
      %p408 = scmp.eq.s32.totalorder %s36, 1
      %p409 = por %p407, %p408
      %p411 = scmp.ne.s32.totalorder %s394, %s410
      %p412 = scmp.eq.s32.totalorder %s36, 0
      %p413 = por %p411, %p412
      %p414 = scmp.le.s32.totalorder 1, %s30
      %p415 = scmp.lt.s32.totalorder %s30, 3
      %p416 = pnand %p414, %p415
      %p417 = pneg %p416
      // Predicated region
      $region9: #{encoder_forward.1} parent=5 // pred_check
        _
      $region10: #{encoder_forward.1} parent=5 // pred_check_branch
        %419 = sbr.rel (%p416) target = $region12
      $region11: #{encoder_forward.1} parent=5 // pred_region
        %s420 = ssub.s32 %s30, 1
        // Predicated region
        $region13: #{encoder_forward.1} parent=11 // pred_check
          %p421 = pneg %p68
        $region14: #{encoder_forward.1} parent=11 // pred_check_branch
          %423 = sbr.rel (%p421) target = $region16
        $region15: #{encoder_forward.1} parent=11 // pred_region
          %s424 = smul.u32 2, %s39
          %s426 = ssub.s32 256, 256
          %427 = vsyncadd [#allocation4], %s426
          %s428 = smul.addr %s424, 128
          %s429 = scalar_lea.hbm %s0, %s428
          %s430 = sshll.u32 [#allocation3], 4
          %s431 = int_to_ptr.vmem [resolvable:$true] %s430
          %436 = dma.hbm_to_vmem [thread:$0]  %s429, 256, %s431, [#allocation4], 128, 128, 8
        $region16: #{encoder_forward.1} parent=11 // pred_fallthru
          _
      $region12: #{encoder_forward.1} parent=5 // pred_fallthru
        _
      %p437 = scmp.lt.s32.totalorder %s30, 2
      // Predicated region
      $region17: #{encoder_forward.1} parent=5 // pred_check
        %p438 = pneg %p437
      $region18: #{encoder_forward.1} parent=5 // pred_check_branch
        %440 = sbr.rel (%p438) target = $region20
      $region19: #{encoder_forward.1} parent=5 // pred_region
        // Predicated region
        $region21: #{encoder_forward.1} parent=19 // pred_check
          %p441 = pneg %p88
        $region22: #{encoder_forward.1} parent=19 // pred_check_branch
          %443 = sbr.rel (%p441) target = $region24
        $region23: #{encoder_forward.1} parent=19 // pred_region
          %p444 = scmp.lt.s32.totalorder %s38, 1
          %s445 = scalar_select %p444, %s38, 1
          %s446 = smul.addr %s445, 4
          %s447 = smul.addr %s446, 4
          %s448 = scalar_lea.vmem %s1, %s447
        $region24: #{encoder_forward.1} parent=19 // pred_fallthru
          _
        // Predicated region
        $region25: #{encoder_forward.1} parent=19 // pred_check
          %p449 = pneg %p114
        $region26: #{encoder_forward.1} parent=19 // pred_check_branch
          %451 = sbr.rel (%p449) target = $region28
        $region27: #{encoder_forward.1} parent=19 // pred_region
          %p452 = scmp.lt.s32.totalorder %s38, 1
          %s453 = scalar_select %p452, %s38, 1
          %s454 = scalar_lea.vmem %s2, %s453
        $region28: #{encoder_forward.1} parent=19 // pred_fallthru
          _
        // Predicated region
        $region29: #{encoder_forward.1} parent=19 // pred_check
          %p455 = pneg %p140
        $region30: #{encoder_forward.1} parent=19 // pred_check_branch
          %457 = sbr.rel (%p455) target = $region32
        $region31: #{encoder_forward.1} parent=19 // pred_region
          %p458 = scmp.lt.s32.totalorder %s38, 1
          %s459 = scalar_select %p458, %s38, 1
          %s460 = smul.addr %s459, 4
          %s461 = smul.addr %s460, 4
          %s462 = scalar_lea.vmem %s3, %s461
        $region32: #{encoder_forward.1} parent=19 // pred_fallthru
          _
        // Predicated region
        $region33: #{encoder_forward.1} parent=19 // pred_check
          %p463 = pneg %p166
        $region34: #{encoder_forward.1} parent=19 // pred_check_branch
          %465 = sbr.rel (%p463) target = $region36
        $region35: #{encoder_forward.1} parent=19 // pred_region
          %p466 = scmp.lt.s32.totalorder %s38, 1
          %s467 = scalar_select %p466, %s38, 1
          %s468 = scalar_lea.vmem %s4, %s467
        $region36: #{encoder_forward.1} parent=19 // pred_fallthru
          _
        // Predicated region
        $region37: #{encoder_forward.1} parent=19 // pred_check
          %p469 = pneg %p192
        $region38: #{encoder_forward.1} parent=19 // pred_check_branch
          %471 = sbr.rel (%p469) target = $region40
        $region39: #{encoder_forward.1} parent=19 // pred_region
          %s472 = sand.u32 %s30, 1
          %s473 = scalar_lea.sflag [#allocation7], %s472
          %s474 = sand.u32 %s182, 1
          %s475 = scalar_lea.vmem [#allocation6], %s474
          %s477 = ssub.s32 16, 16
          %478 = vsyncadd %s473, %s477
          %s479 = smul.addr %s38, 16
          %s480 = scalar_lea.hbm %s5, %s479
          %s482 = sshll.u32 %s475, 4
          %s483 = int_to_ptr.vmem [resolvable:$true] %s482
          %485 = dma.hbm_to_vmem [thread:$0]  %s480, 16, %s483, %s473
        $region40: #{encoder_forward.1} parent=19 // pred_fallthru
          _
        // Predicated region
        $region41: #{encoder_forward.1} parent=19 // pred_check
          %p486 = pneg %p218
        $region42: #{encoder_forward.1} parent=19 // pred_check_branch
          %488 = sbr.rel (%p486) target = $region44
        $region43: #{encoder_forward.1} parent=19 // pred_region
          %s489 = sand.u32 %s30, 1
          %s490 = scalar_lea.sflag [#allocation7], %s489
          %s491 = sand.u32 %s208, 1
          %s492 = scalar_lea.vmem [#allocation8], %s491
          %s494 = ssub.s32 16, 16
          %495 = vsyncadd %s490, %s494
          %s496 = smul.addr %s38, 16
          %s497 = scalar_lea.hbm %s6, %s496
          %s499 = sshll.u32 %s492, 4
          %s500 = int_to_ptr.vmem [resolvable:$true] %s499
          %502 = dma.hbm_to_vmem [thread:$0]  %s497, 16, %s500, %s490
        $region44: #{encoder_forward.1} parent=19 // pred_fallthru
          _
        // Predicated region
        $region45: #{encoder_forward.1} parent=19 // pred_check
          %p503 = pneg %p244
        $region46: #{encoder_forward.1} parent=19 // pred_check_branch
          %505 = sbr.rel (%p503) target = $region48
        $region47: #{encoder_forward.1} parent=19 // pred_region
          %p506 = scmp.lt.s32.totalorder %s38, 1
          %s507 = scalar_select %p506, %s38, 1
          %s508 = smul.addr %s507, 4
          %s509 = smul.addr %s508, 4
          %s510 = scalar_lea.vmem %s7, %s509
        $region48: #{encoder_forward.1} parent=19 // pred_fallthru
          _
        // Predicated region
        $region49: #{encoder_forward.1} parent=19 // pred_check
          %p511 = pneg %p270
        $region50: #{encoder_forward.1} parent=19 // pred_check_branch
          %513 = sbr.rel (%p511) target = $region52
        $region51: #{encoder_forward.1} parent=19 // pred_region
          %s514 = sand.u32 %s30, 1
          %s515 = scalar_lea.sflag [#allocation10], %s514
          %s516 = sand.u32 %s260, 1
          %s517 = scalar_lea.vmem [#allocation9], %s516
          %s519 = ssub.s32 16, 16
          %520 = vsyncadd %s515, %s519
          %s521 = smul.addr %s38, 16
          %s522 = scalar_lea.hbm %s8, %s521
          %s524 = sshll.u32 %s517, 4
          %s525 = int_to_ptr.vmem [resolvable:$true] %s524
          %527 = dma.hbm_to_vmem [thread:$0]  %s522, 16, %s525, %s515
        $region52: #{encoder_forward.1} parent=19 // pred_fallthru
          _
        // Predicated region
        $region53: #{encoder_forward.1} parent=19 // pred_check
          %p528 = pneg %p296
        $region54: #{encoder_forward.1} parent=19 // pred_check_branch
          %530 = sbr.rel (%p528) target = $region56
        $region55: #{encoder_forward.1} parent=19 // pred_region
          %p531 = scmp.lt.s32.totalorder %s38, 1
          %s532 = scalar_select %p531, %s38, 1
          %s533 = smul.addr %s532, 8
          %s534 = smul.addr %s533, 4
          %s535 = scalar_lea.vmem %s9, %s534
        $region56: #{encoder_forward.1} parent=19 // pred_fallthru
          _
        // Predicated region
        $region57: #{encoder_forward.1} parent=19 // pred_check
          %p536 = pneg %p322
        $region58: #{encoder_forward.1} parent=19 // pred_check_branch
          %538 = sbr.rel (%p536) target = $region60
        $region59: #{encoder_forward.1} parent=19 // pred_region
          %s539 = sand.u32 %s30, 1
          %s540 = scalar_lea.sflag [#allocation10], %s539
          %s541 = sand.u32 %s312, 1
          %s542 = scalar_lea.vmem [#allocation11], %s541
          %s544 = ssub.s32 16, 16
          %545 = vsyncadd %s540, %s544
          %s546 = smul.addr %s38, 16
          %s547 = scalar_lea.hbm %s10, %s546
          %s549 = sshll.u32 %s542, 4
          %s550 = int_to_ptr.vmem [resolvable:$true] %s549
          %552 = dma.hbm_to_vmem [thread:$0]  %s547, 16, %s550, %s540
        $region60: #{encoder_forward.1} parent=19 // pred_fallthru
          _
        // Predicated region
        $region61: #{encoder_forward.1} parent=19 // pred_check
          %p553 = pneg %p348
        $region62: #{encoder_forward.1} parent=19 // pred_check_branch
          %555 = sbr.rel (%p553) target = $region64
        $region63: #{encoder_forward.1} parent=19 // pred_region
          %s556 = sand.u32 %s30, 1
          %s557 = scalar_lea.sflag [#allocation13], %s556
          %s558 = sand.u32 %s338, 1
          %s559 = scalar_lea.vmem [#allocation12], %s558
          %s561 = ssub.s32 16, 16
          %562 = vsyncadd %s557, %s561
          %s563 = smul.addr %s38, 16
          %s564 = scalar_lea.hbm %s11, %s563
          %s566 = sshll.u32 %s559, 4
          %s567 = int_to_ptr.vmem [resolvable:$true] %s566
          %569 = dma.hbm_to_vmem [thread:$0]  %s564, 16, %s567, %s557
        $region64: #{encoder_forward.1} parent=19 // pred_fallthru
          _
        // Predicated region
        $region65: #{encoder_forward.1} parent=19 // pred_check
          %p570 = pneg %p374
        $region66: #{encoder_forward.1} parent=19 // pred_check_branch
          %572 = sbr.rel (%p570) target = $region68
        $region67: #{encoder_forward.1} parent=19 // pred_region
          %s573 = sand.u32 %s30, 1
          %s574 = scalar_lea.sflag [#allocation13], %s573
          %s575 = sand.u32 %s364, 1
          %s576 = scalar_lea.vmem [#allocation14], %s575
          %s578 = ssub.s32 16, 16
          %579 = vsyncadd %s574, %s578
          %s580 = smul.addr %s38, 16
          %s581 = scalar_lea.hbm %s12, %s580
          %s583 = sshll.u32 %s576, 4
          %s584 = int_to_ptr.vmem [resolvable:$true] %s583
          %586 = dma.hbm_to_vmem [thread:$0]  %s581, 16, %s584, %s574
        $region68: #{encoder_forward.1} parent=19 // pred_fallthru
          _
      $region20: #{encoder_forward.1} parent=5 // pred_fallthru
        _
      %p587 = scmp.le.s32.totalorder 1, %s30
      %p588 = scmp.lt.s32.totalorder %s30, 3
      %p589 = pnand %p587, %p588
      %p590 = pneg %p589
      // Predicated region
      $region69: #{encoder_forward.1} parent=5 // pred_check
        _
      $region70: #{encoder_forward.1} parent=5 // pred_check_branch
        %592 = sbr.rel (%p589) target = $region72
      $region71: #{encoder_forward.1} parent=5 // pred_region
        %s593 = ssub.s32 %s30, 1
        // Predicated region
        $region73: #{encoder_forward.1} parent=71 // pred_check
          %p594 = pneg %p68
        $region74: #{encoder_forward.1} parent=71 // pred_check_branch
          %596 = sbr.rel (%p594) target = $region76
        $region75: #{encoder_forward.1} parent=71 // pred_region
          %597 = dma.done [#allocation4], 256
        $region76: #{encoder_forward.1} parent=71 // pred_fallthru
          _
        %s598 = sand.u32 %s35, 1
        %s599 = scalar_lea.sflag [#allocation7], %s598
        %s600 = sand.u32 %s185, 1
        %s601 = scalar_lea.vmem [#allocation6], %s600
        // Predicated region
        $region77: #{encoder_forward.1} parent=71 // pred_check
          %p602 = pneg %p198
        $region78: #{encoder_forward.1} parent=71 // pred_check_branch
          %604 = sbr.rel (%p602) target = $region80
        $region79: #{encoder_forward.1} parent=71 // pred_region
          %605 = dma.done %s599, 16
        $region80: #{encoder_forward.1} parent=71 // pred_fallthru
          _
        %s606 = sand.u32 %s35, 1
        %s607 = scalar_lea.sflag [#allocation7], %s606
        %s608 = sand.u32 %s211, 1
        %s609 = scalar_lea.vmem [#allocation8], %s608
        // Predicated region
        $region81: #{encoder_forward.1} parent=71 // pred_check
          %p610 = pneg %p224
        $region82: #{encoder_forward.1} parent=71 // pred_check_branch
          %612 = sbr.rel (%p610) target = $region84
        $region83: #{encoder_forward.1} parent=71 // pred_region
          %613 = dma.done %s607, 16
        $region84: #{encoder_forward.1} parent=71 // pred_fallthru
          _
        %s614 = sand.u32 %s35, 1
        %s615 = scalar_lea.sflag [#allocation10], %s614
        %s616 = sand.u32 %s263, 1
        %s617 = scalar_lea.vmem [#allocation9], %s616
        // Predicated region
        $region85: #{encoder_forward.1} parent=71 // pred_check
          %p618 = pneg %p276
        $region86: #{encoder_forward.1} parent=71 // pred_check_branch
          %620 = sbr.rel (%p618) target = $region88
        $region87: #{encoder_forward.1} parent=71 // pred_region
          %621 = dma.done %s615, 16
        $region88: #{encoder_forward.1} parent=71 // pred_fallthru
          _
        %s622 = sand.u32 %s35, 1
        %s623 = scalar_lea.sflag [#allocation10], %s622
        %s624 = sand.u32 %s315, 1
        %s625 = scalar_lea.vmem [#allocation11], %s624
        // Predicated region
        $region89: #{encoder_forward.1} parent=71 // pred_check
          %p626 = pneg %p328
        $region90: #{encoder_forward.1} parent=71 // pred_check_branch
          %628 = sbr.rel (%p626) target = $region92
        $region91: #{encoder_forward.1} parent=71 // pred_region
          %629 = dma.done %s623, 16
        $region92: #{encoder_forward.1} parent=71 // pred_fallthru
          _
        %s630 = sand.u32 %s35, 1
        %s631 = scalar_lea.sflag [#allocation13], %s630
        %s632 = sand.u32 %s341, 1
        %s633 = scalar_lea.vmem [#allocation12], %s632
        // Predicated region
        $region93: #{encoder_forward.1} parent=71 // pred_check
          %p634 = pneg %p354
        $region94: #{encoder_forward.1} parent=71 // pred_check_branch
          %636 = sbr.rel (%p634) target = $region96
        $region95: #{encoder_forward.1} parent=71 // pred_region
          %637 = dma.done %s631, 16
        $region96: #{encoder_forward.1} parent=71 // pred_fallthru
          _
        %s638 = sand.u32 %s35, 1
        %s639 = scalar_lea.sflag [#allocation13], %s638
        %s640 = sand.u32 %s367, 1
        %s641 = scalar_lea.vmem [#allocation14], %s640
        // Predicated region
        $region97: #{encoder_forward.1} parent=71 // pred_check
          %p642 = pneg %p380
        $region98: #{encoder_forward.1} parent=71 // pred_check_branch
          %644 = sbr.rel (%p642) target = $region100
        $region99: #{encoder_forward.1} parent=71 // pred_region
          %645 = dma.done %s639, 16
        $region100: #{encoder_forward.1} parent=71 // pred_fallthru
          _
        %p646 = pneg %p68
        %p647 = pneg %p65
        %p648 = scmp.lt.s32.totalorder %s40, 1
        %s649 = scalar_select %p648, %s40, 1
        %s650 = smul.addr %s649, 4
        %s651 = smul.addr %s650, 4
        %s652 = scalar_lea.vmem %s1, %s651
        %p653 = pneg %p94
        %p654 = pneg %p91
        %p655 = scmp.lt.s32.totalorder %s40, 1
        %s656 = scalar_select %p655, %s40, 1
        %s657 = scalar_lea.vmem %s2, %s656
        %p658 = pneg %p120
        %p659 = pneg %p117
        %p660 = scmp.lt.s32.totalorder %s40, 1
        %s661 = scalar_select %p660, %s40, 1
        %s662 = smul.addr %s661, 4
        %s663 = smul.addr %s662, 4
        %s664 = scalar_lea.vmem %s3, %s663
        %p665 = pneg %p146
        %p666 = pneg %p143
        %p667 = scmp.lt.s32.totalorder %s40, 1
        %s668 = scalar_select %p667, %s40, 1
        %s669 = scalar_lea.vmem %s4, %s668
        %p670 = pneg %p172
        %p671 = pneg %p169
        %s672 = sand.u32 %s35, 1
        %s673 = scalar_lea.sflag [#allocation7], %s672
        %s674 = sand.u32 %s185, 1
        %s675 = scalar_lea.vmem [#allocation6], %s674
        %p676 = pneg %p198
        %p677 = pneg %p195
        %s678 = sand.u32 %s35, 1
        %s679 = scalar_lea.sflag [#allocation7], %s678
        %s680 = sand.u32 %s211, 1
        %s681 = scalar_lea.vmem [#allocation8], %s680
        %p682 = pneg %p224
        %p683 = pneg %p221
        %p684 = scmp.lt.s32.totalorder %s40, 1
        %s685 = scalar_select %p684, %s40, 1
        %s686 = smul.addr %s685, 4
        %s687 = smul.addr %s686, 4
        %s688 = scalar_lea.vmem %s7, %s687
        %p689 = pneg %p250
        %p690 = pneg %p247
        %s691 = sand.u32 %s35, 1
        %s692 = scalar_lea.sflag [#allocation10], %s691
        %s693 = sand.u32 %s263, 1
        %s694 = scalar_lea.vmem [#allocation9], %s693
        %p695 = pneg %p276
        %p696 = pneg %p273
        %p697 = scmp.lt.s32.totalorder %s40, 1
        %s698 = scalar_select %p697, %s40, 1
        %s699 = smul.addr %s698, 8
        %s700 = smul.addr %s699, 4
        %s701 = scalar_lea.vmem %s9, %s700
        %p702 = pneg %p302
        %p703 = pneg %p299
        %s704 = sand.u32 %s35, 1
        %s705 = scalar_lea.sflag [#allocation10], %s704
        %s706 = sand.u32 %s315, 1
        %s707 = scalar_lea.vmem [#allocation11], %s706
        %p708 = pneg %p328
        %p709 = pneg %p325
        %s710 = sand.u32 %s35, 1
        %s711 = scalar_lea.sflag [#allocation13], %s710
        %s712 = sand.u32 %s341, 1
        %s713 = scalar_lea.vmem [#allocation12], %s712
        %p714 = pneg %p354
        %p715 = pneg %p351
        %s716 = sand.u32 %s35, 1
        %s717 = scalar_lea.sflag [#allocation13], %s716
        %s718 = sand.u32 %s367, 1
        %s719 = scalar_lea.vmem [#allocation14], %s718
        %p720 = pneg %p380
        %p721 = pneg %p377
        %p722 = pneg %p406
        %p723 = pneg %p403
        %s724 = smul.u32 2, %s39
        %p725 = scmp.lt.s32.totalorder %s40, 1
        %s726 = scalar_select %p725, %s40, 1
        %s727 = smul.addr %s726, 4
        %s728 = smul.addr %s727, 4
        %s729 = scalar_lea.vmem %s1, %s728
        %p730 = scmp.lt.s32.totalorder %s40, 1
        %s731 = scalar_select %p730, %s40, 1
        %s732 = scalar_lea.vmem %s2, %s731
        %p733 = scmp.lt.s32.totalorder %s40, 1
        %s734 = scalar_select %p733, %s40, 1
        %s735 = smul.addr %s734, 4
        %s736 = smul.addr %s735, 4
        %s737 = scalar_lea.vmem %s3, %s736
        %p738 = scmp.lt.s32.totalorder %s40, 1
        %s739 = scalar_select %p738, %s40, 1
        %s740 = scalar_lea.vmem %s4, %s739
        %p741 = scmp.lt.s32.totalorder %s40, 1
        %s742 = scalar_select %p741, %s40, 1
        %s743 = smul.addr %s742, 4
        %s744 = smul.addr %s743, 4
        %s745 = scalar_lea.vmem %s7, %s744
        %p746 = scmp.lt.s32.totalorder %s40, 1
        %s747 = scalar_select %p746, %s40, 1
        %s748 = smul.addr %s747, 8
        %s749 = smul.addr %s748, 4
        %s750 = scalar_lea.vmem %s9, %s749
        %s751 = smul.u32 2, %s39
        %p753 = scmp.eq.s32.totalorder %s40, 0
        // Predicated region
        $region101: #{encoder_forward.1} parent=71 // pred_check
          %p754 = pneg %p753
        $region102: #{encoder_forward.1} parent=71 // pred_check_branch
          %756 = sbr.rel (%p754) target = $region104
        $region103: #{encoder_forward.1} parent=71 // pred_region
          %v757 = vld [vmem:[#allocation3] sm:$0xff]
          %v758 = vld [vmem:[#allocation3 + $0x8] sm:$0xff]
          %vm759 = vcmask 261120
          %760 = vst.msk [vmem:[#allocation2] sm:$0xff] %vm759, %v757
          %761 = vst.msk [vmem:[#allocation2 + $0x8] sm:$0xff] %vm759, %v758
        $region104: #{encoder_forward.1} parent=71 // pred_fallthru
          _
        %v762 = vld [vmem:[#allocation2] sm:$0xff]
        %v763 = vld [vmem:[#allocation2 + $0x8] sm:$0xff]
        %v764 = vpack.c.bf16 %v763, %v762
        %v765 = vld [vmem:[%s729] sm:$0xf]
        %v766 = vld [vmem:[%s729 + $0x4] sm:$0xf]
        %v767 = vld [vmem:[%s729 + $0x8] sm:$0xf]
        %v768 = vld [vmem:[%s729 + $0xc] sm:$0xf]
        %v769 = vld [vmem:[%s732] sm:$0x1]
        %v771 = vlaneseq
        %v772 = vshrl.u32 %v771, 7
        %v773 = vsub.s32 0, %v772
        %v774 = vrot.slane %v769, %v773
        %v780 = vunpack.c.l.b16 %v765
        %v781 = vunpack.c.l.b16 %v766
        %v782 = vunpack.c.l.b16 %v767
        %v783 = vunpack.c.l.b16 %v768
        %v784 = vpack.c.b16 %v781, %v780
        %v785 = vpack.c.b16 %v783, %v782
        %vm788 = vcmask 261120
        %v790 = vsel %vm788, %v764, 0
        %792 = vmatprep.subr.bf16.mxu0 0
        %793 = vmatpush1.bf16.msra.mxu0 %v784
        %794 = vmatprep.subr.bf16.mxu0 0
        %795 = vmatpush1.bf16.msra.mxu0 %v785
        %796 = vmatprep.subr.bf16.mxu0 0
        %797 = vmatpush1.bf16.msra.mxu0 0
        %798 = vmatprep.subr.bf16.mxu0 0
        %799 = vmatpush1.bf16.msra.mxu0 0
        %800 = vmatprep.subr.bf16.mxu0 0
        %801 = vmatpush1.bf16.msra.mxu0 0
        %802 = vmatprep.subr.bf16.mxu0 0
        %803 = vmatpush1.bf16.msra.mxu0 0
        %804 = vmatprep.subr.bf16.mxu0 0
        %805 = vmatpush1.bf16.msra.mxu0 0
        %806 = vmatprep.subr.bf16.mxu0 0
        %807 = vmatpush1.bf16.msra.mxu0 0
        %808 = vmatprep.subr.bf16.mxu0 0
        %809 = vmatpush1.bf16.msra.mxu0 0
        %810 = vmatprep.subr.bf16.mxu0 0
        %811 = vmatpush1.bf16.msra.mxu0 0
        %812 = vmatprep.subr.bf16.mxu0 0
        %813 = vmatpush1.bf16.msra.mxu0 0
        %814 = vmatprep.subr.bf16.mxu0 0
        %815 = vmatpush1.bf16.msra.mxu0 0
        %816 = vmatprep.subr.bf16.mxu0 0
        %817 = vmatpush1.bf16.msra.mxu0 0
        %818 = vmatprep.subr.bf16.mxu0 0
        %819 = vmatpush1.bf16.msra.mxu0 0
        %820 = vmatprep.subr.bf16.mxu0 0
        %821 = vmatpush1.bf16.msra.mxu0 0
        %822 = vmatprep.subr.bf16.mxu0 0
        %823 = vmatpush1.bf16.msra.mxu0 0
        %824 = vmatprep.mubr.bf16.mxu0 0
        %825 = vmatmul.mubr.bf16.gmra.mrb[0].mxu0 %v790
        %v826 = vpop.f32.mrb[0].mxu0
        %v827 = vadd.f32 %v774, %v826
        %v828 = vpop.f32.mrb[0].mxu0
        %v829 = vpop.f32.mrb[0].mxu0
        %v830 = vadd.f32 %v774, %v829
        %v831 = vpop.f32.mrb[0].mxu0
        %832 = vdwg.mxu0
        %v833 = vmul.f32 %v827, 0.35355338
        %v834 = vmul.f32 %v830, 0.35355338
        %837 = vrot.lane.b32.xlu0 %v833, 120
        %v838 = vpop.permute.xlu0 %837
        %839 = vrot.lane.b32.xlu0 %v834, 120
        %v840 = vpop.permute.xlu0 %839
        %843 = vrot.lane.b32.xlu0 %v833, 112
        %v844 = vpop.permute.xlu0 %843
        %845 = vrot.lane.b32.xlu0 %v834, 112
        %v846 = vpop.permute.xlu0 %845
        %849 = vrot.lane.b32.xlu0 %v833, 104
        %v850 = vpop.permute.xlu0 %849
        %851 = vrot.lane.b32.xlu0 %v834, 104
        %v852 = vpop.permute.xlu0 %851
        %v855 = vcombine.low %v833, %v844
        %v856 = vcombine.high %v833, %v844
        %v858 = vunpack.c.l.s4 1983009808
        %v859 = vunpack.c.0.s8 %v858
        %v860 = vlaneseq
        %v861 = vshrl.u32 %v860, 7
        %v862 = vsub.s32 %v859, %v861
        %v863 = vrot.slane %v855, %v862
        %v865 = vunpack.c.l.s4 1983009808
        %v866 = vunpack.c.0.s8 %v865
        %v867 = vlaneseq
        %v868 = vshrl.u32 %v867, 7
        %v869 = vsub.s32 %v866, %v868
        %v870 = vrot.slane %v856, %v869
        %v871 = vcombine.low %v838, %v850
        %v872 = vcombine.high %v838, %v850
        %v874 = vunpack.c.l.s4 1983009808
        %v875 = vunpack.c.0.s8 %v874
        %v876 = vlaneseq
        %v877 = vshrl.u32 %v876, 7
        %v878 = vsub.s32 %v875, %v877
        %v879 = vrot.slane %v871, %v878
        %v881 = vunpack.c.l.s4 1983009808
        %v882 = vunpack.c.0.s8 %v881
        %v883 = vlaneseq
        %v884 = vshrl.u32 %v883, 7
        %v885 = vsub.s32 %v882, %v884
        %v886 = vrot.slane %v872, %v885
        %v887 = vcombine.low %v863, %v879
        %v888 = vcombine.high %v863, %v879
        %v890 = vunpack.c.l.s4 1934713408
        %v891 = vunpack.c.0.s8 %v890
        %v892 = vlaneseq
        %v893 = vshrl.u32 %v892, 7
        %v894 = vsub.s32 %v891, %v893
        %v895 = vrot.slane %v887, %v894
        %v897 = vunpack.c.l.s4 1934713408
        %v898 = vunpack.c.0.s8 %v897
        %v899 = vlaneseq
        %v900 = vshrl.u32 %v899, 7
        %v901 = vsub.s32 %v898, %v900
        %v902 = vrot.slane %v888, %v901
        %v903 = vcombine.low %v870, %v886
        %v904 = vcombine.high %v870, %v886
        %v906 = vunpack.c.l.s4 1934713408
        %v907 = vunpack.c.0.s8 %v906
        %v908 = vlaneseq
        %v909 = vshrl.u32 %v908, 7
        %v910 = vsub.s32 %v907, %v909
        %v911 = vrot.slane %v903, %v910
        %v913 = vunpack.c.l.s4 1934713408
        %v914 = vunpack.c.0.s8 %v913
        %v915 = vlaneseq
        %v916 = vshrl.u32 %v915, 7
        %v917 = vsub.s32 %v914, %v916
        %v918 = vrot.slane %v904, %v917
        %v919 = vcombine.high %v895, 0.0
        %v920 = vcombine.high %v902, 0.0
        %v921 = vcombine.high %v911, 0.0
        %v922 = vcombine.high %v918, 0.0
        %v923 = vcombine.low %v834, %v846
        %v924 = vcombine.high %v834, %v846
        %v926 = vunpack.c.l.s4 1983009808
        %v927 = vunpack.c.0.s8 %v926
        %v928 = vlaneseq
        %v929 = vshrl.u32 %v928, 7
        %v930 = vsub.s32 %v927, %v929
        %v931 = vrot.slane %v923, %v930
        %v933 = vunpack.c.l.s4 1983009808
        %v934 = vunpack.c.0.s8 %v933
        %v935 = vlaneseq
        %v936 = vshrl.u32 %v935, 7
        %v937 = vsub.s32 %v934, %v936
        %v938 = vrot.slane %v924, %v937
        %v939 = vcombine.low %v840, %v852
        %v940 = vcombine.high %v840, %v852
        %v942 = vunpack.c.l.s4 1983009808
        %v943 = vunpack.c.0.s8 %v942
        %v944 = vlaneseq
        %v945 = vshrl.u32 %v944, 7
        %v946 = vsub.s32 %v943, %v945
        %v947 = vrot.slane %v939, %v946
        %v949 = vunpack.c.l.s4 1983009808
        %v950 = vunpack.c.0.s8 %v949
        %v951 = vlaneseq
        %v952 = vshrl.u32 %v951, 7
        %v953 = vsub.s32 %v950, %v952
        %v954 = vrot.slane %v940, %v953
        %v955 = vcombine.low %v931, %v947
        %v956 = vcombine.high %v931, %v947
        %v958 = vunpack.c.l.s4 1934713408
        %v959 = vunpack.c.0.s8 %v958
        %v960 = vlaneseq
        %v961 = vshrl.u32 %v960, 7
        %v962 = vsub.s32 %v959, %v961
        %v963 = vrot.slane %v955, %v962
        %v965 = vunpack.c.l.s4 1934713408
        %v966 = vunpack.c.0.s8 %v965
        %v967 = vlaneseq
        %v968 = vshrl.u32 %v967, 7
        %v969 = vsub.s32 %v966, %v968
        %v970 = vrot.slane %v956, %v969
        %v971 = vcombine.low %v938, %v954
        %v972 = vcombine.high %v938, %v954
        %v974 = vunpack.c.l.s4 1934713408
        %v975 = vunpack.c.0.s8 %v974
        %v976 = vlaneseq
        %v977 = vshrl.u32 %v976, 7
        %v978 = vsub.s32 %v975, %v977
        %v979 = vrot.slane %v971, %v978
        %v981 = vunpack.c.l.s4 1934713408
        %v982 = vunpack.c.0.s8 %v981
        %v983 = vlaneseq
        %v984 = vshrl.u32 %v983, 7
        %v985 = vsub.s32 %v982, %v984
        %v986 = vrot.slane %v972, %v985
        %v987 = vcombine.high %v963, 0.0
        %v988 = vcombine.high %v970, 0.0
        %v989 = vcombine.high %v979, 0.0
        %v990 = vcombine.high %v986, 0.0
        %v991 = vcombine.low %v895, %v902
        %v993 = vunpack.c.l.s4 1983009808
        %v994 = vunpack.c.0.s8 %v993
        %v995 = vlaneseq
        %v996 = vshrl.u32 %v995, 7
        %v997 = vsub.s32 %v994, %v996
        %v998 = vrot.slane %v991, %v997
        %v999 = vcombine.low %v919, %v920
        %v1001 = vunpack.c.l.s4 1983009808
        %v1002 = vunpack.c.0.s8 %v1001
        %v1003 = vlaneseq
        %v1004 = vshrl.u32 %v1003, 7
        %v1005 = vsub.s32 %v1002, %v1004
        %v1006 = vrot.slane %v999, %v1005
        %v1007 = vcombine.low %v911, %v918
        %v1009 = vunpack.c.l.s4 1983009808
        %v1010 = vunpack.c.0.s8 %v1009
        %v1011 = vlaneseq
        %v1012 = vshrl.u32 %v1011, 7
        %v1013 = vsub.s32 %v1010, %v1012
        %v1014 = vrot.slane %v1007, %v1013
        %v1015 = vcombine.low %v921, %v922
        %v1017 = vunpack.c.l.s4 1983009808
        %v1018 = vunpack.c.0.s8 %v1017
        %v1019 = vlaneseq
        %v1020 = vshrl.u32 %v1019, 7
        %v1021 = vsub.s32 %v1018, %v1020
        %v1022 = vrot.slane %v1015, %v1021
        %v1023 = vcombine.low %v998, %v1006
        %v1024 = vcombine.high %v998, %v1006
        %v1026 = vunpack.c.l.s4 1934713408
        %v1027 = vunpack.c.0.s8 %v1026
        %v1028 = vlaneseq
        %v1029 = vshrl.u32 %v1028, 7
        %v1030 = vsub.s32 %v1027, %v1029
        %v1031 = vrot.slane %v1023, %v1030
        %v1033 = vunpack.c.l.s4 1934713408
        %v1034 = vunpack.c.0.s8 %v1033
        %v1035 = vlaneseq
        %v1036 = vshrl.u32 %v1035, 7
        %v1037 = vsub.s32 %v1034, %v1036
        %v1038 = vrot.slane %v1024, %v1037
        %v1039 = vcombine.low %v1014, %v1022
        %v1040 = vcombine.high %v1014, %v1022
        %v1042 = vunpack.c.l.s4 1934713408
        %v1043 = vunpack.c.0.s8 %v1042
        %v1044 = vlaneseq
        %v1045 = vshrl.u32 %v1044, 7
        %v1046 = vsub.s32 %v1043, %v1045
        %v1047 = vrot.slane %v1039, %v1046
        %v1049 = vunpack.c.l.s4 1934713408
        %v1050 = vunpack.c.0.s8 %v1049
        %v1051 = vlaneseq
        %v1052 = vshrl.u32 %v1051, 7
        %v1053 = vsub.s32 %v1050, %v1052
        %v1054 = vrot.slane %v1040, %v1053
        %v1055 = vcombine.low %v1031, %v1047
        %v1056 = vcombine.high %v1031, %v1047
        %v1057 = vcombine.low %v1038, %v1054
        %v1058 = vcombine.high %v1038, %v1054
        %v1059 = vcombine.low %v963, %v970
        %v1061 = vunpack.c.l.s4 1983009808
        %v1062 = vunpack.c.0.s8 %v1061
        %v1063 = vlaneseq
        %v1064 = vshrl.u32 %v1063, 7
        %v1065 = vsub.s32 %v1062, %v1064
        %v1066 = vrot.slane %v1059, %v1065
        %v1067 = vcombine.low %v987, %v988
        %v1069 = vunpack.c.l.s4 1983009808
        %v1070 = vunpack.c.0.s8 %v1069
        %v1071 = vlaneseq
        %v1072 = vshrl.u32 %v1071, 7
        %v1073 = vsub.s32 %v1070, %v1072
        %v1074 = vrot.slane %v1067, %v1073
        %v1075 = vcombine.low %v979, %v986
        %v1077 = vunpack.c.l.s4 1983009808
        %v1078 = vunpack.c.0.s8 %v1077
        %v1079 = vlaneseq
        %v1080 = vshrl.u32 %v1079, 7
        %v1081 = vsub.s32 %v1078, %v1080
        %v1082 = vrot.slane %v1075, %v1081
        %v1083 = vcombine.low %v989, %v990
        %v1085 = vunpack.c.l.s4 1983009808
        %v1086 = vunpack.c.0.s8 %v1085
        %v1087 = vlaneseq
        %v1088 = vshrl.u32 %v1087, 7
        %v1089 = vsub.s32 %v1086, %v1088
        %v1090 = vrot.slane %v1083, %v1089
        %v1091 = vcombine.low %v1066, %v1074
        %v1092 = vcombine.high %v1066, %v1074
        %v1094 = vunpack.c.l.s4 1934713408
        %v1095 = vunpack.c.0.s8 %v1094
        %v1096 = vlaneseq
        %v1097 = vshrl.u32 %v1096, 7
        %v1098 = vsub.s32 %v1095, %v1097
        %v1099 = vrot.slane %v1091, %v1098
        %v1101 = vunpack.c.l.s4 1934713408
        %v1102 = vunpack.c.0.s8 %v1101
        %v1103 = vlaneseq
        %v1104 = vshrl.u32 %v1103, 7
        %v1105 = vsub.s32 %v1102, %v1104
        %v1106 = vrot.slane %v1092, %v1105
        %v1107 = vcombine.low %v1082, %v1090
        %v1108 = vcombine.high %v1082, %v1090
        %v1110 = vunpack.c.l.s4 1934713408
        %v1111 = vunpack.c.0.s8 %v1110
        %v1112 = vlaneseq
        %v1113 = vshrl.u32 %v1112, 7
        %v1114 = vsub.s32 %v1111, %v1113
        %v1115 = vrot.slane %v1107, %v1114
        %v1117 = vunpack.c.l.s4 1934713408
        %v1118 = vunpack.c.0.s8 %v1117
        %v1119 = vlaneseq
        %v1120 = vshrl.u32 %v1119, 7
        %v1121 = vsub.s32 %v1118, %v1120
        %v1122 = vrot.slane %v1108, %v1121
        %v1123 = vcombine.low %v1099, %v1115
        %v1124 = vcombine.high %v1099, %v1115
        %v1125 = vcombine.low %v1106, %v1122
        %v1126 = vcombine.high %v1106, %v1122
        %v1127 = vpack.c.bf16 %v1055, %v1055
        %v1128 = vpack.c.bf16 %v1056, %v1056
        %v1129 = vpack.c.bf16 %v1057, %v1057
        %v1130 = vpack.c.bf16 %v1058, %v1058
        %v1131 = vpack.c.bf16 %v1123, %v1123
        %v1132 = vpack.c.bf16 %v1124, %v1124
        %v1133 = vpack.c.bf16 %v1125, %v1125
        %v1134 = vpack.c.bf16 %v1126, %v1126
        %1137 = vrot.lane.b32.xlu0 %v827, 120
        %v1138 = vpop.permute.xlu0 %1137
        %1139 = vrot.lane.b32.xlu0 %v830, 120
        %v1140 = vpop.permute.xlu0 %1139
        %1141 = vrot.lane.b32.xlu0 %v827, 112
        %v1142 = vpop.permute.xlu0 %1141
        %1143 = vrot.lane.b32.xlu0 %v830, 112
        %v1144 = vpop.permute.xlu0 %1143
        %1145 = vrot.lane.b32.xlu0 %v827, 104
        %v1146 = vpop.permute.xlu0 %1145
        %1147 = vrot.lane.b32.xlu0 %v830, 104
        %v1148 = vpop.permute.xlu0 %1147
        %1149 = vrot.lane.b32.xlu0 %v827, 96
        %v1150 = vpop.permute.xlu0 %1149
        %1151 = vrot.lane.b32.xlu0 %v830, 96
        %v1152 = vpop.permute.xlu0 %1151
        %1153 = vrot.lane.b32.xlu0 %v1138, 96
        %v1154 = vpop.permute.xlu0 %1153
        %1155 = vrot.lane.b32.xlu0 %v1140, 96
        %v1156 = vpop.permute.xlu0 %1155
        %1157 = vrot.lane.b32.xlu0 %v1142, 96
        %v1158 = vpop.permute.xlu0 %1157
        %1159 = vrot.lane.b32.xlu0 %v1144, 96
        %v1160 = vpop.permute.xlu0 %1159
        %1161 = vrot.lane.b32.xlu0 %v1146, 96
        %v1162 = vpop.permute.xlu0 %1161
        %1163 = vrot.lane.b32.xlu0 %v1148, 96
        %v1164 = vpop.permute.xlu0 %1163
        %v1173 = vcombine.low %v1150, %v1158
        %v1174 = vcombine.high %v1150, %v1158
        %v1176 = vunpack.c.l.s4 1983009808
        %v1177 = vunpack.c.0.s8 %v1176
        %v1178 = vlaneseq
        %v1179 = vshrl.u32 %v1178, 7
        %v1180 = vsub.s32 %v1177, %v1179
        %v1181 = vrot.slane %v1173, %v1180
        %v1183 = vunpack.c.l.s4 1983009808
        %v1184 = vunpack.c.0.s8 %v1183
        %v1185 = vlaneseq
        %v1186 = vshrl.u32 %v1185, 7
        %v1187 = vsub.s32 %v1184, %v1186
        %v1188 = vrot.slane %v1174, %v1187
        %v1189 = vcombine.low %v1154, %v1162
        %v1190 = vcombine.high %v1154, %v1162
        %v1192 = vunpack.c.l.s4 1983009808
        %v1193 = vunpack.c.0.s8 %v1192
        %v1194 = vlaneseq
        %v1195 = vshrl.u32 %v1194, 7
        %v1196 = vsub.s32 %v1193, %v1195
        %v1197 = vrot.slane %v1189, %v1196
        %v1199 = vunpack.c.l.s4 1983009808
        %v1200 = vunpack.c.0.s8 %v1199
        %v1201 = vlaneseq
        %v1202 = vshrl.u32 %v1201, 7
        %v1203 = vsub.s32 %v1200, %v1202
        %v1204 = vrot.slane %v1190, %v1203
        %v1205 = vcombine.low %v1181, %v1197
        %v1206 = vcombine.high %v1181, %v1197
        %v1208 = vunpack.c.l.s4 1934713408
        %v1209 = vunpack.c.0.s8 %v1208
        %v1210 = vlaneseq
        %v1211 = vshrl.u32 %v1210, 7
        %v1212 = vsub.s32 %v1209, %v1211
        %v1213 = vrot.slane %v1205, %v1212
        %v1215 = vunpack.c.l.s4 1934713408
        %v1216 = vunpack.c.0.s8 %v1215
        %v1217 = vlaneseq
        %v1218 = vshrl.u32 %v1217, 7
        %v1219 = vsub.s32 %v1216, %v1218
        %v1220 = vrot.slane %v1206, %v1219
        %v1221 = vcombine.low %v1188, %v1204
        %v1222 = vcombine.high %v1188, %v1204
        %v1224 = vunpack.c.l.s4 1934713408
        %v1225 = vunpack.c.0.s8 %v1224
        %v1226 = vlaneseq
        %v1227 = vshrl.u32 %v1226, 7
        %v1228 = vsub.s32 %v1225, %v1227
        %v1229 = vrot.slane %v1221, %v1228
        %v1231 = vunpack.c.l.s4 1934713408
        %v1232 = vunpack.c.0.s8 %v1231
        %v1233 = vlaneseq
        %v1234 = vshrl.u32 %v1233, 7
        %v1235 = vsub.s32 %v1232, %v1234
        %v1236 = vrot.slane %v1222, %v1235
        %v1237 = vcombine.high %v1213, 0.0
        %v1238 = vcombine.high %v1220, 0.0
        %v1239 = vcombine.high %v1229, 0.0
        %v1240 = vcombine.high %v1236, 0.0
        %v1241 = vcombine.low %v1152, %v1160
        %v1242 = vcombine.high %v1152, %v1160
        %v1244 = vunpack.c.l.s4 1983009808
        %v1245 = vunpack.c.0.s8 %v1244
        %v1246 = vlaneseq
        %v1247 = vshrl.u32 %v1246, 7
        %v1248 = vsub.s32 %v1245, %v1247
        %v1249 = vrot.slane %v1241, %v1248
        %v1251 = vunpack.c.l.s4 1983009808
        %v1252 = vunpack.c.0.s8 %v1251
        %v1253 = vlaneseq
        %v1254 = vshrl.u32 %v1253, 7
        %v1255 = vsub.s32 %v1252, %v1254
        %v1256 = vrot.slane %v1242, %v1255
        %v1257 = vcombine.low %v1156, %v1164
        %v1258 = vcombine.high %v1156, %v1164
        %v1260 = vunpack.c.l.s4 1983009808
        %v1261 = vunpack.c.0.s8 %v1260
        %v1262 = vlaneseq
        %v1263 = vshrl.u32 %v1262, 7
        %v1264 = vsub.s32 %v1261, %v1263
        %v1265 = vrot.slane %v1257, %v1264
        %v1267 = vunpack.c.l.s4 1983009808
        %v1268 = vunpack.c.0.s8 %v1267
        %v1269 = vlaneseq
        %v1270 = vshrl.u32 %v1269, 7
        %v1271 = vsub.s32 %v1268, %v1270
        %v1272 = vrot.slane %v1258, %v1271
        %v1273 = vcombine.low %v1249, %v1265
        %v1274 = vcombine.high %v1249, %v1265
        %v1276 = vunpack.c.l.s4 1934713408
        %v1277 = vunpack.c.0.s8 %v1276
        %v1278 = vlaneseq
        %v1279 = vshrl.u32 %v1278, 7
        %v1280 = vsub.s32 %v1277, %v1279
        %v1281 = vrot.slane %v1273, %v1280
        %v1283 = vunpack.c.l.s4 1934713408
        %v1284 = vunpack.c.0.s8 %v1283
        %v1285 = vlaneseq
        %v1286 = vshrl.u32 %v1285, 7
        %v1287 = vsub.s32 %v1284, %v1286
        %v1288 = vrot.slane %v1274, %v1287
        %v1289 = vcombine.low %v1256, %v1272
        %v1290 = vcombine.high %v1256, %v1272
        %v1292 = vunpack.c.l.s4 1934713408
        %v1293 = vunpack.c.0.s8 %v1292
        %v1294 = vlaneseq
        %v1295 = vshrl.u32 %v1294, 7
        %v1296 = vsub.s32 %v1293, %v1295
        %v1297 = vrot.slane %v1289, %v1296
        %v1299 = vunpack.c.l.s4 1934713408
        %v1300 = vunpack.c.0.s8 %v1299
        %v1301 = vlaneseq
        %v1302 = vshrl.u32 %v1301, 7
        %v1303 = vsub.s32 %v1300, %v1302
        %v1304 = vrot.slane %v1290, %v1303
        %v1305 = vcombine.high %v1281, 0.0
        %v1306 = vcombine.high %v1288, 0.0
        %v1307 = vcombine.high %v1297, 0.0
        %v1308 = vcombine.high %v1304, 0.0
        %v1309 = vcombine.low %v1213, %v1220
        %v1311 = vunpack.c.l.s4 1983009808
        %v1312 = vunpack.c.0.s8 %v1311
        %v1313 = vlaneseq
        %v1314 = vshrl.u32 %v1313, 7
        %v1315 = vsub.s32 %v1312, %v1314
        %v1316 = vrot.slane %v1309, %v1315
        %v1317 = vcombine.low %v1237, %v1238
        %v1319 = vunpack.c.l.s4 1983009808
        %v1320 = vunpack.c.0.s8 %v1319
        %v1321 = vlaneseq
        %v1322 = vshrl.u32 %v1321, 7
        %v1323 = vsub.s32 %v1320, %v1322
        %v1324 = vrot.slane %v1317, %v1323
        %v1325 = vcombine.low %v1229, %v1236
        %v1327 = vunpack.c.l.s4 1983009808
        %v1328 = vunpack.c.0.s8 %v1327
        %v1329 = vlaneseq
        %v1330 = vshrl.u32 %v1329, 7
        %v1331 = vsub.s32 %v1328, %v1330
        %v1332 = vrot.slane %v1325, %v1331
        %v1333 = vcombine.low %v1239, %v1240
        %v1335 = vunpack.c.l.s4 1983009808
        %v1336 = vunpack.c.0.s8 %v1335
        %v1337 = vlaneseq
        %v1338 = vshrl.u32 %v1337, 7
        %v1339 = vsub.s32 %v1336, %v1338
        %v1340 = vrot.slane %v1333, %v1339
        %v1341 = vcombine.low %v1316, %v1324
        %v1342 = vcombine.high %v1316, %v1324
        %v1344 = vunpack.c.l.s4 1934713408
        %v1345 = vunpack.c.0.s8 %v1344
        %v1346 = vlaneseq
        %v1347 = vshrl.u32 %v1346, 7
        %v1348 = vsub.s32 %v1345, %v1347
        %v1349 = vrot.slane %v1341, %v1348
        %v1351 = vunpack.c.l.s4 1934713408
        %v1352 = vunpack.c.0.s8 %v1351
        %v1353 = vlaneseq
        %v1354 = vshrl.u32 %v1353, 7
        %v1355 = vsub.s32 %v1352, %v1354
        %v1356 = vrot.slane %v1342, %v1355
        %v1357 = vcombine.low %v1332, %v1340
        %v1358 = vcombine.high %v1332, %v1340
        %v1360 = vunpack.c.l.s4 1934713408
        %v1361 = vunpack.c.0.s8 %v1360
        %v1362 = vlaneseq
        %v1363 = vshrl.u32 %v1362, 7
        %v1364 = vsub.s32 %v1361, %v1363
        %v1365 = vrot.slane %v1357, %v1364
        %v1367 = vunpack.c.l.s4 1934713408
        %v1368 = vunpack.c.0.s8 %v1367
        %v1369 = vlaneseq
        %v1370 = vshrl.u32 %v1369, 7
        %v1371 = vsub.s32 %v1368, %v1370
        %v1372 = vrot.slane %v1358, %v1371
        %v1373 = vcombine.low %v1349, %v1365
        %v1374 = vcombine.high %v1349, %v1365
        %v1375 = vcombine.low %v1356, %v1372
        %v1376 = vcombine.high %v1356, %v1372
        %v1377 = vcombine.low %v1281, %v1288
        %v1379 = vunpack.c.l.s4 1983009808
        %v1380 = vunpack.c.0.s8 %v1379
        %v1381 = vlaneseq
        %v1382 = vshrl.u32 %v1381, 7
        %v1383 = vsub.s32 %v1380, %v1382
        %v1384 = vrot.slane %v1377, %v1383
        %v1385 = vcombine.low %v1305, %v1306
        %v1387 = vunpack.c.l.s4 1983009808
        %v1388 = vunpack.c.0.s8 %v1387
        %v1389 = vlaneseq
        %v1390 = vshrl.u32 %v1389, 7
        %v1391 = vsub.s32 %v1388, %v1390
        %v1392 = vrot.slane %v1385, %v1391
        %v1393 = vcombine.low %v1297, %v1304
        %v1395 = vunpack.c.l.s4 1983009808
        %v1396 = vunpack.c.0.s8 %v1395
        %v1397 = vlaneseq
        %v1398 = vshrl.u32 %v1397, 7
        %v1399 = vsub.s32 %v1396, %v1398
        %v1400 = vrot.slane %v1393, %v1399
        %v1401 = vcombine.low %v1307, %v1308
        %v1403 = vunpack.c.l.s4 1983009808
        %v1404 = vunpack.c.0.s8 %v1403
        %v1405 = vlaneseq
        %v1406 = vshrl.u32 %v1405, 7
        %v1407 = vsub.s32 %v1404, %v1406
        %v1408 = vrot.slane %v1401, %v1407
        %v1409 = vcombine.low %v1384, %v1392
        %v1410 = vcombine.high %v1384, %v1392
        %v1412 = vunpack.c.l.s4 1934713408
        %v1413 = vunpack.c.0.s8 %v1412
        %v1414 = vlaneseq
        %v1415 = vshrl.u32 %v1414, 7
        %v1416 = vsub.s32 %v1413, %v1415
        %v1417 = vrot.slane %v1409, %v1416
        %v1419 = vunpack.c.l.s4 1934713408
        %v1420 = vunpack.c.0.s8 %v1419
        %v1421 = vlaneseq
        %v1422 = vshrl.u32 %v1421, 7
        %v1423 = vsub.s32 %v1420, %v1422
        %v1424 = vrot.slane %v1410, %v1423
        %v1425 = vcombine.low %v1400, %v1408
        %v1426 = vcombine.high %v1400, %v1408
        %v1428 = vunpack.c.l.s4 1934713408
        %v1429 = vunpack.c.0.s8 %v1428
        %v1430 = vlaneseq
        %v1431 = vshrl.u32 %v1430, 7
        %v1432 = vsub.s32 %v1429, %v1431
        %v1433 = vrot.slane %v1425, %v1432
        %v1435 = vunpack.c.l.s4 1934713408
        %v1436 = vunpack.c.0.s8 %v1435
        %v1437 = vlaneseq
        %v1438 = vshrl.u32 %v1437, 7
        %v1439 = vsub.s32 %v1436, %v1438
        %v1440 = vrot.slane %v1426, %v1439
        %v1441 = vcombine.low %v1417, %v1433
        %v1442 = vcombine.high %v1417, %v1433
        %v1443 = vcombine.low %v1424, %v1440
        %v1444 = vcombine.high %v1424, %v1440
        %v1445 = vpack.c.bf16 %v1373, %v1373
        %v1446 = vpack.c.bf16 %v1374, %v1374
        %v1447 = vpack.c.bf16 %v1375, %v1375
        %v1448 = vpack.c.bf16 %v1376, %v1376
        %v1449 = vpack.c.bf16 %v1441, %v1441
        %v1450 = vpack.c.bf16 %v1442, %v1442
        %v1451 = vpack.c.bf16 %v1443, %v1443
        %v1452 = vpack.c.bf16 %v1444, %v1444
        %1453 = vrot.lane.b32.xlu0 %v827, 64
        %v1454 = vpop.permute.xlu0 %1453
        %1455 = vrot.lane.b32.xlu0 %v830, 64
        %v1456 = vpop.permute.xlu0 %1455
        %1457 = vrot.lane.b32.xlu0 %v1138, 64
        %v1458 = vpop.permute.xlu0 %1457
        %1459 = vrot.lane.b32.xlu0 %v1140, 64
        %v1460 = vpop.permute.xlu0 %1459
        %1461 = vrot.lane.b32.xlu0 %v1142, 64
        %v1462 = vpop.permute.xlu0 %1461
        %1463 = vrot.lane.b32.xlu0 %v1144, 64
        %v1464 = vpop.permute.xlu0 %1463
        %1465 = vrot.lane.b32.xlu0 %v1146, 64
        %v1466 = vpop.permute.xlu0 %1465
        %1467 = vrot.lane.b32.xlu0 %v1148, 64
        %v1468 = vpop.permute.xlu0 %1467
        %v1477 = vcombine.low %v1454, %v1462
        %v1478 = vcombine.high %v1454, %v1462
        %v1480 = vunpack.c.l.s4 1983009808
        %v1481 = vunpack.c.0.s8 %v1480
        %v1482 = vlaneseq
        %v1483 = vshrl.u32 %v1482, 7
        %v1484 = vsub.s32 %v1481, %v1483
        %v1485 = vrot.slane %v1477, %v1484
        %v1487 = vunpack.c.l.s4 1983009808
        %v1488 = vunpack.c.0.s8 %v1487
        %v1489 = vlaneseq
        %v1490 = vshrl.u32 %v1489, 7
        %v1491 = vsub.s32 %v1488, %v1490
        %v1492 = vrot.slane %v1478, %v1491
        %v1493 = vcombine.low %v1458, %v1466
        %v1494 = vcombine.high %v1458, %v1466
        %v1496 = vunpack.c.l.s4 1983009808
        %v1497 = vunpack.c.0.s8 %v1496
        %v1498 = vlaneseq
        %v1499 = vshrl.u32 %v1498, 7
        %v1500 = vsub.s32 %v1497, %v1499
        %v1501 = vrot.slane %v1493, %v1500
        %v1503 = vunpack.c.l.s4 1983009808
        %v1504 = vunpack.c.0.s8 %v1503
        %v1505 = vlaneseq
        %v1506 = vshrl.u32 %v1505, 7
        %v1507 = vsub.s32 %v1504, %v1506
        %v1508 = vrot.slane %v1494, %v1507
        %v1509 = vcombine.low %v1485, %v1501
        %v1510 = vcombine.high %v1485, %v1501
        %v1512 = vunpack.c.l.s4 1934713408
        %v1513 = vunpack.c.0.s8 %v1512
        %v1514 = vlaneseq
        %v1515 = vshrl.u32 %v1514, 7
        %v1516 = vsub.s32 %v1513, %v1515
        %v1517 = vrot.slane %v1509, %v1516
        %v1519 = vunpack.c.l.s4 1934713408
        %v1520 = vunpack.c.0.s8 %v1519
        %v1521 = vlaneseq
        %v1522 = vshrl.u32 %v1521, 7
        %v1523 = vsub.s32 %v1520, %v1522
        %v1524 = vrot.slane %v1510, %v1523
        %v1525 = vcombine.low %v1492, %v1508
        %v1526 = vcombine.high %v1492, %v1508
        %v1528 = vunpack.c.l.s4 1934713408
        %v1529 = vunpack.c.0.s8 %v1528
        %v1530 = vlaneseq
        %v1531 = vshrl.u32 %v1530, 7
        %v1532 = vsub.s32 %v1529, %v1531
        %v1533 = vrot.slane %v1525, %v1532
        %v1535 = vunpack.c.l.s4 1934713408
        %v1536 = vunpack.c.0.s8 %v1535
        %v1537 = vlaneseq
        %v1538 = vshrl.u32 %v1537, 7
        %v1539 = vsub.s32 %v1536, %v1538
        %v1540 = vrot.slane %v1526, %v1539
        %v1541 = vcombine.high %v1517, 0.0
        %v1542 = vcombine.high %v1524, 0.0
        %v1543 = vcombine.high %v1533, 0.0
        %v1544 = vcombine.high %v1540, 0.0
        %v1545 = vcombine.low %v1456, %v1464
        %v1546 = vcombine.high %v1456, %v1464
        %v1548 = vunpack.c.l.s4 1983009808
        %v1549 = vunpack.c.0.s8 %v1548
        %v1550 = vlaneseq
        %v1551 = vshrl.u32 %v1550, 7
        %v1552 = vsub.s32 %v1549, %v1551
        %v1553 = vrot.slane %v1545, %v1552
        %v1555 = vunpack.c.l.s4 1983009808
        %v1556 = vunpack.c.0.s8 %v1555
        %v1557 = vlaneseq
        %v1558 = vshrl.u32 %v1557, 7
        %v1559 = vsub.s32 %v1556, %v1558
        %v1560 = vrot.slane %v1546, %v1559
        %v1561 = vcombine.low %v1460, %v1468
        %v1562 = vcombine.high %v1460, %v1468
        %v1564 = vunpack.c.l.s4 1983009808
        %v1565 = vunpack.c.0.s8 %v1564
        %v1566 = vlaneseq
        %v1567 = vshrl.u32 %v1566, 7
        %v1568 = vsub.s32 %v1565, %v1567
        %v1569 = vrot.slane %v1561, %v1568
        %v1571 = vunpack.c.l.s4 1983009808
        %v1572 = vunpack.c.0.s8 %v1571
        %v1573 = vlaneseq
        %v1574 = vshrl.u32 %v1573, 7
        %v1575 = vsub.s32 %v1572, %v1574
        %v1576 = vrot.slane %v1562, %v1575
        %v1577 = vcombine.low %v1553, %v1569
        %v1578 = vcombine.high %v1553, %v1569
        %v1580 = vunpack.c.l.s4 1934713408
        %v1581 = vunpack.c.0.s8 %v1580
        %v1582 = vlaneseq
        %v1583 = vshrl.u32 %v1582, 7
        %v1584 = vsub.s32 %v1581, %v1583
        %v1585 = vrot.slane %v1577, %v1584
        %v1587 = vunpack.c.l.s4 1934713408
        %v1588 = vunpack.c.0.s8 %v1587
        %v1589 = vlaneseq
        %v1590 = vshrl.u32 %v1589, 7
        %v1591 = vsub.s32 %v1588, %v1590
        %v1592 = vrot.slane %v1578, %v1591
        %v1593 = vcombine.low %v1560, %v1576
        %v1594 = vcombine.high %v1560, %v1576
        %v1596 = vunpack.c.l.s4 1934713408
        %v1597 = vunpack.c.0.s8 %v1596
        %v1598 = vlaneseq
        %v1599 = vshrl.u32 %v1598, 7
        %v1600 = vsub.s32 %v1597, %v1599
        %v1601 = vrot.slane %v1593, %v1600
        %v1603 = vunpack.c.l.s4 1934713408
        %v1604 = vunpack.c.0.s8 %v1603
        %v1605 = vlaneseq
        %v1606 = vshrl.u32 %v1605, 7
        %v1607 = vsub.s32 %v1604, %v1606
        %v1608 = vrot.slane %v1594, %v1607
        %v1609 = vcombine.high %v1585, 0.0
        %v1610 = vcombine.high %v1592, 0.0
        %v1611 = vcombine.high %v1601, 0.0
        %v1612 = vcombine.high %v1608, 0.0
        %v1613 = vcombine.low %v1517, %v1524
        %v1615 = vunpack.c.l.s4 1983009808
        %v1616 = vunpack.c.0.s8 %v1615
        %v1617 = vlaneseq
        %v1618 = vshrl.u32 %v1617, 7
        %v1619 = vsub.s32 %v1616, %v1618
        %v1620 = vrot.slane %v1613, %v1619
        %v1621 = vcombine.low %v1541, %v1542
        %v1623 = vunpack.c.l.s4 1983009808
        %v1624 = vunpack.c.0.s8 %v1623
        %v1625 = vlaneseq
        %v1626 = vshrl.u32 %v1625, 7
        %v1627 = vsub.s32 %v1624, %v1626
        %v1628 = vrot.slane %v1621, %v1627
        %v1629 = vcombine.low %v1533, %v1540
        %v1631 = vunpack.c.l.s4 1983009808
        %v1632 = vunpack.c.0.s8 %v1631
        %v1633 = vlaneseq
        %v1634 = vshrl.u32 %v1633, 7
        %v1635 = vsub.s32 %v1632, %v1634
        %v1636 = vrot.slane %v1629, %v1635
        %v1637 = vcombine.low %v1543, %v1544
        %v1639 = vunpack.c.l.s4 1983009808
        %v1640 = vunpack.c.0.s8 %v1639
        %v1641 = vlaneseq
        %v1642 = vshrl.u32 %v1641, 7
        %v1643 = vsub.s32 %v1640, %v1642
        %v1644 = vrot.slane %v1637, %v1643
        %v1645 = vcombine.low %v1620, %v1628
        %v1646 = vcombine.high %v1620, %v1628
        %v1648 = vunpack.c.l.s4 1934713408
        %v1649 = vunpack.c.0.s8 %v1648
        %v1650 = vlaneseq
        %v1651 = vshrl.u32 %v1650, 7
        %v1652 = vsub.s32 %v1649, %v1651
        %v1653 = vrot.slane %v1645, %v1652
        %v1655 = vunpack.c.l.s4 1934713408
        %v1656 = vunpack.c.0.s8 %v1655
        %v1657 = vlaneseq
        %v1658 = vshrl.u32 %v1657, 7
        %v1659 = vsub.s32 %v1656, %v1658
        %v1660 = vrot.slane %v1646, %v1659
        %v1661 = vcombine.low %v1636, %v1644
        %v1662 = vcombine.high %v1636, %v1644
        %v1664 = vunpack.c.l.s4 1934713408
        %v1665 = vunpack.c.0.s8 %v1664
        %v1666 = vlaneseq
        %v1667 = vshrl.u32 %v1666, 7
        %v1668 = vsub.s32 %v1665, %v1667
        %v1669 = vrot.slane %v1661, %v1668
        %v1671 = vunpack.c.l.s4 1934713408
        %v1672 = vunpack.c.0.s8 %v1671
        %v1673 = vlaneseq
        %v1674 = vshrl.u32 %v1673, 7
        %v1675 = vsub.s32 %v1672, %v1674
        %v1676 = vrot.slane %v1662, %v1675
        %v1677 = vcombine.low %v1653, %v1669
        %v1678 = vcombine.high %v1653, %v1669
        %v1679 = vcombine.low %v1660, %v1676
        %v1680 = vcombine.high %v1660, %v1676
        %v1681 = vcombine.low %v1585, %v1592
        %v1683 = vunpack.c.l.s4 1983009808
        %v1684 = vunpack.c.0.s8 %v1683
        %v1685 = vlaneseq
        %v1686 = vshrl.u32 %v1685, 7
        %v1687 = vsub.s32 %v1684, %v1686
        %v1688 = vrot.slane %v1681, %v1687
        %v1689 = vcombine.low %v1609, %v1610
        %v1691 = vunpack.c.l.s4 1983009808
        %v1692 = vunpack.c.0.s8 %v1691
        %v1693 = vlaneseq
        %v1694 = vshrl.u32 %v1693, 7
        %v1695 = vsub.s32 %v1692, %v1694
        %v1696 = vrot.slane %v1689, %v1695
        %v1697 = vcombine.low %v1601, %v1608
        %v1699 = vunpack.c.l.s4 1983009808
        %v1700 = vunpack.c.0.s8 %v1699
        %v1701 = vlaneseq
        %v1702 = vshrl.u32 %v1701, 7
        %v1703 = vsub.s32 %v1700, %v1702
        %v1704 = vrot.slane %v1697, %v1703
        %v1705 = vcombine.low %v1611, %v1612
        %v1707 = vunpack.c.l.s4 1983009808
        %v1708 = vunpack.c.0.s8 %v1707
        %v1709 = vlaneseq
        %v1710 = vshrl.u32 %v1709, 7
        %v1711 = vsub.s32 %v1708, %v1710
        %v1712 = vrot.slane %v1705, %v1711
        %v1713 = vcombine.low %v1688, %v1696
        %v1714 = vcombine.high %v1688, %v1696
        %v1716 = vunpack.c.l.s4 1934713408
        %v1717 = vunpack.c.0.s8 %v1716
        %v1718 = vlaneseq
        %v1719 = vshrl.u32 %v1718, 7
        %v1720 = vsub.s32 %v1717, %v1719
        %v1721 = vrot.slane %v1713, %v1720
        %v1723 = vunpack.c.l.s4 1934713408
        %v1724 = vunpack.c.0.s8 %v1723
        %v1725 = vlaneseq
        %v1726 = vshrl.u32 %v1725, 7
        %v1727 = vsub.s32 %v1724, %v1726
        %v1728 = vrot.slane %v1714, %v1727
        %v1729 = vcombine.low %v1704, %v1712
        %v1730 = vcombine.high %v1704, %v1712
        %v1732 = vunpack.c.l.s4 1934713408
        %v1733 = vunpack.c.0.s8 %v1732
        %v1734 = vlaneseq
        %v1735 = vshrl.u32 %v1734, 7
        %v1736 = vsub.s32 %v1733, %v1735
        %v1737 = vrot.slane %v1729, %v1736
        %v1739 = vunpack.c.l.s4 1934713408
        %v1740 = vunpack.c.0.s8 %v1739
        %v1741 = vlaneseq
        %v1742 = vshrl.u32 %v1741, 7
        %v1743 = vsub.s32 %v1740, %v1742
        %v1744 = vrot.slane %v1730, %v1743
        %v1745 = vcombine.low %v1721, %v1737
        %v1746 = vcombine.high %v1721, %v1737
        %v1747 = vcombine.low %v1728, %v1744
        %v1748 = vcombine.high %v1728, %v1744
        %v1749 = vpack.c.bf16 %v1677, %v1677
        %v1750 = vpack.c.bf16 %v1678, %v1678
        %v1751 = vpack.c.bf16 %v1679, %v1679
        %v1752 = vpack.c.bf16 %v1680, %v1680
        %v1753 = vpack.c.bf16 %v1745, %v1745
        %v1754 = vpack.c.bf16 %v1746, %v1746
        %v1755 = vpack.c.bf16 %v1747, %v1747
        %v1756 = vpack.c.bf16 %v1748, %v1748
        %vm1757 = vcmask 64512
        %v1759 = vsel %vm1757, %v1127, 0
        %v1762 = vsel %vm1757, %v1445, 0
        %1764 = vmatprep.subr.bf16.mxu0 0
        %1765 = vmatpush1.bf16.xpose.msra.mxu0 %v1762
        %1766 = vmatprep.subr.bf16.mxu0 0
        %1767 = vmatpush1.bf16.xpose.msra.mxu0 0
        %1768 = vmatprep.subr.bf16.mxu0 0
        %1769 = vmatpush1.bf16.xpose.msra.mxu0 0
        %1770 = vmatprep.subr.bf16.mxu0 0
        %1771 = vmatpush1.bf16.xpose.msra.mxu0 0
        %1772 = vmatprep.subr.bf16.mxu0 0
        %1773 = vmatpush1.bf16.xpose.msra.mxu0 0
        %1774 = vmatprep.subr.bf16.mxu0 0
        %1775 = vmatpush1.bf16.xpose.msra.mxu0 0
        %1776 = vmatprep.subr.bf16.mxu0 0
        %1777 = vmatpush1.bf16.xpose.msra.mxu0 0
        %1778 = vmatprep.subr.bf16.mxu0 0
        %1779 = vmatpush1.bf16.xpose.msra.mxu0 0
        %1780 = vmatprep.subr.bf16.mxu0 0
        %1781 = vmatpush1.bf16.xpose.msra.mxu0 0
        %1782 = vmatprep.subr.bf16.mxu0 0
        %1783 = vmatpush1.bf16.xpose.msra.mxu0 0
        %1784 = vmatprep.subr.bf16.mxu0 0
        %1785 = vmatpush1.bf16.xpose.msra.mxu0 0
        %1786 = vmatprep.subr.bf16.mxu0 0
        %1787 = vmatpush1.bf16.xpose.msra.mxu0 0
        %1788 = vmatprep.subr.bf16.mxu0 0
        %1789 = vmatpush1.bf16.xpose.msra.mxu0 0
        %1790 = vmatprep.subr.bf16.mxu0 0
        %1791 = vmatpush1.bf16.xpose.msra.mxu0 0
        %1792 = vmatprep.subr.bf16.mxu0 0
        %1793 = vmatpush1.bf16.xpose.msra.mxu0 0
        %1794 = vmatprep.subr.bf16.mxu0 0
        %1795 = vmatpush1.bf16.xpose.msra.mxu0 0
        %1796 = vmatprep.mubr.bf16.mxu0 0
        %1797 = vmatmul.mubr.bf16.gmra.mrb[0].mxu0 %v1759
        %v1798 = vpop.f32.mrb[0].mxu0
        %v1799 = vadd.f32 0.0, %v1798
        %v1800 = vpop.f32.mrb[0].mxu0
        %v1801 = vpop.f32.mrb[0].mxu0
        %v1802 = vpop.f32.mrb[0].mxu0
        %1803 = vdwg.mxu0
        %v1805 = vsel %vm1757, %v1128, 0
        %v1808 = vsel %vm1757, %v1446, 0
        %1810 = vmatprep.subr.bf16.mxu0 0
        %1811 = vmatpush1.bf16.xpose.msra.mxu0 %v1808
        %1812 = vmatprep.subr.bf16.mxu0 0
        %1813 = vmatpush1.bf16.xpose.msra.mxu0 0
        %1814 = vmatprep.subr.bf16.mxu0 0
        %1815 = vmatpush1.bf16.xpose.msra.mxu0 0
        %1816 = vmatprep.subr.bf16.mxu0 0
        %1817 = vmatpush1.bf16.xpose.msra.mxu0 0
        %1818 = vmatprep.subr.bf16.mxu0 0
        %1819 = vmatpush1.bf16.xpose.msra.mxu0 0
        %1820 = vmatprep.subr.bf16.mxu0 0
        %1821 = vmatpush1.bf16.xpose.msra.mxu0 0
        %1822 = vmatprep.subr.bf16.mxu0 0
        %1823 = vmatpush1.bf16.xpose.msra.mxu0 0
        %1824 = vmatprep.subr.bf16.mxu0 0
        %1825 = vmatpush1.bf16.xpose.msra.mxu0 0
        %1826 = vmatprep.subr.bf16.mxu0 0
        %1827 = vmatpush1.bf16.xpose.msra.mxu0 0
        %1828 = vmatprep.subr.bf16.mxu0 0
        %1829 = vmatpush1.bf16.xpose.msra.mxu0 0
        %1830 = vmatprep.subr.bf16.mxu0 0
        %1831 = vmatpush1.bf16.xpose.msra.mxu0 0
        %1832 = vmatprep.subr.bf16.mxu0 0
        %1833 = vmatpush1.bf16.xpose.msra.mxu0 0
        %1834 = vmatprep.subr.bf16.mxu0 0
        %1835 = vmatpush1.bf16.xpose.msra.mxu0 0
        %1836 = vmatprep.subr.bf16.mxu0 0
        %1837 = vmatpush1.bf16.xpose.msra.mxu0 0
        %1838 = vmatprep.subr.bf16.mxu0 0
        %1839 = vmatpush1.bf16.xpose.msra.mxu0 0
        %1840 = vmatprep.subr.bf16.mxu0 0
        %1841 = vmatpush1.bf16.xpose.msra.mxu0 0
        %1842 = vmatprep.mubr.bf16.mxu0 0
        %1843 = vmatmul.mubr.bf16.gmra.mrb[0].mxu0 %v1805
        %v1844 = vpop.f32.mrb[0].mxu0
        %v1845 = vadd.f32 0.0, %v1844
        %v1846 = vpop.f32.mrb[0].mxu0
        %v1847 = vpop.f32.mrb[0].mxu0
        %v1848 = vpop.f32.mrb[0].mxu0
        %1849 = vdwg.mxu0
        %v1851 = vsel %vm1757, %v1129, 0
        %v1854 = vsel %vm1757, %v1447, 0
        %1856 = vmatprep.subr.bf16.mxu0 0
        %1857 = vmatpush1.bf16.xpose.msra.mxu0 %v1854
        %1858 = vmatprep.subr.bf16.mxu0 0
        %1859 = vmatpush1.bf16.xpose.msra.mxu0 0
        %1860 = vmatprep.subr.bf16.mxu0 0
        %1861 = vmatpush1.bf16.xpose.msra.mxu0 0
        %1862 = vmatprep.subr.bf16.mxu0 0
        %1863 = vmatpush1.bf16.xpose.msra.mxu0 0
        %1864 = vmatprep.subr.bf16.mxu0 0
        %1865 = vmatpush1.bf16.xpose.msra.mxu0 0
        %1866 = vmatprep.subr.bf16.mxu0 0
        %1867 = vmatpush1.bf16.xpose.msra.mxu0 0
        %1868 = vmatprep.subr.bf16.mxu0 0
        %1869 = vmatpush1.bf16.xpose.msra.mxu0 0
        %1870 = vmatprep.subr.bf16.mxu0 0
        %1871 = vmatpush1.bf16.xpose.msra.mxu0 0
        %1872 = vmatprep.subr.bf16.mxu0 0
        %1873 = vmatpush1.bf16.xpose.msra.mxu0 0
        %1874 = vmatprep.subr.bf16.mxu0 0
        %1875 = vmatpush1.bf16.xpose.msra.mxu0 0
        %1876 = vmatprep.subr.bf16.mxu0 0
        %1877 = vmatpush1.bf16.xpose.msra.mxu0 0
        %1878 = vmatprep.subr.bf16.mxu0 0
        %1879 = vmatpush1.bf16.xpose.msra.mxu0 0
        %1880 = vmatprep.subr.bf16.mxu0 0
        %1881 = vmatpush1.bf16.xpose.msra.mxu0 0
        %1882 = vmatprep.subr.bf16.mxu0 0
        %1883 = vmatpush1.bf16.xpose.msra.mxu0 0
        %1884 = vmatprep.subr.bf16.mxu0 0
        %1885 = vmatpush1.bf16.xpose.msra.mxu0 0
        %1886 = vmatprep.subr.bf16.mxu0 0
        %1887 = vmatpush1.bf16.xpose.msra.mxu0 0
        %1888 = vmatprep.mubr.bf16.mxu0 0
        %1889 = vmatmul.mubr.bf16.gmra.mrb[0].mxu0 %v1851
        %v1890 = vpop.f32.mrb[0].mxu0
        %v1891 = vadd.f32 0.0, %v1890
        %v1892 = vpop.f32.mrb[0].mxu0
        %v1893 = vpop.f32.mrb[0].mxu0
        %v1894 = vpop.f32.mrb[0].mxu0
        %1895 = vdwg.mxu0
        %v1897 = vsel %vm1757, %v1130, 0
        %v1900 = vsel %vm1757, %v1448, 0
        %1902 = vmatprep.subr.bf16.mxu0 0
        %1903 = vmatpush1.bf16.xpose.msra.mxu0 %v1900
        %1904 = vmatprep.subr.bf16.mxu0 0
        %1905 = vmatpush1.bf16.xpose.msra.mxu0 0
        %1906 = vmatprep.subr.bf16.mxu0 0
        %1907 = vmatpush1.bf16.xpose.msra.mxu0 0
        %1908 = vmatprep.subr.bf16.mxu0 0
        %1909 = vmatpush1.bf16.xpose.msra.mxu0 0
        %1910 = vmatprep.subr.bf16.mxu0 0
        %1911 = vmatpush1.bf16.xpose.msra.mxu0 0
        %1912 = vmatprep.subr.bf16.mxu0 0
        %1913 = vmatpush1.bf16.xpose.msra.mxu0 0
        %1914 = vmatprep.subr.bf16.mxu0 0
        %1915 = vmatpush1.bf16.xpose.msra.mxu0 0
        %1916 = vmatprep.subr.bf16.mxu0 0
        %1917 = vmatpush1.bf16.xpose.msra.mxu0 0
        %1918 = vmatprep.subr.bf16.mxu0 0
        %1919 = vmatpush1.bf16.xpose.msra.mxu0 0
        %1920 = vmatprep.subr.bf16.mxu0 0
        %1921 = vmatpush1.bf16.xpose.msra.mxu0 0
        %1922 = vmatprep.subr.bf16.mxu0 0
        %1923 = vmatpush1.bf16.xpose.msra.mxu0 0
        %1924 = vmatprep.subr.bf16.mxu0 0
        %1925 = vmatpush1.bf16.xpose.msra.mxu0 0
        %1926 = vmatprep.subr.bf16.mxu0 0
        %1927 = vmatpush1.bf16.xpose.msra.mxu0 0
        %1928 = vmatprep.subr.bf16.mxu0 0
        %1929 = vmatpush1.bf16.xpose.msra.mxu0 0
        %1930 = vmatprep.subr.bf16.mxu0 0
        %1931 = vmatpush1.bf16.xpose.msra.mxu0 0
        %1932 = vmatprep.subr.bf16.mxu0 0
        %1933 = vmatpush1.bf16.xpose.msra.mxu0 0
        %1934 = vmatprep.mubr.bf16.mxu0 0
        %1935 = vmatmul.mubr.bf16.gmra.mrb[0].mxu0 %v1897
        %v1936 = vpop.f32.mrb[0].mxu0
        %v1937 = vadd.f32 0.0, %v1936
        %v1938 = vpop.f32.mrb[0].mxu0
        %v1939 = vpop.f32.mrb[0].mxu0
        %v1940 = vpop.f32.mrb[0].mxu0
        %1941 = vdwg.mxu0
        %v1943 = vsel %vm1757, %v1131, 0
        %v1946 = vsel %vm1757, %v1449, 0
        %1948 = vmatprep.subr.bf16.mxu0 0
        %1949 = vmatpush1.bf16.xpose.msra.mxu0 %v1946
        %1950 = vmatprep.subr.bf16.mxu0 0
        %1951 = vmatpush1.bf16.xpose.msra.mxu0 0
        %1952 = vmatprep.subr.bf16.mxu0 0
        %1953 = vmatpush1.bf16.xpose.msra.mxu0 0
        %1954 = vmatprep.subr.bf16.mxu0 0
        %1955 = vmatpush1.bf16.xpose.msra.mxu0 0
        %1956 = vmatprep.subr.bf16.mxu0 0
        %1957 = vmatpush1.bf16.xpose.msra.mxu0 0
        %1958 = vmatprep.subr.bf16.mxu0 0
        %1959 = vmatpush1.bf16.xpose.msra.mxu0 0
        %1960 = vmatprep.subr.bf16.mxu0 0
        %1961 = vmatpush1.bf16.xpose.msra.mxu0 0
        %1962 = vmatprep.subr.bf16.mxu0 0
        %1963 = vmatpush1.bf16.xpose.msra.mxu0 0
        %1964 = vmatprep.subr.bf16.mxu0 0
        %1965 = vmatpush1.bf16.xpose.msra.mxu0 0
        %1966 = vmatprep.subr.bf16.mxu0 0
        %1967 = vmatpush1.bf16.xpose.msra.mxu0 0
        %1968 = vmatprep.subr.bf16.mxu0 0
        %1969 = vmatpush1.bf16.xpose.msra.mxu0 0
        %1970 = vmatprep.subr.bf16.mxu0 0
        %1971 = vmatpush1.bf16.xpose.msra.mxu0 0
        %1972 = vmatprep.subr.bf16.mxu0 0
        %1973 = vmatpush1.bf16.xpose.msra.mxu0 0
        %1974 = vmatprep.subr.bf16.mxu0 0
        %1975 = vmatpush1.bf16.xpose.msra.mxu0 0
        %1976 = vmatprep.subr.bf16.mxu0 0
        %1977 = vmatpush1.bf16.xpose.msra.mxu0 0
        %1978 = vmatprep.subr.bf16.mxu0 0
        %1979 = vmatpush1.bf16.xpose.msra.mxu0 0
        %1980 = vmatprep.mubr.bf16.mxu0 0
        %1981 = vmatmul.mubr.bf16.gmra.mrb[0].mxu0 %v1943
        %v1982 = vpop.f32.mrb[0].mxu0
        %v1983 = vadd.f32 0.0, %v1982
        %v1984 = vpop.f32.mrb[0].mxu0
        %v1985 = vpop.f32.mrb[0].mxu0
        %v1986 = vpop.f32.mrb[0].mxu0
        %1987 = vdwg.mxu0
        %v1989 = vsel %vm1757, %v1132, 0
        %v1992 = vsel %vm1757, %v1450, 0
        %1994 = vmatprep.subr.bf16.mxu0 0
        %1995 = vmatpush1.bf16.xpose.msra.mxu0 %v1992
        %1996 = vmatprep.subr.bf16.mxu0 0
        %1997 = vmatpush1.bf16.xpose.msra.mxu0 0
        %1998 = vmatprep.subr.bf16.mxu0 0
        %1999 = vmatpush1.bf16.xpose.msra.mxu0 0
        %2000 = vmatprep.subr.bf16.mxu0 0
        %2001 = vmatpush1.bf16.xpose.msra.mxu0 0
        %2002 = vmatprep.subr.bf16.mxu0 0
        %2003 = vmatpush1.bf16.xpose.msra.mxu0 0
        %2004 = vmatprep.subr.bf16.mxu0 0
        %2005 = vmatpush1.bf16.xpose.msra.mxu0 0
        %2006 = vmatprep.subr.bf16.mxu0 0
        %2007 = vmatpush1.bf16.xpose.msra.mxu0 0
        %2008 = vmatprep.subr.bf16.mxu0 0
        %2009 = vmatpush1.bf16.xpose.msra.mxu0 0
        %2010 = vmatprep.subr.bf16.mxu0 0
        %2011 = vmatpush1.bf16.xpose.msra.mxu0 0
        %2012 = vmatprep.subr.bf16.mxu0 0
        %2013 = vmatpush1.bf16.xpose.msra.mxu0 0
        %2014 = vmatprep.subr.bf16.mxu0 0
        %2015 = vmatpush1.bf16.xpose.msra.mxu0 0
        %2016 = vmatprep.subr.bf16.mxu0 0
        %2017 = vmatpush1.bf16.xpose.msra.mxu0 0
        %2018 = vmatprep.subr.bf16.mxu0 0
        %2019 = vmatpush1.bf16.xpose.msra.mxu0 0
        %2020 = vmatprep.subr.bf16.mxu0 0
        %2021 = vmatpush1.bf16.xpose.msra.mxu0 0
        %2022 = vmatprep.subr.bf16.mxu0 0
        %2023 = vmatpush1.bf16.xpose.msra.mxu0 0
        %2024 = vmatprep.subr.bf16.mxu0 0
        %2025 = vmatpush1.bf16.xpose.msra.mxu0 0
        %2026 = vmatprep.mubr.bf16.mxu0 0
        %2027 = vmatmul.mubr.bf16.gmra.mrb[0].mxu0 %v1989
        %v2028 = vpop.f32.mrb[0].mxu0
        %v2029 = vadd.f32 0.0, %v2028
        %v2030 = vpop.f32.mrb[0].mxu0
        %v2031 = vpop.f32.mrb[0].mxu0
        %v2032 = vpop.f32.mrb[0].mxu0
        %2033 = vdwg.mxu0
        %v2035 = vsel %vm1757, %v1133, 0
        %v2038 = vsel %vm1757, %v1451, 0
        %2040 = vmatprep.subr.bf16.mxu0 0
        %2041 = vmatpush1.bf16.xpose.msra.mxu0 %v2038
        %2042 = vmatprep.subr.bf16.mxu0 0
        %2043 = vmatpush1.bf16.xpose.msra.mxu0 0
        %2044 = vmatprep.subr.bf16.mxu0 0
        %2045 = vmatpush1.bf16.xpose.msra.mxu0 0
        %2046 = vmatprep.subr.bf16.mxu0 0
        %2047 = vmatpush1.bf16.xpose.msra.mxu0 0
        %2048 = vmatprep.subr.bf16.mxu0 0
        %2049 = vmatpush1.bf16.xpose.msra.mxu0 0
        %2050 = vmatprep.subr.bf16.mxu0 0
        %2051 = vmatpush1.bf16.xpose.msra.mxu0 0
        %2052 = vmatprep.subr.bf16.mxu0 0
        %2053 = vmatpush1.bf16.xpose.msra.mxu0 0
        %2054 = vmatprep.subr.bf16.mxu0 0
        %2055 = vmatpush1.bf16.xpose.msra.mxu0 0
        %2056 = vmatprep.subr.bf16.mxu0 0
        %2057 = vmatpush1.bf16.xpose.msra.mxu0 0
        %2058 = vmatprep.subr.bf16.mxu0 0
        %2059 = vmatpush1.bf16.xpose.msra.mxu0 0
        %2060 = vmatprep.subr.bf16.mxu0 0
        %2061 = vmatpush1.bf16.xpose.msra.mxu0 0
        %2062 = vmatprep.subr.bf16.mxu0 0
        %2063 = vmatpush1.bf16.xpose.msra.mxu0 0
        %2064 = vmatprep.subr.bf16.mxu0 0
        %2065 = vmatpush1.bf16.xpose.msra.mxu0 0
        %2066 = vmatprep.subr.bf16.mxu0 0
        %2067 = vmatpush1.bf16.xpose.msra.mxu0 0
        %2068 = vmatprep.subr.bf16.mxu0 0
        %2069 = vmatpush1.bf16.xpose.msra.mxu0 0
        %2070 = vmatprep.subr.bf16.mxu0 0
        %2071 = vmatpush1.bf16.xpose.msra.mxu0 0
        %2072 = vmatprep.mubr.bf16.mxu0 0
        %2073 = vmatmul.mubr.bf16.gmra.mrb[0].mxu0 %v2035
        %v2074 = vpop.f32.mrb[0].mxu0
        %v2075 = vadd.f32 0.0, %v2074
        %v2076 = vpop.f32.mrb[0].mxu0
        %v2077 = vpop.f32.mrb[0].mxu0
        %v2078 = vpop.f32.mrb[0].mxu0
        %2079 = vdwg.mxu0
        %v2081 = vsel %vm1757, %v1134, 0
        %v2084 = vsel %vm1757, %v1452, 0
        %2086 = vmatprep.subr.bf16.mxu0 0
        %2087 = vmatpush1.bf16.xpose.msra.mxu0 %v2084
        %2088 = vmatprep.subr.bf16.mxu0 0
        %2089 = vmatpush1.bf16.xpose.msra.mxu0 0
        %2090 = vmatprep.subr.bf16.mxu0 0
        %2091 = vmatpush1.bf16.xpose.msra.mxu0 0
        %2092 = vmatprep.subr.bf16.mxu0 0
        %2093 = vmatpush1.bf16.xpose.msra.mxu0 0
        %2094 = vmatprep.subr.bf16.mxu0 0
        %2095 = vmatpush1.bf16.xpose.msra.mxu0 0
        %2096 = vmatprep.subr.bf16.mxu0 0
        %2097 = vmatpush1.bf16.xpose.msra.mxu0 0
        %2098 = vmatprep.subr.bf16.mxu0 0
        %2099 = vmatpush1.bf16.xpose.msra.mxu0 0
        %2100 = vmatprep.subr.bf16.mxu0 0
        %2101 = vmatpush1.bf16.xpose.msra.mxu0 0
        %2102 = vmatprep.subr.bf16.mxu0 0
        %2103 = vmatpush1.bf16.xpose.msra.mxu0 0
        %2104 = vmatprep.subr.bf16.mxu0 0
        %2105 = vmatpush1.bf16.xpose.msra.mxu0 0
        %2106 = vmatprep.subr.bf16.mxu0 0
        %2107 = vmatpush1.bf16.xpose.msra.mxu0 0
        %2108 = vmatprep.subr.bf16.mxu0 0
        %2109 = vmatpush1.bf16.xpose.msra.mxu0 0
        %2110 = vmatprep.subr.bf16.mxu0 0
        %2111 = vmatpush1.bf16.xpose.msra.mxu0 0
        %2112 = vmatprep.subr.bf16.mxu0 0
        %2113 = vmatpush1.bf16.xpose.msra.mxu0 0
        %2114 = vmatprep.subr.bf16.mxu0 0
        %2115 = vmatpush1.bf16.xpose.msra.mxu0 0
        %2116 = vmatprep.subr.bf16.mxu0 0
        %2117 = vmatpush1.bf16.xpose.msra.mxu0 0
        %2118 = vmatprep.mubr.bf16.mxu0 0
        %2119 = vmatmul.mubr.bf16.gmra.mrb[0].mxu0 %v2081
        %v2120 = vpop.f32.mrb[0].mxu0
        %v2121 = vadd.f32 0.0, %v2120
        %v2122 = vpop.f32.mrb[0].mxu0
        %v2123 = vpop.f32.mrb[0].mxu0
        %v2124 = vpop.f32.mrb[0].mxu0
        %2125 = vdwg.mxu0
        %v2126 = vsel %vm1757, %v1799, -inf
        %2127 = vmax.xlane.f32.xlu0 %v2126
        %v2128 = vpop.xlane.xlu0 %2127
        %v2129 = vsel %vm1757, %v1845, -inf
        %2130 = vmax.xlane.f32.xlu0 %v2129
        %v2131 = vpop.xlane.xlu0 %2130
        %v2132 = vsel %vm1757, %v1891, -inf
        %2133 = vmax.xlane.f32.xlu0 %v2132
        %v2134 = vpop.xlane.xlu0 %2133
        %v2135 = vsel %vm1757, %v1937, -inf
        %2136 = vmax.xlane.f32.xlu0 %v2135
        %v2137 = vpop.xlane.xlu0 %2136
        %v2138 = vsel %vm1757, %v1983, -inf
        %2139 = vmax.xlane.f32.xlu0 %v2138
        %v2140 = vpop.xlane.xlu0 %2139
        %v2141 = vsel %vm1757, %v2029, -inf
        %2142 = vmax.xlane.f32.xlu0 %v2141
        %v2143 = vpop.xlane.xlu0 %2142
        %v2144 = vsel %vm1757, %v2075, -inf
        %2145 = vmax.xlane.f32.xlu0 %v2144
        %v2146 = vpop.xlane.xlu0 %2145
        %v2147 = vsel %vm1757, %v2121, -inf
        %2148 = vmax.xlane.f32.xlu0 %v2147
        %v2149 = vpop.xlane.xlu0 %2148
        %v2150 = vsub.f32 %v1799, %v2128
        %v2151 = vsub.f32 %v1845, %v2131
        %v2152 = vsub.f32 %v1891, %v2134
        %v2153 = vsub.f32 %v1937, %v2137
        %v2154 = vsub.f32 %v1983, %v2140
        %v2155 = vsub.f32 %v2029, %v2143
        %v2156 = vsub.f32 %v2075, %v2146
        %v2157 = vsub.f32 %v2121, %v2149
        %v2158 = vmul.f32 %v2150, 1.442695
        %v2159 = vpow.pop %v2158
        %v2160 = vmul.f32 %v2151, 1.442695
        %v2161 = vpow.pop %v2160
        %v2162 = vmul.f32 %v2152, 1.442695
        %v2163 = vpow.pop %v2162
        %v2164 = vmul.f32 %v2153, 1.442695
        %v2165 = vpow.pop %v2164
        %v2166 = vmul.f32 %v2154, 1.442695
        %v2167 = vpow.pop %v2166
        %v2168 = vmul.f32 %v2155, 1.442695
        %v2169 = vpow.pop %v2168
        %v2170 = vmul.f32 %v2156, 1.442695
        %v2171 = vpow.pop %v2170
        %v2172 = vmul.f32 %v2157, 1.442695
        %v2173 = vpow.pop %v2172
        %v2174 = vsel %vm1757, %v2159, 0.0
        %2175 = vadd.xlane.f32.xlu0 %v2174
        %v2176 = vpop.xlane.xlu0 %2175
        %v2177 = vsel %vm1757, %v2161, 0.0
        %2178 = vadd.xlane.f32.xlu0 %v2177
        %v2179 = vpop.xlane.xlu0 %2178
        %v2180 = vsel %vm1757, %v2163, 0.0
        %2181 = vadd.xlane.f32.xlu0 %v2180
        %v2182 = vpop.xlane.xlu0 %2181
        %v2183 = vsel %vm1757, %v2165, 0.0
        %2184 = vadd.xlane.f32.xlu0 %v2183
        %v2185 = vpop.xlane.xlu0 %2184
        %v2186 = vsel %vm1757, %v2167, 0.0
        %2187 = vadd.xlane.f32.xlu0 %v2186
        %v2188 = vpop.xlane.xlu0 %2187
        %v2189 = vsel %vm1757, %v2169, 0.0
        %2190 = vadd.xlane.f32.xlu0 %v2189
        %v2191 = vpop.xlane.xlu0 %2190
        %v2192 = vsel %vm1757, %v2171, 0.0
        %2193 = vadd.xlane.f32.xlu0 %v2192
        %v2194 = vpop.xlane.xlu0 %2193
        %v2195 = vsel %vm1757, %v2173, 0.0
        %2196 = vadd.xlane.f32.xlu0 %v2195
        %v2197 = vpop.xlane.xlu0 %2196
        %v2198 = vrcp.pop %v2176
        %v2199 = vrcp.pop %v2179
        %v2200 = vrcp.pop %v2182
        %v2201 = vrcp.pop %v2185
        %v2202 = vrcp.pop %v2188
        %v2203 = vrcp.pop %v2191
        %v2204 = vrcp.pop %v2194
        %v2205 = vrcp.pop %v2197
        %v2206 = vmul.f32 %v2159, %v2198
        %v2207 = vmul.f32 %v2161, %v2199
        %v2208 = vmul.f32 %v2163, %v2200
        %v2209 = vmul.f32 %v2165, %v2201
        %v2210 = vmul.f32 %v2167, %v2202
        %v2211 = vmul.f32 %v2169, %v2203
        %v2212 = vmul.f32 %v2171, %v2204
        %v2213 = vmul.f32 %v2173, %v2205
        %v2214 = vpack.c.bf16 %v2206, %v2206
        %v2215 = vpack.c.bf16 %v2207, %v2207
        %v2216 = vpack.c.bf16 %v2208, %v2208
        %v2217 = vpack.c.bf16 %v2209, %v2209
        %v2218 = vpack.c.bf16 %v2210, %v2210
        %v2219 = vpack.c.bf16 %v2211, %v2211
        %v2220 = vpack.c.bf16 %v2212, %v2212
        %v2221 = vpack.c.bf16 %v2213, %v2213
        %v2223 = vsel %vm1757, %v2214, 0
        %vm2225 = vcmask 1043456
        %v2227 = vsel %vm2225, %v1749, 0
        %2229 = vmatprep.subr.bf16.mxu0 0
        %2230 = vmatpush1.bf16.msra.mxu0 %v2227
        %2231 = vmatprep.subr.bf16.mxu0 0
        %2232 = vmatpush1.bf16.msra.mxu0 0
        %2233 = vmatprep.subr.bf16.mxu0 0
        %2234 = vmatpush1.bf16.msra.mxu0 0
        %2235 = vmatprep.subr.bf16.mxu0 0
        %2236 = vmatpush1.bf16.msra.mxu0 0
        %2237 = vmatprep.subr.bf16.mxu0 0
        %2238 = vmatpush1.bf16.msra.mxu0 0
        %2239 = vmatprep.subr.bf16.mxu0 0
        %2240 = vmatpush1.bf16.msra.mxu0 0
        %2241 = vmatprep.subr.bf16.mxu0 0
        %2242 = vmatpush1.bf16.msra.mxu0 0
        %2243 = vmatprep.subr.bf16.mxu0 0
        %2244 = vmatpush1.bf16.msra.mxu0 0
        %2245 = vmatprep.subr.bf16.mxu0 0
        %2246 = vmatpush1.bf16.msra.mxu0 0
        %2247 = vmatprep.subr.bf16.mxu0 0
        %2248 = vmatpush1.bf16.msra.mxu0 0
        %2249 = vmatprep.subr.bf16.mxu0 0
        %2250 = vmatpush1.bf16.msra.mxu0 0
        %2251 = vmatprep.subr.bf16.mxu0 0
        %2252 = vmatpush1.bf16.msra.mxu0 0
        %2253 = vmatprep.subr.bf16.mxu0 0
        %2254 = vmatpush1.bf16.msra.mxu0 0
        %2255 = vmatprep.subr.bf16.mxu0 0
        %2256 = vmatpush1.bf16.msra.mxu0 0
        %2257 = vmatprep.subr.bf16.mxu0 0
        %2258 = vmatpush1.bf16.msra.mxu0 0
        %2259 = vmatprep.subr.bf16.mxu0 0
        %2260 = vmatpush1.bf16.msra.mxu0 0
        %2261 = vmatprep.mubr.bf16.mxu0 0
        %2262 = vmatmul.mubr.bf16.gmra.mrb[0].mxu0 %v2223
        %v2263 = vpop.f32.mrb[0].mxu0
        %v2264 = vadd.f32 0.0, %v2263
        %v2265 = vpop.f32.mrb[0].mxu0
        %v2266 = vpop.f32.mrb[0].mxu0
        %v2267 = vpop.f32.mrb[0].mxu0
        %2268 = vdwg.mxu0
        %v2270 = vsel %vm1757, %v2215, 0
        %v2273 = vsel %vm2225, %v1750, 0
        %2275 = vmatprep.subr.bf16.mxu0 0
        %2276 = vmatpush1.bf16.msra.mxu0 %v2273
        %2277 = vmatprep.subr.bf16.mxu0 0
        %2278 = vmatpush1.bf16.msra.mxu0 0
        %2279 = vmatprep.subr.bf16.mxu0 0
        %2280 = vmatpush1.bf16.msra.mxu0 0
        %2281 = vmatprep.subr.bf16.mxu0 0
        %2282 = vmatpush1.bf16.msra.mxu0 0
        %2283 = vmatprep.subr.bf16.mxu0 0
        %2284 = vmatpush1.bf16.msra.mxu0 0
        %2285 = vmatprep.subr.bf16.mxu0 0
        %2286 = vmatpush1.bf16.msra.mxu0 0
        %2287 = vmatprep.subr.bf16.mxu0 0
        %2288 = vmatpush1.bf16.msra.mxu0 0
        %2289 = vmatprep.subr.bf16.mxu0 0
        %2290 = vmatpush1.bf16.msra.mxu0 0
        %2291 = vmatprep.subr.bf16.mxu0 0
        %2292 = vmatpush1.bf16.msra.mxu0 0
        %2293 = vmatprep.subr.bf16.mxu0 0
        %2294 = vmatpush1.bf16.msra.mxu0 0
        %2295 = vmatprep.subr.bf16.mxu0 0
        %2296 = vmatpush1.bf16.msra.mxu0 0
        %2297 = vmatprep.subr.bf16.mxu0 0
        %2298 = vmatpush1.bf16.msra.mxu0 0
        %2299 = vmatprep.subr.bf16.mxu0 0
        %2300 = vmatpush1.bf16.msra.mxu0 0
        %2301 = vmatprep.subr.bf16.mxu0 0
        %2302 = vmatpush1.bf16.msra.mxu0 0
        %2303 = vmatprep.subr.bf16.mxu0 0
        %2304 = vmatpush1.bf16.msra.mxu0 0
        %2305 = vmatprep.subr.bf16.mxu0 0
        %2306 = vmatpush1.bf16.msra.mxu0 0
        %2307 = vmatprep.mubr.bf16.mxu0 0
        %2308 = vmatmul.mubr.bf16.gmra.mrb[0].mxu0 %v2270
        %v2309 = vpop.f32.mrb[0].mxu0
        %v2310 = vadd.f32 0.0, %v2309
        %v2311 = vpop.f32.mrb[0].mxu0
        %v2312 = vpop.f32.mrb[0].mxu0
        %v2313 = vpop.f32.mrb[0].mxu0
        %2314 = vdwg.mxu0
        %v2316 = vsel %vm1757, %v2216, 0
        %v2319 = vsel %vm2225, %v1751, 0
        %2321 = vmatprep.subr.bf16.mxu0 0
        %2322 = vmatpush1.bf16.msra.mxu0 %v2319
        %2323 = vmatprep.subr.bf16.mxu0 0
        %2324 = vmatpush1.bf16.msra.mxu0 0
        %2325 = vmatprep.subr.bf16.mxu0 0
        %2326 = vmatpush1.bf16.msra.mxu0 0
        %2327 = vmatprep.subr.bf16.mxu0 0
        %2328 = vmatpush1.bf16.msra.mxu0 0
        %2329 = vmatprep.subr.bf16.mxu0 0
        %2330 = vmatpush1.bf16.msra.mxu0 0
        %2331 = vmatprep.subr.bf16.mxu0 0
        %2332 = vmatpush1.bf16.msra.mxu0 0
        %2333 = vmatprep.subr.bf16.mxu0 0
        %2334 = vmatpush1.bf16.msra.mxu0 0
        %2335 = vmatprep.subr.bf16.mxu0 0
        %2336 = vmatpush1.bf16.msra.mxu0 0
        %2337 = vmatprep.subr.bf16.mxu0 0
        %2338 = vmatpush1.bf16.msra.mxu0 0
        %2339 = vmatprep.subr.bf16.mxu0 0
        %2340 = vmatpush1.bf16.msra.mxu0 0
        %2341 = vmatprep.subr.bf16.mxu0 0
        %2342 = vmatpush1.bf16.msra.mxu0 0
        %2343 = vmatprep.subr.bf16.mxu0 0
        %2344 = vmatpush1.bf16.msra.mxu0 0
        %2345 = vmatprep.subr.bf16.mxu0 0
        %2346 = vmatpush1.bf16.msra.mxu0 0
        %2347 = vmatprep.subr.bf16.mxu0 0
        %2348 = vmatpush1.bf16.msra.mxu0 0
        %2349 = vmatprep.subr.bf16.mxu0 0
        %2350 = vmatpush1.bf16.msra.mxu0 0
        %2351 = vmatprep.subr.bf16.mxu0 0
        %2352 = vmatpush1.bf16.msra.mxu0 0
        %2353 = vmatprep.mubr.bf16.mxu0 0
        %2354 = vmatmul.mubr.bf16.gmra.mrb[0].mxu0 %v2316
        %v2355 = vpop.f32.mrb[0].mxu0
        %v2356 = vadd.f32 0.0, %v2355
        %v2357 = vpop.f32.mrb[0].mxu0
        %v2358 = vpop.f32.mrb[0].mxu0
        %v2359 = vpop.f32.mrb[0].mxu0
        %2360 = vdwg.mxu0
        %v2362 = vsel %vm1757, %v2217, 0
        %v2365 = vsel %vm2225, %v1752, 0
        %2367 = vmatprep.subr.bf16.mxu0 0
        %2368 = vmatpush1.bf16.msra.mxu0 %v2365
        %2369 = vmatprep.subr.bf16.mxu0 0
        %2370 = vmatpush1.bf16.msra.mxu0 0
        %2371 = vmatprep.subr.bf16.mxu0 0
        %2372 = vmatpush1.bf16.msra.mxu0 0
        %2373 = vmatprep.subr.bf16.mxu0 0
        %2374 = vmatpush1.bf16.msra.mxu0 0
        %2375 = vmatprep.subr.bf16.mxu0 0
        %2376 = vmatpush1.bf16.msra.mxu0 0
        %2377 = vmatprep.subr.bf16.mxu0 0
        %2378 = vmatpush1.bf16.msra.mxu0 0
        %2379 = vmatprep.subr.bf16.mxu0 0
        %2380 = vmatpush1.bf16.msra.mxu0 0
        %2381 = vmatprep.subr.bf16.mxu0 0
        %2382 = vmatpush1.bf16.msra.mxu0 0
        %2383 = vmatprep.subr.bf16.mxu0 0
        %2384 = vmatpush1.bf16.msra.mxu0 0
        %2385 = vmatprep.subr.bf16.mxu0 0
        %2386 = vmatpush1.bf16.msra.mxu0 0
        %2387 = vmatprep.subr.bf16.mxu0 0
        %2388 = vmatpush1.bf16.msra.mxu0 0
        %2389 = vmatprep.subr.bf16.mxu0 0
        %2390 = vmatpush1.bf16.msra.mxu0 0
        %2391 = vmatprep.subr.bf16.mxu0 0
        %2392 = vmatpush1.bf16.msra.mxu0 0
        %2393 = vmatprep.subr.bf16.mxu0 0
        %2394 = vmatpush1.bf16.msra.mxu0 0
        %2395 = vmatprep.subr.bf16.mxu0 0
        %2396 = vmatpush1.bf16.msra.mxu0 0
        %2397 = vmatprep.subr.bf16.mxu0 0
        %2398 = vmatpush1.bf16.msra.mxu0 0
        %2399 = vmatprep.mubr.bf16.mxu0 0
        %2400 = vmatmul.mubr.bf16.gmra.mrb[0].mxu0 %v2362
        %v2401 = vpop.f32.mrb[0].mxu0
        %v2402 = vadd.f32 0.0, %v2401
        %v2403 = vpop.f32.mrb[0].mxu0
        %v2404 = vpop.f32.mrb[0].mxu0
        %v2405 = vpop.f32.mrb[0].mxu0
        %2406 = vdwg.mxu0
        %v2408 = vsel %vm1757, %v2218, 0
        %v2411 = vsel %vm2225, %v1753, 0
        %2413 = vmatprep.subr.bf16.mxu0 0
        %2414 = vmatpush1.bf16.msra.mxu0 %v2411
        %2415 = vmatprep.subr.bf16.mxu0 0
        %2416 = vmatpush1.bf16.msra.mxu0 0
        %2417 = vmatprep.subr.bf16.mxu0 0
        %2418 = vmatpush1.bf16.msra.mxu0 0
        %2419 = vmatprep.subr.bf16.mxu0 0
        %2420 = vmatpush1.bf16.msra.mxu0 0
        %2421 = vmatprep.subr.bf16.mxu0 0
        %2422 = vmatpush1.bf16.msra.mxu0 0
        %2423 = vmatprep.subr.bf16.mxu0 0
        %2424 = vmatpush1.bf16.msra.mxu0 0
        %2425 = vmatprep.subr.bf16.mxu0 0
        %2426 = vmatpush1.bf16.msra.mxu0 0
        %2427 = vmatprep.subr.bf16.mxu0 0
        %2428 = vmatpush1.bf16.msra.mxu0 0
        %2429 = vmatprep.subr.bf16.mxu0 0
        %2430 = vmatpush1.bf16.msra.mxu0 0
        %2431 = vmatprep.subr.bf16.mxu0 0
        %2432 = vmatpush1.bf16.msra.mxu0 0
        %2433 = vmatprep.subr.bf16.mxu0 0
        %2434 = vmatpush1.bf16.msra.mxu0 0
        %2435 = vmatprep.subr.bf16.mxu0 0
        %2436 = vmatpush1.bf16.msra.mxu0 0
        %2437 = vmatprep.subr.bf16.mxu0 0
        %2438 = vmatpush1.bf16.msra.mxu0 0
        %2439 = vmatprep.subr.bf16.mxu0 0
        %2440 = vmatpush1.bf16.msra.mxu0 0
        %2441 = vmatprep.subr.bf16.mxu0 0
        %2442 = vmatpush1.bf16.msra.mxu0 0
        %2443 = vmatprep.subr.bf16.mxu0 0
        %2444 = vmatpush1.bf16.msra.mxu0 0
        %2445 = vmatprep.mubr.bf16.mxu0 0
        %2446 = vmatmul.mubr.bf16.gmra.mrb[0].mxu0 %v2408
        %v2447 = vpop.f32.mrb[0].mxu0
        %v2448 = vadd.f32 0.0, %v2447
        %v2449 = vpop.f32.mrb[0].mxu0
        %v2450 = vpop.f32.mrb[0].mxu0
        %v2451 = vpop.f32.mrb[0].mxu0
        %2452 = vdwg.mxu0
        %v2454 = vsel %vm1757, %v2219, 0
        %v2457 = vsel %vm2225, %v1754, 0
        %2459 = vmatprep.subr.bf16.mxu0 0
        %2460 = vmatpush1.bf16.msra.mxu0 %v2457
        %2461 = vmatprep.subr.bf16.mxu0 0
        %2462 = vmatpush1.bf16.msra.mxu0 0
        %2463 = vmatprep.subr.bf16.mxu0 0
        %2464 = vmatpush1.bf16.msra.mxu0 0
        %2465 = vmatprep.subr.bf16.mxu0 0
        %2466 = vmatpush1.bf16.msra.mxu0 0
        %2467 = vmatprep.subr.bf16.mxu0 0
        %2468 = vmatpush1.bf16.msra.mxu0 0
        %2469 = vmatprep.subr.bf16.mxu0 0
        %2470 = vmatpush1.bf16.msra.mxu0 0
        %2471 = vmatprep.subr.bf16.mxu0 0
        %2472 = vmatpush1.bf16.msra.mxu0 0
        %2473 = vmatprep.subr.bf16.mxu0 0
        %2474 = vmatpush1.bf16.msra.mxu0 0
        %2475 = vmatprep.subr.bf16.mxu0 0
        %2476 = vmatpush1.bf16.msra.mxu0 0
        %2477 = vmatprep.subr.bf16.mxu0 0
        %2478 = vmatpush1.bf16.msra.mxu0 0
        %2479 = vmatprep.subr.bf16.mxu0 0
        %2480 = vmatpush1.bf16.msra.mxu0 0
        %2481 = vmatprep.subr.bf16.mxu0 0
        %2482 = vmatpush1.bf16.msra.mxu0 0
        %2483 = vmatprep.subr.bf16.mxu0 0
        %2484 = vmatpush1.bf16.msra.mxu0 0
        %2485 = vmatprep.subr.bf16.mxu0 0
        %2486 = vmatpush1.bf16.msra.mxu0 0
        %2487 = vmatprep.subr.bf16.mxu0 0
        %2488 = vmatpush1.bf16.msra.mxu0 0
        %2489 = vmatprep.subr.bf16.mxu0 0
        %2490 = vmatpush1.bf16.msra.mxu0 0
        %2491 = vmatprep.mubr.bf16.mxu0 0
        %2492 = vmatmul.mubr.bf16.gmra.mrb[0].mxu0 %v2454
        %v2493 = vpop.f32.mrb[0].mxu0
        %v2494 = vadd.f32 0.0, %v2493
        %v2495 = vpop.f32.mrb[0].mxu0
        %v2496 = vpop.f32.mrb[0].mxu0
        %v2497 = vpop.f32.mrb[0].mxu0
        %2498 = vdwg.mxu0
        %v2500 = vsel %vm1757, %v2220, 0
        %v2503 = vsel %vm2225, %v1755, 0
        %2505 = vmatprep.subr.bf16.mxu0 0
        %2506 = vmatpush1.bf16.msra.mxu0 %v2503
        %2507 = vmatprep.subr.bf16.mxu0 0
        %2508 = vmatpush1.bf16.msra.mxu0 0
        %2509 = vmatprep.subr.bf16.mxu0 0
        %2510 = vmatpush1.bf16.msra.mxu0 0
        %2511 = vmatprep.subr.bf16.mxu0 0
        %2512 = vmatpush1.bf16.msra.mxu0 0
        %2513 = vmatprep.subr.bf16.mxu0 0
        %2514 = vmatpush1.bf16.msra.mxu0 0
        %2515 = vmatprep.subr.bf16.mxu0 0
        %2516 = vmatpush1.bf16.msra.mxu0 0
        %2517 = vmatprep.subr.bf16.mxu0 0
        %2518 = vmatpush1.bf16.msra.mxu0 0
        %2519 = vmatprep.subr.bf16.mxu0 0
        %2520 = vmatpush1.bf16.msra.mxu0 0
        %2521 = vmatprep.subr.bf16.mxu0 0
        %2522 = vmatpush1.bf16.msra.mxu0 0
        %2523 = vmatprep.subr.bf16.mxu0 0
        %2524 = vmatpush1.bf16.msra.mxu0 0
        %2525 = vmatprep.subr.bf16.mxu0 0
        %2526 = vmatpush1.bf16.msra.mxu0 0
        %2527 = vmatprep.subr.bf16.mxu0 0
        %2528 = vmatpush1.bf16.msra.mxu0 0
        %2529 = vmatprep.subr.bf16.mxu0 0
        %2530 = vmatpush1.bf16.msra.mxu0 0
        %2531 = vmatprep.subr.bf16.mxu0 0
        %2532 = vmatpush1.bf16.msra.mxu0 0
        %2533 = vmatprep.subr.bf16.mxu0 0
        %2534 = vmatpush1.bf16.msra.mxu0 0
        %2535 = vmatprep.subr.bf16.mxu0 0
        %2536 = vmatpush1.bf16.msra.mxu0 0
        %2537 = vmatprep.mubr.bf16.mxu0 0
        %2538 = vmatmul.mubr.bf16.gmra.mrb[0].mxu0 %v2500
        %v2539 = vpop.f32.mrb[0].mxu0
        %v2540 = vadd.f32 0.0, %v2539
        %v2541 = vpop.f32.mrb[0].mxu0
        %v2542 = vpop.f32.mrb[0].mxu0
        %v2543 = vpop.f32.mrb[0].mxu0
        %2544 = vdwg.mxu0
        %v2546 = vsel %vm1757, %v2221, 0
        %v2549 = vsel %vm2225, %v1756, 0
        %2551 = vmatprep.subr.bf16.mxu0 0
        %2552 = vmatpush1.bf16.msra.mxu0 %v2549
        %2553 = vmatprep.subr.bf16.mxu0 0
        %2554 = vmatpush1.bf16.msra.mxu0 0
        %2555 = vmatprep.subr.bf16.mxu0 0
        %2556 = vmatpush1.bf16.msra.mxu0 0
        %2557 = vmatprep.subr.bf16.mxu0 0
        %2558 = vmatpush1.bf16.msra.mxu0 0
        %2559 = vmatprep.subr.bf16.mxu0 0
        %2560 = vmatpush1.bf16.msra.mxu0 0
        %2561 = vmatprep.subr.bf16.mxu0 0
        %2562 = vmatpush1.bf16.msra.mxu0 0
        %2563 = vmatprep.subr.bf16.mxu0 0
        %2564 = vmatpush1.bf16.msra.mxu0 0
        %2565 = vmatprep.subr.bf16.mxu0 0
        %2566 = vmatpush1.bf16.msra.mxu0 0
        %2567 = vmatprep.subr.bf16.mxu0 0
        %2568 = vmatpush1.bf16.msra.mxu0 0
        %2569 = vmatprep.subr.bf16.mxu0 0
        %2570 = vmatpush1.bf16.msra.mxu0 0
        %2571 = vmatprep.subr.bf16.mxu0 0
        %2572 = vmatpush1.bf16.msra.mxu0 0
        %2573 = vmatprep.subr.bf16.mxu0 0
        %2574 = vmatpush1.bf16.msra.mxu0 0
        %2575 = vmatprep.subr.bf16.mxu0 0
        %2576 = vmatpush1.bf16.msra.mxu0 0
        %2577 = vmatprep.subr.bf16.mxu0 0
        %2578 = vmatpush1.bf16.msra.mxu0 0
        %2579 = vmatprep.subr.bf16.mxu0 0
        %2580 = vmatpush1.bf16.msra.mxu0 0
        %2581 = vmatprep.subr.bf16.mxu0 0
        %2582 = vmatpush1.bf16.msra.mxu0 0
        %2583 = vmatprep.mubr.bf16.mxu0 0
        %2584 = vmatmul.mubr.bf16.gmra.mrb[0].mxu0 %v2546
        %v2585 = vpop.f32.mrb[0].mxu0
        %v2586 = vadd.f32 0.0, %v2585
        %v2587 = vpop.f32.mrb[0].mxu0
        %v2588 = vpop.f32.mrb[0].mxu0
        %v2589 = vpop.f32.mrb[0].mxu0
        %2590 = vdwg.mxu0
        %v2591 = vcombine.low %v2264, %v2356
        %v2592 = vcombine.high %v2264, %v2356
        %v2594 = vunpack.c.l.s4 1983009808
        %v2595 = vunpack.c.0.s8 %v2594
        %v2596 = vlaneseq
        %v2597 = vshrl.u32 %v2596, 7
        %v2598 = vsub.s32 %v2595, %v2597
        %v2599 = vrot.slane %v2591, %v2598
        %v2601 = vunpack.c.l.s4 1983009808
        %v2602 = vunpack.c.0.s8 %v2601
        %v2603 = vlaneseq
        %v2604 = vshrl.u32 %v2603, 7
        %v2605 = vsub.s32 %v2602, %v2604
        %v2606 = vrot.slane %v2592, %v2605
        %v2607 = vcombine.low %v2310, %v2402
        %v2608 = vcombine.high %v2310, %v2402
        %v2610 = vunpack.c.l.s4 1983009808
        %v2611 = vunpack.c.0.s8 %v2610
        %v2612 = vlaneseq
        %v2613 = vshrl.u32 %v2612, 7
        %v2614 = vsub.s32 %v2611, %v2613
        %v2615 = vrot.slane %v2607, %v2614
        %v2617 = vunpack.c.l.s4 1983009808
        %v2618 = vunpack.c.0.s8 %v2617
        %v2619 = vlaneseq
        %v2620 = vshrl.u32 %v2619, 7
        %v2621 = vsub.s32 %v2618, %v2620
        %v2622 = vrot.slane %v2608, %v2621
        %v2623 = vcombine.low %v2599, %v2615
        %v2624 = vcombine.high %v2599, %v2615
        %v2626 = vunpack.c.l.s4 1934713408
        %v2627 = vunpack.c.0.s8 %v2626
        %v2628 = vlaneseq
        %v2629 = vshrl.u32 %v2628, 7
        %v2630 = vsub.s32 %v2627, %v2629
        %v2631 = vrot.slane %v2623, %v2630
        %v2633 = vunpack.c.l.s4 1934713408
        %v2634 = vunpack.c.0.s8 %v2633
        %v2635 = vlaneseq
        %v2636 = vshrl.u32 %v2635, 7
        %v2637 = vsub.s32 %v2634, %v2636
        %v2638 = vrot.slane %v2624, %v2637
        %v2639 = vcombine.low %v2606, %v2622
        %v2640 = vcombine.high %v2606, %v2622
        %v2642 = vunpack.c.l.s4 1934713408
        %v2643 = vunpack.c.0.s8 %v2642
        %v2644 = vlaneseq
        %v2645 = vshrl.u32 %v2644, 7
        %v2646 = vsub.s32 %v2643, %v2645
        %v2647 = vrot.slane %v2639, %v2646
        %v2649 = vunpack.c.l.s4 1934713408
        %v2650 = vunpack.c.0.s8 %v2649
        %v2651 = vlaneseq
        %v2652 = vshrl.u32 %v2651, 7
        %v2653 = vsub.s32 %v2650, %v2652
        %v2654 = vrot.slane %v2640, %v2653
        %v2655 = vcombine.high %v2631, 0.0
        %v2656 = vcombine.high %v2638, 0.0
        %v2657 = vcombine.high %v2647, 0.0
        %v2658 = vcombine.high %v2654, 0.0
        %v2659 = vcombine.low %v2448, %v2540
        %v2660 = vcombine.high %v2448, %v2540
        %v2662 = vunpack.c.l.s4 1983009808
        %v2663 = vunpack.c.0.s8 %v2662
        %v2664 = vlaneseq
        %v2665 = vshrl.u32 %v2664, 7
        %v2666 = vsub.s32 %v2663, %v2665
        %v2667 = vrot.slane %v2659, %v2666
        %v2669 = vunpack.c.l.s4 1983009808
        %v2670 = vunpack.c.0.s8 %v2669
        %v2671 = vlaneseq
        %v2672 = vshrl.u32 %v2671, 7
        %v2673 = vsub.s32 %v2670, %v2672
        %v2674 = vrot.slane %v2660, %v2673
        %v2675 = vcombine.low %v2494, %v2586
        %v2676 = vcombine.high %v2494, %v2586
        %v2678 = vunpack.c.l.s4 1983009808
        %v2679 = vunpack.c.0.s8 %v2678
        %v2680 = vlaneseq
        %v2681 = vshrl.u32 %v2680, 7
        %v2682 = vsub.s32 %v2679, %v2681
        %v2683 = vrot.slane %v2675, %v2682
        %v2685 = vunpack.c.l.s4 1983009808
        %v2686 = vunpack.c.0.s8 %v2685
        %v2687 = vlaneseq
        %v2688 = vshrl.u32 %v2687, 7
        %v2689 = vsub.s32 %v2686, %v2688
        %v2690 = vrot.slane %v2676, %v2689
        %v2691 = vcombine.low %v2667, %v2683
        %v2692 = vcombine.high %v2667, %v2683
        %v2694 = vunpack.c.l.s4 1934713408
        %v2695 = vunpack.c.0.s8 %v2694
        %v2696 = vlaneseq
        %v2697 = vshrl.u32 %v2696, 7
        %v2698 = vsub.s32 %v2695, %v2697
        %v2699 = vrot.slane %v2691, %v2698
        %v2701 = vunpack.c.l.s4 1934713408
        %v2702 = vunpack.c.0.s8 %v2701
        %v2703 = vlaneseq
        %v2704 = vshrl.u32 %v2703, 7
        %v2705 = vsub.s32 %v2702, %v2704
        %v2706 = vrot.slane %v2692, %v2705
        %v2707 = vcombine.low %v2674, %v2690
        %v2708 = vcombine.high %v2674, %v2690
        %v2710 = vunpack.c.l.s4 1934713408
        %v2711 = vunpack.c.0.s8 %v2710
        %v2712 = vlaneseq
        %v2713 = vshrl.u32 %v2712, 7
        %v2714 = vsub.s32 %v2711, %v2713
        %v2715 = vrot.slane %v2707, %v2714
        %v2717 = vunpack.c.l.s4 1934713408
        %v2718 = vunpack.c.0.s8 %v2717
        %v2719 = vlaneseq
        %v2720 = vshrl.u32 %v2719, 7
        %v2721 = vsub.s32 %v2718, %v2720
        %v2722 = vrot.slane %v2708, %v2721
        %v2723 = vcombine.high %v2699, 0.0
        %v2724 = vcombine.high %v2706, 0.0
        %v2725 = vcombine.high %v2715, 0.0
        %v2726 = vcombine.high %v2722, 0.0
        %v2727 = vcombine.low %v2631, %v2638
        %v2729 = vunpack.c.l.s4 1983009808
        %v2730 = vunpack.c.0.s8 %v2729
        %v2731 = vlaneseq
        %v2732 = vshrl.u32 %v2731, 7
        %v2733 = vsub.s32 %v2730, %v2732
        %v2734 = vrot.slane %v2727, %v2733
        %v2735 = vcombine.low %v2655, %v2656
        %v2737 = vunpack.c.l.s4 1983009808
        %v2738 = vunpack.c.0.s8 %v2737
        %v2739 = vlaneseq
        %v2740 = vshrl.u32 %v2739, 7
        %v2741 = vsub.s32 %v2738, %v2740
        %v2742 = vrot.slane %v2735, %v2741
        %v2743 = vcombine.low %v2647, %v2654
        %v2745 = vunpack.c.l.s4 1983009808
        %v2746 = vunpack.c.0.s8 %v2745
        %v2747 = vlaneseq
        %v2748 = vshrl.u32 %v2747, 7
        %v2749 = vsub.s32 %v2746, %v2748
        %v2750 = vrot.slane %v2743, %v2749
        %v2751 = vcombine.low %v2657, %v2658
        %v2753 = vunpack.c.l.s4 1983009808
        %v2754 = vunpack.c.0.s8 %v2753
        %v2755 = vlaneseq
        %v2756 = vshrl.u32 %v2755, 7
        %v2757 = vsub.s32 %v2754, %v2756
        %v2758 = vrot.slane %v2751, %v2757
        %v2759 = vcombine.low %v2734, %v2742
        %v2760 = vcombine.high %v2734, %v2742
        %v2762 = vunpack.c.l.s4 1934713408
        %v2763 = vunpack.c.0.s8 %v2762
        %v2764 = vlaneseq
        %v2765 = vshrl.u32 %v2764, 7
        %v2766 = vsub.s32 %v2763, %v2765
        %v2767 = vrot.slane %v2759, %v2766
        %v2769 = vunpack.c.l.s4 1934713408
        %v2770 = vunpack.c.0.s8 %v2769
        %v2771 = vlaneseq
        %v2772 = vshrl.u32 %v2771, 7
        %v2773 = vsub.s32 %v2770, %v2772
        %v2774 = vrot.slane %v2760, %v2773
        %v2775 = vcombine.low %v2750, %v2758
        %v2776 = vcombine.high %v2750, %v2758
        %v2778 = vunpack.c.l.s4 1934713408
        %v2779 = vunpack.c.0.s8 %v2778
        %v2780 = vlaneseq
        %v2781 = vshrl.u32 %v2780, 7
        %v2782 = vsub.s32 %v2779, %v2781
        %v2783 = vrot.slane %v2775, %v2782
        %v2785 = vunpack.c.l.s4 1934713408
        %v2786 = vunpack.c.0.s8 %v2785
        %v2787 = vlaneseq
        %v2788 = vshrl.u32 %v2787, 7
        %v2789 = vsub.s32 %v2786, %v2788
        %v2790 = vrot.slane %v2776, %v2789
        %v2791 = vcombine.low %v2767, %v2783
        %v2792 = vcombine.high %v2767, %v2783
        %v2793 = vcombine.low %v2774, %v2790
        %v2794 = vcombine.high %v2774, %v2790
        %v2795 = vcombine.low %v2699, %v2706
        %v2797 = vunpack.c.l.s4 1983009808
        %v2798 = vunpack.c.0.s8 %v2797
        %v2799 = vlaneseq
        %v2800 = vshrl.u32 %v2799, 7
        %v2801 = vsub.s32 %v2798, %v2800
        %v2802 = vrot.slane %v2795, %v2801
        %v2803 = vcombine.low %v2723, %v2724
        %v2805 = vunpack.c.l.s4 1983009808
        %v2806 = vunpack.c.0.s8 %v2805
        %v2807 = vlaneseq
        %v2808 = vshrl.u32 %v2807, 7
        %v2809 = vsub.s32 %v2806, %v2808
        %v2810 = vrot.slane %v2803, %v2809
        %v2811 = vcombine.low %v2715, %v2722
        %v2813 = vunpack.c.l.s4 1983009808
        %v2814 = vunpack.c.0.s8 %v2813
        %v2815 = vlaneseq
        %v2816 = vshrl.u32 %v2815, 7
        %v2817 = vsub.s32 %v2814, %v2816
        %v2818 = vrot.slane %v2811, %v2817
        %v2819 = vcombine.low %v2725, %v2726
        %v2821 = vunpack.c.l.s4 1983009808
        %v2822 = vunpack.c.0.s8 %v2821
        %v2823 = vlaneseq
        %v2824 = vshrl.u32 %v2823, 7
        %v2825 = vsub.s32 %v2822, %v2824
        %v2826 = vrot.slane %v2819, %v2825
        %v2827 = vcombine.low %v2802, %v2810
        %v2828 = vcombine.high %v2802, %v2810
        %v2830 = vunpack.c.l.s4 1934713408
        %v2831 = vunpack.c.0.s8 %v2830
        %v2832 = vlaneseq
        %v2833 = vshrl.u32 %v2832, 7
        %v2834 = vsub.s32 %v2831, %v2833
        %v2835 = vrot.slane %v2827, %v2834
        %v2837 = vunpack.c.l.s4 1934713408
        %v2838 = vunpack.c.0.s8 %v2837
        %v2839 = vlaneseq
        %v2840 = vshrl.u32 %v2839, 7
        %v2841 = vsub.s32 %v2838, %v2840
        %v2842 = vrot.slane %v2828, %v2841
        %v2843 = vcombine.low %v2818, %v2826
        %v2844 = vcombine.high %v2818, %v2826
        %v2846 = vunpack.c.l.s4 1934713408
        %v2847 = vunpack.c.0.s8 %v2846
        %v2848 = vlaneseq
        %v2849 = vshrl.u32 %v2848, 7
        %v2850 = vsub.s32 %v2847, %v2849
        %v2851 = vrot.slane %v2843, %v2850
        %v2853 = vunpack.c.l.s4 1934713408
        %v2854 = vunpack.c.0.s8 %v2853
        %v2855 = vlaneseq
        %v2856 = vshrl.u32 %v2855, 7
        %v2857 = vsub.s32 %v2854, %v2856
        %v2858 = vrot.slane %v2844, %v2857
        %v2859 = vcombine.low %v2835, %v2851
        %v2860 = vcombine.high %v2835, %v2851
        %v2861 = vcombine.low %v2842, %v2858
        %v2862 = vcombine.high %v2842, %v2858
        %2865 = vrot.lane.b32.xlu0 %v2792, 8
        %v2866 = vpop.permute.xlu0 %2865
        %2867 = vrot.lane.b32.xlu0 %v2860, 8
        %v2868 = vpop.permute.xlu0 %2867
        %2873 = vrot.lane.b32.xlu0 %v2793, 16
        %v2874 = vpop.permute.xlu0 %2873
        %2875 = vrot.lane.b32.xlu0 %v2861, 16
        %v2876 = vpop.permute.xlu0 %2875
        %2881 = vrot.lane.b32.xlu0 %v2794, 24
        %v2882 = vpop.permute.xlu0 %2881
        %2883 = vrot.lane.b32.xlu0 %v2862, 24
        %v2884 = vpop.permute.xlu0 %2883
        %v2887 = vsel %vm1757, %v2791, %v2866
        %v2888 = vsel %vm1757, %v2859, %v2868
        %vm2889 = vcmask 130048
        %v2890 = vsel %vm2889, %v2887, %v2874
        %v2891 = vsel %vm2889, %v2888, %v2876
        %vm2892 = vcmask 195584
        %v2893 = vsel %vm2892, %v2890, %v2882
        %v2894 = vsel %vm2892, %v2891, %v2884
        %v2895 = vpack.c.bf16 %v2894, %v2893
        %v2896 = vld [vmem:[%s737] sm:$0xf]
        %v2897 = vld [vmem:[%s737 + $0x4] sm:$0xf]
        %v2898 = vld [vmem:[%s737 + $0x8] sm:$0xf]
        %v2899 = vld [vmem:[%s737 + $0xc] sm:$0xf]
        %v2900 = vld [vmem:[%s740] sm:$0x1]
        %v2902 = vlaneseq
        %v2903 = vshrl.u32 %v2902, 7
        %v2904 = vsub.s32 0, %v2903
        %v2905 = vrot.slane %v2900, %v2904
        %v2911 = vunpack.c.l.b16 %v2896
        %v2912 = vunpack.c.l.b16 %v2897
        %v2913 = vunpack.c.l.b16 %v2898
        %v2914 = vunpack.c.l.b16 %v2899
        %v2915 = vpack.c.b16 %v2912, %v2911
        %v2916 = vpack.c.b16 %v2914, %v2913
        %v2920 = vsel %vm788, %v2895, 0
        %2922 = vmatprep.subr.bf16.mxu0 0
        %2923 = vmatpush1.bf16.msra.mxu0 %v2915
        %2924 = vmatprep.subr.bf16.mxu0 0
        %2925 = vmatpush1.bf16.msra.mxu0 %v2916
        %2926 = vmatprep.subr.bf16.mxu0 0
        %2927 = vmatpush1.bf16.msra.mxu0 0
        %2928 = vmatprep.subr.bf16.mxu0 0
        %2929 = vmatpush1.bf16.msra.mxu0 0
        %2930 = vmatprep.subr.bf16.mxu0 0
        %2931 = vmatpush1.bf16.msra.mxu0 0
        %2932 = vmatprep.subr.bf16.mxu0 0
        %2933 = vmatpush1.bf16.msra.mxu0 0
        %2934 = vmatprep.subr.bf16.mxu0 0
        %2935 = vmatpush1.bf16.msra.mxu0 0
        %2936 = vmatprep.subr.bf16.mxu0 0
        %2937 = vmatpush1.bf16.msra.mxu0 0
        %2938 = vmatprep.subr.bf16.mxu0 0
        %2939 = vmatpush1.bf16.msra.mxu0 0
        %2940 = vmatprep.subr.bf16.mxu0 0
        %2941 = vmatpush1.bf16.msra.mxu0 0
        %2942 = vmatprep.subr.bf16.mxu0 0
        %2943 = vmatpush1.bf16.msra.mxu0 0
        %2944 = vmatprep.subr.bf16.mxu0 0
        %2945 = vmatpush1.bf16.msra.mxu0 0
        %2946 = vmatprep.subr.bf16.mxu0 0
        %2947 = vmatpush1.bf16.msra.mxu0 0
        %2948 = vmatprep.subr.bf16.mxu0 0
        %2949 = vmatpush1.bf16.msra.mxu0 0
        %2950 = vmatprep.subr.bf16.mxu0 0
        %2951 = vmatpush1.bf16.msra.mxu0 0
        %2952 = vmatprep.subr.bf16.mxu0 0
        %2953 = vmatpush1.bf16.msra.mxu0 0
        %2954 = vmatprep.mubr.bf16.mxu0 0
        %2955 = vmatmul.mubr.bf16.gmra.mrb[0].mxu0 %v2920
        %v2956 = vpop.f32.mrb[0].mxu0
        %v2957 = vadd.f32 %v2905, %v2956
        %v2958 = vpop.f32.mrb[0].mxu0
        %v2959 = vpop.f32.mrb[0].mxu0
        %v2960 = vadd.f32 %v2905, %v2959
        %v2961 = vpop.f32.mrb[0].mxu0
        %2962 = vdwg.mxu0
        %v2963 = vadd.f32 %v762, %v2957
        %v2964 = vadd.f32 %v763, %v2960
        %v2965 = vsel %vm788, %v2963, 0.0
        %2966 = vadd.xlane.f32.xlu0 %v2965
        %v2967 = vpop.xlane.xlu0 %2966
        %v2968 = vsel %vm788, %v2964, 0.0
        %2969 = vadd.xlane.f32.xlu0 %v2968
        %v2970 = vpop.xlane.xlu0 %2969
        %v2971 = vrcp.pop 32.0
        %v2972 = vmul.f32 %v2967, %v2971
        %v2973 = vmul.f32 %v2970, %v2971
        %v2974 = vsub.f32 %v2963, %v2972
        %v2975 = vsub.f32 %v2964, %v2973
        %v2976 = vmul.f32 %v2974, %v2974
        %v2977 = vmul.f32 %v2975, %v2975
        %v2978 = vsel %vm788, %v2976, 0.0
        %2979 = vadd.xlane.f32.xlu0 %v2978
        %v2980 = vpop.xlane.xlu0 %2979
        %v2981 = vsel %vm788, %v2977, 0.0
        %2982 = vadd.xlane.f32.xlu0 %v2981
        %v2983 = vpop.xlane.xlu0 %2982
        %v2984 = vmul.f32 %v2980, %v2971
        %v2985 = vmul.f32 %v2983, %v2971
        %v2986 = vadd.f32 %v2984, 1e-05
        %v2987 = vadd.f32 %v2985, 1e-05
        %v2988 = vrsqrt.pop %v2986
        %v2989 = vrsqrt.pop %v2987
        %v2990 = vmul.f32 %v2974, %v2988
        %v2991 = vmul.f32 %v2975, %v2989
        %v2992 = vld [vmem:[%s601] sm:$0x1]
        %v2994 = vlaneseq
        %v2995 = vshrl.u32 %v2994, 7
        %v2996 = vsub.s32 0, %v2995
        %v2997 = vrot.slane %v2992, %v2996
        %v2999 = vmul.f32 %v2990, %v2997
        %v3000 = vmul.f32 %v2991, %v2997
        %v3001 = vld [vmem:[%s609] sm:$0x1]
        %v3003 = vlaneseq
        %v3004 = vshrl.u32 %v3003, 7
        %v3005 = vsub.s32 0, %v3004
        %v3006 = vrot.slane %v3001, %v3005
        %v3008 = vadd.f32 %v2999, %v3006
        %v3009 = vadd.f32 %v3000, %v3006
        %v3010 = vpack.c.bf16 %v3009, %v3008
        %v3011 = vld [vmem:[%s745] sm:$0xf]
        %v3012 = vld [vmem:[%s745 + $0x4] sm:$0xf]
        %v3013 = vld [vmem:[%s745 + $0x8] sm:$0xf]
        %v3014 = vld [vmem:[%s745 + $0xc] sm:$0xf]
        %v3015 = vld [vmem:[%s617] sm:$0x1]
        %v3017 = vlaneseq
        %v3018 = vshrl.u32 %v3017, 7
        %v3019 = vsub.s32 0, %v3018
        %v3020 = vrot.slane %v3015, %v3019
        %v3026 = vunpack.c.l.b16 %v3011
        %v3027 = vunpack.c.l.b16 %v3012
        %v3028 = vunpack.c.l.b16 %v3013
        %v3029 = vunpack.c.l.b16 %v3014
        %v3030 = vpack.c.b16 %v3027, %v3026
        %v3031 = vpack.c.b16 %v3029, %v3028
        %v3035 = vsel %vm788, %v3010, 0
        %3037 = vmatprep.subr.bf16.mxu0 0
        %3038 = vmatpush1.bf16.msra.mxu0 %v3030
        %3039 = vmatprep.subr.bf16.mxu0 0
        %3040 = vmatpush1.bf16.msra.mxu0 %v3031
        %3041 = vmatprep.subr.bf16.mxu0 0
        %3042 = vmatpush1.bf16.msra.mxu0 0
        %3043 = vmatprep.subr.bf16.mxu0 0
        %3044 = vmatpush1.bf16.msra.mxu0 0
        %3045 = vmatprep.subr.bf16.mxu0 0
        %3046 = vmatpush1.bf16.msra.mxu0 0
        %3047 = vmatprep.subr.bf16.mxu0 0
        %3048 = vmatpush1.bf16.msra.mxu0 0
        %3049 = vmatprep.subr.bf16.mxu0 0
        %3050 = vmatpush1.bf16.msra.mxu0 0
        %3051 = vmatprep.subr.bf16.mxu0 0
        %3052 = vmatpush1.bf16.msra.mxu0 0
        %3053 = vmatprep.subr.bf16.mxu0 0
        %3054 = vmatpush1.bf16.msra.mxu0 0
        %3055 = vmatprep.subr.bf16.mxu0 0
        %3056 = vmatpush1.bf16.msra.mxu0 0
        %3057 = vmatprep.subr.bf16.mxu0 0
        %3058 = vmatpush1.bf16.msra.mxu0 0
        %3059 = vmatprep.subr.bf16.mxu0 0
        %3060 = vmatpush1.bf16.msra.mxu0 0
        %3061 = vmatprep.subr.bf16.mxu0 0
        %3062 = vmatpush1.bf16.msra.mxu0 0
        %3063 = vmatprep.subr.bf16.mxu0 0
        %3064 = vmatpush1.bf16.msra.mxu0 0
        %3065 = vmatprep.subr.bf16.mxu0 0
        %3066 = vmatpush1.bf16.msra.mxu0 0
        %3067 = vmatprep.subr.bf16.mxu0 0
        %3068 = vmatpush1.bf16.msra.mxu0 0
        %3069 = vmatprep.mubr.bf16.mxu0 0
        %3070 = vmatmul.mubr.bf16.gmra.mrb[0].mxu0 %v3035
        %v3071 = vpop.f32.mrb[0].mxu0
        %v3072 = vadd.f32 %v3020, %v3071
        %v3073 = vpop.f32.mrb[0].mxu0
        %v3074 = vpop.f32.mrb[0].mxu0
        %v3075 = vadd.f32 %v3020, %v3074
        %v3076 = vpop.f32.mrb[0].mxu0
        %3077 = vdwg.mxu0
        %v3078 = vmax.f32 %v3072, 0.0
        %v3079 = vmax.f32 %v3075, 0.0
        %v3080 = vpack.c.bf16 %v3079, %v3078
        %v3081 = vld [vmem:[%s750] sm:$0xf]
        %v3082 = vld [vmem:[%s750 + $0x4] sm:$0xf]
        %v3083 = vld [vmem:[%s750 + $0x8] sm:$0xf]
        %v3084 = vld [vmem:[%s750 + $0xc] sm:$0xf]
        %v3085 = vld [vmem:[%s750 + $0x10] sm:$0xf]
        %v3086 = vld [vmem:[%s750 + $0x14] sm:$0xf]
        %v3087 = vld [vmem:[%s750 + $0x18] sm:$0xf]
        %v3088 = vld [vmem:[%s750 + $0x1c] sm:$0xf]
        %v3089 = vld [vmem:[%s625] sm:$0x1]
        %v3091 = vlaneseq
        %v3092 = vshrl.u32 %v3091, 7
        %v3093 = vsub.s32 0, %v3092
        %v3094 = vrot.slane %v3089, %v3093
        %v3104 = vunpack.c.l.b16 %v3081
        %v3105 = vunpack.c.l.b16 %v3082
        %v3106 = vunpack.c.l.b16 %v3083
        %v3107 = vunpack.c.l.b16 %v3084
        %v3108 = vunpack.c.l.b16 %v3085
        %v3109 = vunpack.c.l.b16 %v3086
        %v3110 = vunpack.c.l.b16 %v3087
        %v3111 = vunpack.c.l.b16 %v3088
        %v3112 = vpack.c.b16 %v3105, %v3104
        %v3113 = vpack.c.b16 %v3107, %v3106
        %v3114 = vpack.c.b16 %v3109, %v3108
        %v3115 = vpack.c.b16 %v3111, %v3110
        %vm3120 = vcmask 523264
        %v3122 = vsel %vm3120, %v3080, 0
        %3124 = vmatprep.subr.bf16.mxu0 0
        %3125 = vmatpush1.bf16.msra.mxu0 %v3112
        %3126 = vmatprep.subr.bf16.mxu0 0
        %3127 = vmatpush1.bf16.msra.mxu0 %v3113
        %3128 = vmatprep.subr.bf16.mxu0 0
        %3129 = vmatpush1.bf16.msra.mxu0 %v3114
        %3130 = vmatprep.subr.bf16.mxu0 0
        %3131 = vmatpush1.bf16.msra.mxu0 %v3115
        %3132 = vmatprep.subr.bf16.mxu0 0
        %3133 = vmatpush1.bf16.msra.mxu0 0
        %3134 = vmatprep.subr.bf16.mxu0 0
        %3135 = vmatpush1.bf16.msra.mxu0 0
        %3136 = vmatprep.subr.bf16.mxu0 0
        %3137 = vmatpush1.bf16.msra.mxu0 0
        %3138 = vmatprep.subr.bf16.mxu0 0
        %3139 = vmatpush1.bf16.msra.mxu0 0
        %3140 = vmatprep.subr.bf16.mxu0 0
        %3141 = vmatpush1.bf16.msra.mxu0 0
        %3142 = vmatprep.subr.bf16.mxu0 0
        %3143 = vmatpush1.bf16.msra.mxu0 0
        %3144 = vmatprep.subr.bf16.mxu0 0
        %3145 = vmatpush1.bf16.msra.mxu0 0
        %3146 = vmatprep.subr.bf16.mxu0 0
        %3147 = vmatpush1.bf16.msra.mxu0 0
        %3148 = vmatprep.subr.bf16.mxu0 0
        %3149 = vmatpush1.bf16.msra.mxu0 0
        %3150 = vmatprep.subr.bf16.mxu0 0
        %3151 = vmatpush1.bf16.msra.mxu0 0
        %3152 = vmatprep.subr.bf16.mxu0 0
        %3153 = vmatpush1.bf16.msra.mxu0 0
        %3154 = vmatprep.subr.bf16.mxu0 0
        %3155 = vmatpush1.bf16.msra.mxu0 0
        %3156 = vmatprep.mubr.bf16.mxu0 0
        %3157 = vmatmul.mubr.bf16.gmra.mrb[0].mxu0 %v3122
        %v3158 = vpop.f32.mrb[0].mxu0
        %v3159 = vadd.f32 %v3094, %v3158
        %v3160 = vpop.f32.mrb[0].mxu0
        %v3161 = vpop.f32.mrb[0].mxu0
        %v3162 = vadd.f32 %v3094, %v3161
        %v3163 = vpop.f32.mrb[0].mxu0
        %3164 = vdwg.mxu0
        %v3165 = vadd.f32 %v3008, %v3159
        %v3166 = vadd.f32 %v3009, %v3162
        %v3167 = vsel %vm788, %v3165, 0.0
        %3168 = vadd.xlane.f32.xlu0 %v3167
        %v3169 = vpop.xlane.xlu0 %3168
        %v3170 = vsel %vm788, %v3166, 0.0
        %3171 = vadd.xlane.f32.xlu0 %v3170
        %v3172 = vpop.xlane.xlu0 %3171
        %v3173 = vmul.f32 %v3169, %v2971
        %v3174 = vmul.f32 %v3172, %v2971
        %v3175 = vsub.f32 %v3165, %v3173
        %v3176 = vsub.f32 %v3166, %v3174
        %v3177 = vmul.f32 %v3175, %v3175
        %v3178 = vmul.f32 %v3176, %v3176
        %v3179 = vsel %vm788, %v3177, 0.0
        %3180 = vadd.xlane.f32.xlu0 %v3179
        %v3181 = vpop.xlane.xlu0 %3180
        %v3182 = vsel %vm788, %v3178, 0.0
        %3183 = vadd.xlane.f32.xlu0 %v3182
        %v3184 = vpop.xlane.xlu0 %3183
        %v3185 = vmul.f32 %v3181, %v2971
        %v3186 = vmul.f32 %v3184, %v2971
        %v3187 = vadd.f32 %v3185, 1e-05
        %v3188 = vadd.f32 %v3186, 1e-05
        %v3189 = vrsqrt.pop %v3187
        %v3190 = vrsqrt.pop %v3188
        %v3191 = vmul.f32 %v3175, %v3189
        %v3192 = vmul.f32 %v3176, %v3190
        %v3193 = vld [vmem:[%s633] sm:$0x1]
        %v3195 = vlaneseq
        %v3196 = vshrl.u32 %v3195, 7
        %v3197 = vsub.s32 0, %v3196
        %v3198 = vrot.slane %v3193, %v3197
        %v3200 = vmul.f32 %v3191, %v3198
        %v3201 = vmul.f32 %v3192, %v3198
        %v3202 = vld [vmem:[%s641] sm:$0x1]
        %v3204 = vlaneseq
        %v3205 = vshrl.u32 %v3204, 7
        %v3206 = vsub.s32 0, %v3205
        %v3207 = vrot.slane %v3202, %v3206
        %v3209 = vadd.f32 %v3200, %v3207
        %v3210 = vadd.f32 %v3201, %v3207
        %3211 = vst.msk [vmem:[#allocation2] sm:$0xff] %vm788, %v3209
        %3212 = vst.msk [vmem:[#allocation2 + $0x8] sm:$0xff] %vm788, %v3210
        %p3213 = scmp.eq.s32.totalorder %s40, 1
        // Predicated region
        $region105: #{encoder_forward.1} parent=71 // pred_check
          %p3214 = pneg %p3213
        $region106: #{encoder_forward.1} parent=71 // pred_check_branch
          %3216 = sbr.rel (%p3214) target = $region108
        $region107: #{encoder_forward.1} parent=71 // pred_region
          %3217 = vst.msk [vmem:[#allocation15] sm:$0xff] %vm788, %v3209
          %3218 = vst.msk [vmem:[#allocation15 + $0x8] sm:$0xff] %vm788, %v3210
        $region108: #{encoder_forward.1} parent=71 // pred_fallthru
          _
        // Predicated region
        $region109: #{encoder_forward.1} parent=71 // pred_check
          %p3219 = pneg %p403
        $region110: #{encoder_forward.1} parent=71 // pred_check_branch
          %3221 = sbr.rel (%p3219) target = $region112
        $region111: #{encoder_forward.1} parent=71 // pred_region
          %s3222 = smul.u32 2, %s39
          %s3224 = ssub.s32 256, 256
          %3225 = vsyncadd [#allocation5], %s3224
          %s3226 = smul.addr %s3222, 128
          %s3227 = scalar_lea.hbm %s13, %s3226
          %s3228 = sshll.u32 [#allocation15], 4
          %s3229 = int_to_ptr.vmem [resolvable:$true] %s3228
          %3234 = dma.vmem_to_hbm [thread:$0]  %s3229, 256, %s3227, [#allocation5], 128, 128, 8
        $region112: #{encoder_forward.1} parent=71 // pred_fallthru
          _
        // Predicated region
        $region113: #{encoder_forward.1} parent=71 // pred_check
          %p3235 = pneg %p403
        $region114: #{encoder_forward.1} parent=71 // pred_check_branch
          %3237 = sbr.rel (%p3235) target = $region116
        $region115: #{encoder_forward.1} parent=71 // pred_region
          %3238 = dma.done [#allocation5], 256
        $region116: #{encoder_forward.1} parent=71 // pred_fallthru
          _
      $region72: #{encoder_forward.1} parent=5 // pred_fallthru
        _
      %p3239 = scmp.le.s32.totalorder 2, %s30
      // Predicated region
      $region117: #{encoder_forward.1} parent=5 // pred_check
        %p3240 = pneg %p3239
      $region118: #{encoder_forward.1} parent=5 // pred_check_branch
        %3242 = sbr.rel (%p3240) target = $region120
      $region119: #{encoder_forward.1} parent=5 // pred_region
        %s3243 = ssub.s32 %s30, 2
      $region120: #{encoder_forward.1} parent=5 // pred_fallthru
        _
    $region6: #{encoder_forward.1} parent=1 // loop_footer
      %s34 = sadd.s32 1, %s30
    $region7: #{encoder_forward.1} parent=1 // loop_footer_branch
      %29 = sbr.rel target = $region3
    $region8: #{encoder_forward.1} parent=1 // loop_exit
      _
    %3244 = vsyncpa [#allocation4], 1
    %s3245 = scalar_lea.sflag [#allocation4], 1
    %3246 = vsyncpa %s3245, 1
    %3247 = vsyncpa [#allocation7], 1
    %s3248 = scalar_lea.sflag [#allocation7], 1
    %3249 = vsyncpa %s3248, 1
    %3250 = vsyncpa [#allocation10], 1
    %s3251 = scalar_lea.sflag [#allocation10], 1
    %3252 = vsyncpa %s3251, 1
    %3253 = vsyncpa [#allocation13], 1
    %s3254 = scalar_lea.sflag [#allocation13], 1
    %3255 = vsyncpa %s3254, 1
    %3256 = vsyncpa [#allocation5], 1
    %s3257 = scalar_lea.sflag [#allocation5], 1
    %3258 = vsyncpa %s3257, 1

</llo_original>
